<compile_context>
chip_gen: v6e
topology: v6e:2x2x1
jax: 0.10.0
libtpu: 0.0.40
codegen_flags: <defaults>
</compile_context>

<pallas_src>
import jax
import jax.numpy as jnp
from jax.experimental import pallas as pl
from jax.experimental.pallas import tpu as pltpu

_CIN_PAD = 8           # pad xyz (3) channels to 8
_GROUPS_PER_STEP = 32  # point groups per grid step (rows per matmul = TB * N)


def _encoder_kernel(x_ref, w1_ref, b1_ref, w2_ref, b2_ref,
                    w3g_ref, w3f_ref, b3_ref, w4_ref, b4_ref, o_ref):
    """One grid step = TB point groups; all 1x1 convs are single MXU matmuls."""
    TB, N, CIN = x_ref.shape
    x = x_ref[...].reshape(TB * N, CIN)                                   # (TB*N, 8)

    # first_conv: Conv1d(3,128) + BN(folded) + ReLU -> Conv1d(128,256)
    f = jnp.dot(x, w1_ref[...], preferred_element_type=jnp.float32) + b1_ref[...]
    f = jnp.maximum(f, 0.0)
    f = jnp.dot(f.astype(w2_ref.dtype), w2_ref[...],
                preferred_element_type=jnp.float32) + b2_ref[...]         # (TB*N, 256)

    # per-group global max-pool over the N points
    g = jnp.max(f.reshape(TB, N, f.shape[-1]), axis=1)                    # (TB, 256)

    # second_conv layer 1 on concat([global, feature]):
    #   cat @ W3 == global @ W3[:256] + feature @ W3[256:]
    # b3 (BN folded) is fused into the small (TB, 512) global half so the big
    # (TB*N, 512) tensor sees a single broadcast add.
    hg = jnp.dot(g.astype(w3g_ref.dtype), w3g_ref[...],
                 preferred_element_type=jnp.float32) + b3_ref[...]        # (TB, 512)
    hf = jnp.dot(f.astype(w3f_ref.dtype), w3f_ref[...],
                 preferred_element_type=jnp.float32)                      # (TB*N, 512)
    h = hf.reshape(TB, N, hf.shape[-1]) + hg[:, None, :]
    h = jnp.maximum(h, 0.0).reshape(TB * N, hf.shape[-1])

    # second_conv layer 2: Conv1d(512, encoder_channel)
    h = jnp.dot(h.astype(w4_ref.dtype), w4_ref[...],
                preferred_element_type=jnp.float32) + b4_ref[...]         # (TB*N, C)

    # final per-group max-pool -> lane-dense (TB, C) store
    o_ref[...] = jnp.max(h.reshape(TB, N, h.shape[-1]), axis=1).astype(o_ref.dtype)


def _fold_bn(conv_w, conv_b, gamma, beta, mean, var, eps=1e-5):
    """Fold eval-mode BatchNorm1d into the preceding 1x1 conv ((Cout, Cin) weight)."""
    scale = gamma / jnp.sqrt(var + eps)
    return conv_w * scale[:, None], (conv_b - mean) * scale + beta


def encoder_pallas(point_groups, params, *, encoder_channel,
                   compute_dtype=jnp.bfloat16, bn_eps=1e-5):
    B, G, N, three = point_groups.shape
    assert three == 3, "point_groups must be (B, G, N, 3)"
    C = encoder_channel
    BG = B * G

    # Groups per grid step: default 32 (keeps the MXU fed and amortizes the
    # ~0.35us/step grid overhead); shrink for tiny inputs to limit padding.
    TB = _GROUPS_PER_STEP
    while TB > 8 and BG <= TB // 2:
        TB //= 2
    BG_pad = ((BG + TB - 1) // TB) * TB

    # ---- fold BN into conv1 / conv3; lay weights out as (Cin, Cout) ----
    w1, b1 = _fold_bn(params["conv1_w"], params["conv1_b"], params["bn1_gamma"],
                      params["bn1_beta"], params["bn1_mean"], params["bn1_var"], bn_eps)
    w3, b3 = _fold_bn(params["conv3_w"], params["conv3_b"], params["bn2_gamma"],
                      params["bn2_beta"], params["bn2_mean"], params["bn2_var"], bn_eps)
    w2, b2 = params["conv2_w"], params["conv2_b"]
    w4, b4 = params["conv4_w"], params["conv4_b"]

    w1_t = jnp.zeros((_CIN_PAD, 128), jnp.float32).at[:3, :].set(w1.T).astype(compute_dtype)
    w2_t = w2.T.astype(compute_dtype)                        # (128, 256)
    w3_t = w3.T                                              # (512, 512): [global | feature] rows
    w3g = w3_t[:256, :].astype(compute_dtype)                # (256, 512)
    w3f = w3_t[256:, :].astype(compute_dtype)                # (256, 512)
    w4_t = w4.T.astype(compute_dtype)                        # (512, C)

    b1r = b1.reshape(1, 128).astype(jnp.float32)
    b2r = b2.reshape(1, 256).astype(jnp.float32)
    b3r = b3.reshape(1, 512).astype(jnp.float32)
    b4r = b4.reshape(1, C).astype(jnp.float32)

    # ---- flatten groups, pad channels 3->8 and groups BG->BG_pad ----
    x = point_groups.reshape(BG, N, 3)
    x = jnp.pad(x, ((0, BG_pad - BG), (0, 0), (0, _CIN_PAD - 3))).astype(compute_dtype)

    weights = (w1_t, b1r, w2_t, b2r, w3g, w3f, b3r, w4_t, b4r)

    flops = (2 * BG_pad * N * (_CIN_PAD * 128 + 128 * 256 + 256 * 512 + 512 * C)
             + 2 * BG_pad * 256 * 512)
    bytes_accessed = (int(x.size) * x.dtype.itemsize
                      + sum(int(a.size) * a.dtype.itemsize for a in weights)
                      + BG_pad * C * 4)

    out = pl.pallas_call(
        _encoder_kernel,
        out_shape=jax.ShapeDtypeStruct((BG_pad, C), jnp.float32),
        grid_spec=pltpu.PrefetchScalarGridSpec(
            num_scalar_prefetch=0,
            grid=(BG_pad // TB,),
            in_specs=[
                pl.BlockSpec((TB, N, _CIN_PAD), lambda i: (i, 0, 0)),   # points
                pl.BlockSpec((_CIN_PAD, 128), lambda i: (0, 0)),        # w1 (BN folded)
                pl.BlockSpec((1, 128), lambda i: (0, 0)),               # b1
                pl.BlockSpec((128, 256), lambda i: (0, 0)),             # w2
                pl.BlockSpec((1, 256), lambda i: (0, 0)),               # b2
                pl.BlockSpec((256, 512), lambda i: (0, 0)),             # w3: global half
                pl.BlockSpec((256, 512), lambda i: (0, 0)),             # w3: feature half
                pl.BlockSpec((1, 512), lambda i: (0, 0)),               # b3
                pl.BlockSpec((512, C), lambda i: (0, 0)),               # w4
                pl.BlockSpec((1, C), lambda i: (0, 0)),                 # b4
            ],
            out_specs=pl.BlockSpec((TB, C), lambda i: (i, 0)),
        ),
        compiler_params=pltpu.CompilerParams(
            dimension_semantics=("parallel",),
            # Working set: weights (~0.8 MiB bf16) + double-buffered point/out
            # tiles + f32 activations (~6 MiB at TB=32, N=32).  32 MiB is
            # comfortable on every generation incl. v7x (64 MiB physical).
            vmem_limit_bytes=32 * 1024 * 1024,
        ),
        cost_estimate=pl.CostEstimate(
            flops=flops, transcendentals=0, bytes_accessed=bytes_accessed),
    )(x, *weights)

    return out[:BG].reshape(B, G, C)


def encoder_reference(point_groups, params, *, encoder_channel, bn_eps=1e-5):
    """Plain-JAX mirror of the PyTorch Encoder.forward (eval-mode BatchNorm)."""
    B, G, N, _ = point_groups.shape
    hp = jax.lax.Precision.HIGHEST
    x = point_groups.reshape(B * G, N, 3)

    def bn(y, gamma, beta, mean, var):
        return (y - mean) / jnp.sqrt(var + bn_eps) * gamma + beta

    f = jnp.einsum("bnc,oc->bno", x, params["conv1_w"], precision=hp) + params["conv1_b"]
    f = bn(f, params["bn1_gamma"], params["bn1_beta"], params["bn1_mean"], params["bn1_var"])
    f = jnp.maximum(f, 0.0)
    f = jnp.einsum("bnc,oc->bno", f, params["conv2_w"], precision=hp) + params["conv2_b"]

    g = jnp.max(f, axis=1, keepdims=True)                                 # (BG, 1, 256)
    cat = jnp.concatenate([jnp.broadcast_to(g, f.shape), f], axis=-1)     # (BG, N, 512)

    h = jnp.einsum("bnc,oc->bno", cat, params["conv3_w"], precision=hp) + params["conv3_b"]
    h = bn(h, params["bn2_gamma"], params["bn2_beta"], params["bn2_mean"], params["bn2_var"])
    h = jnp.maximum(h, 0.0)
    h = jnp.einsum("bnc,oc->bno", h, params["conv4_w"], precision=hp) + params["conv4_b"]

    return jnp.max(h, axis=1).reshape(B, G, encoder_channel)


if __name__ == "__main__":
    B, G, N = 2, 8, 32            # 16 point groups of 32 points each
    C_ENC = 256

    key = jax.random.PRNGKey(0)
    keys = jax.random.split(key, 17)

    def nrm(k, shape, scale):
        return jax.random.normal(k, shape, jnp.float32) * scale

    params = {
        "conv1_w": nrm(keys[0], (128, 3), 0.3),
        "conv1_b": nrm(keys[1], (128,), 0.1),
        "bn1_gamma": 1.0 + nrm(keys[2], (128,), 0.1),
        "bn1_beta": nrm(keys[3], (128,), 0.1),
        "bn1_mean": nrm(keys[4], (128,), 0.1),
        "bn1_var": 0.5 + jax.random.uniform(keys[5], (128,), jnp.float32),
        "conv2_w": nrm(keys[6], (256, 128), 0.08),
        "conv2_b": nrm(keys[7], (256,), 0.1),
        "conv3_w": nrm(keys[8], (512, 512), 0.04),
        "conv3_b": nrm(keys[9], (512,), 0.1),
        "bn2_gamma": 1.0 + nrm(keys[10], (512,), 0.1),
        "bn2_beta": nrm(keys[11], (512,), 0.1),
        "bn2_mean": nrm(keys[12], (512,), 0.1),
        "bn2_var": 0.5 + jax.random.uniform(keys[13], (512,), jnp.float32),
        "conv4_w": nrm(keys[14], (C_ENC, 512), 0.04),
        "conv4_b": nrm(keys[15], (C_ENC,), 0.1),
    }
    point_groups = jax.random.normal(keys[16], (B, G, N, 3), jnp.float32)

    ref = encoder_reference(point_groups, params, encoder_channel=C_ENC)

    # Strict check: f32 compute path vs the eval-mode reference (only BN-fold /
    # accumulation-order rounding differences expected).
    out_f32 = jax.block_until_ready(
        encoder_pallas(point_groups, params, encoder_channel=C_ENC,
                       compute_dtype=jnp.float32))
    assert out_f32.shape == (B, G, C_ENC)
    assert jnp.allclose(out_f32, ref, atol=1e-3, rtol=1e-3), "f32 kernel mismatch vs reference"

    # Fast path: bf16 matmul operands with f32 accumulation (loosened tolerance).
    out_bf16 = jax.block_until_ready(
        encoder_pallas(point_groups, params, encoder_channel=C_ENC,
                       compute_dtype=jnp.bfloat16))
    assert out_bf16.shape == (B, G, C_ENC)
    assert jnp.allclose(out_bf16, ref, atol=0.1, rtol=0.1), "bf16 kernel drifted from reference"

    print("KERNEL_OK")
</pallas_src>

<mosaic_0001>
module attributes {stable_mosaic.version = 11 : i64} {
  func.func @_encoder_kernel(%arg0: i32, %arg1: memref<16x32x8xf32, #tpu.memory_space<vmem>>, %arg2: memref<8x128xf32, #tpu.memory_space<vmem>>, %arg3: memref<1x128xf32, #tpu.memory_space<vmem>>, %arg4: memref<128x256xf32, #tpu.memory_space<vmem>>, %arg5: memref<1x256xf32, #tpu.memory_space<vmem>>, %arg6: memref<256x512xf32, #tpu.memory_space<vmem>>, %arg7: memref<256x512xf32, #tpu.memory_space<vmem>>, %arg8: memref<1x512xf32, #tpu.memory_space<vmem>>, %arg9: memref<512x256xf32, #tpu.memory_space<vmem>>, %arg10: memref<1x256xf32, #tpu.memory_space<vmem>>, %arg11: memref<16x256xf32, #tpu.memory_space<vmem>>) attributes {dimension_semantics = [#tpu.dimension_semantics<parallel>], iteration_bounds = array<i64: 1>, scalar_prefetch = 0 : i64, scratch_operands = 0 : i64, tpu.core_type = #tpu.core_type<tc>, window_params = [{transform_indices = @transform_0, window_bounds = array<i64: 16, 32, 8>}, {pipeline_mode = #tpu.pipeline_mode<synchronous>, transform_indices = @transform_1, window_bounds = array<i64: 8, 128>}, {pipeline_mode = #tpu.pipeline_mode<synchronous>, transform_indices = @transform_2, window_bounds = array<i64: 1, 128>}, {pipeline_mode = #tpu.pipeline_mode<synchronous>, transform_indices = @transform_3, window_bounds = array<i64: 128, 256>}, {pipeline_mode = #tpu.pipeline_mode<synchronous>, transform_indices = @transform_4, window_bounds = array<i64: 1, 256>}, {pipeline_mode = #tpu.pipeline_mode<synchronous>, transform_indices = @transform_5, window_bounds = array<i64: 256, 512>}, {pipeline_mode = #tpu.pipeline_mode<synchronous>, transform_indices = @transform_6, window_bounds = array<i64: 256, 512>}, {pipeline_mode = #tpu.pipeline_mode<synchronous>, transform_indices = @transform_7, window_bounds = array<i64: 1, 512>}, {pipeline_mode = #tpu.pipeline_mode<synchronous>, transform_indices = @transform_8, window_bounds = array<i64: 512, 256>}, {pipeline_mode = #tpu.pipeline_mode<synchronous>, transform_indices = @transform_9, window_bounds = array<i64: 1, 256>}, {transform_indices = @transform_10, window_bounds = array<i64: 16, 256>}]} {
    %c0 = arith.constant 0 : index
    %c0_0 = arith.constant 0 : index
    %c0_1 = arith.constant 0 : index
    %0 = vector.load %arg1[%c0, %c0_0, %c0_1] : memref<16x32x8xf32, #tpu.memory_space<vmem>>, vector<16x32x8xf32>
    %1 = vector.shape_cast %0 : vector<16x32x8xf32> to vector<512x8xf32>
    %c0_2 = arith.constant 0 : index
    %c0_3 = arith.constant 0 : index
    %2 = vector.load %arg2[%c0_2, %c0_3] : memref<8x128xf32, #tpu.memory_space<vmem>>, vector<8x128xf32>
    %cst = arith.constant dense<0.000000e+00> : vector<512x128xf32>
    %3 = tpu.matmul %1, %2, %cst {dimension_numbers = #tpu.dot_dimension_numbers<[1], [0], [0], [1], [0, 0, 1, 1], [], []>} : vector<512x8xf32>, vector<8x128xf32>, vector<512x128xf32> -> vector<512x128xf32>
    %c0_4 = arith.constant 0 : index
    %c0_5 = arith.constant 0 : index
    %4 = vector.load %arg3[%c0_4, %c0_5] : memref<1x128xf32, #tpu.memory_space<vmem>>, vector<1x128xf32>
    %5 = vector.broadcast %4 : vector<1x128xf32> to vector<512x128xf32>
    %6 = arith.addf %3, %5 : vector<512x128xf32>
    %cst_6 = arith.constant 0.000000e+00 : f32
    %7 = vector.broadcast %cst_6 : f32 to vector<512x128xf32>
    %8 = arith.maximumf %6, %7 : vector<512x128xf32>
    %c0_7 = arith.constant 0 : index
    %c0_8 = arith.constant 0 : index
    %9 = vector.load %arg4[%c0_7, %c0_8] : memref<128x256xf32, #tpu.memory_space<vmem>>, vector<128x256xf32>
    %cst_9 = arith.constant dense<0.000000e+00> : vector<512x256xf32>
    %10 = tpu.matmul %8, %9, %cst_9 {dimension_numbers = #tpu.dot_dimension_numbers<[1], [0], [0], [1], [0, 0, 1, 1], [], []>} : vector<512x128xf32>, vector<128x256xf32>, vector<512x256xf32> -> vector<512x256xf32>
    %c0_10 = arith.constant 0 : index
    %c0_11 = arith.constant 0 : index
    %11 = vector.load %arg5[%c0_10, %c0_11] : memref<1x256xf32, #tpu.memory_space<vmem>>, vector<1x256xf32>
    %12 = vector.broadcast %11 : vector<1x256xf32> to vector<512x256xf32>
    %13 = arith.addf %10, %12 : vector<512x256xf32>
    %14 = vector.shape_cast %13 : vector<512x256xf32> to vector<16x32x256xf32>
    %cst_12 = arith.constant dense<0xFF800000> : vector<16x256xf32>
    %15 = vector.multi_reduction <maximumf>, %14, %cst_12 [1] : vector<16x32x256xf32> to vector<16x256xf32>
    %c0_13 = arith.constant 0 : index
    %c0_14 = arith.constant 0 : index
    %16 = vector.load %arg6[%c0_13, %c0_14] : memref<256x512xf32, #tpu.memory_space<vmem>>, vector<256x512xf32>
    %cst_15 = arith.constant dense<0.000000e+00> : vector<16x512xf32>
    %17 = tpu.matmul %15, %16, %cst_15 {dimension_numbers = #tpu.dot_dimension_numbers<[1], [0], [0], [1], [0, 0, 1, 1], [], []>} : vector<16x256xf32>, vector<256x512xf32>, vector<16x512xf32> -> vector<16x512xf32>
    %c0_16 = arith.constant 0 : index
    %c0_17 = arith.constant 0 : index
    %18 = vector.load %arg8[%c0_16, %c0_17] : memref<1x512xf32, #tpu.memory_space<vmem>>, vector<1x512xf32>
    %19 = vector.broadcast %18 : vector<1x512xf32> to vector<16x512xf32>
    %20 = arith.addf %17, %19 : vector<16x512xf32>
    %c0_18 = arith.constant 0 : index
    %c0_19 = arith.constant 0 : index
    %21 = vector.load %arg7[%c0_18, %c0_19] : memref<256x512xf32, #tpu.memory_space<vmem>>, vector<256x512xf32>
    %cst_20 = arith.constant dense<0.000000e+00> : vector<512x512xf32>
    %22 = tpu.matmul %13, %21, %cst_20 {dimension_numbers = #tpu.dot_dimension_numbers<[1], [0], [0], [1], [0, 0, 1, 1], [], []>} : vector<512x256xf32>, vector<256x512xf32>, vector<512x512xf32> -> vector<512x512xf32>
    %23 = vector.shape_cast %22 : vector<512x512xf32> to vector<16x32x512xf32>
    %24 = vector.shape_cast %20 : vector<16x512xf32> to vector<16x1x512xf32>
    %25 = vector.broadcast %24 : vector<16x1x512xf32> to vector<16x32x512xf32>
    %26 = arith.addf %23, %25 : vector<16x32x512xf32>
    %cst_21 = arith.constant 0.000000e+00 : f32
    %27 = vector.broadcast %cst_21 : f32 to vector<16x32x512xf32>
    %28 = arith.maximumf %26, %27 : vector<16x32x512xf32>
    %29 = vector.shape_cast %28 : vector<16x32x512xf32> to vector<512x512xf32>
    %c0_22 = arith.constant 0 : index
    %c0_23 = arith.constant 0 : index
    %30 = vector.load %arg9[%c0_22, %c0_23] : memref<512x256xf32, #tpu.memory_space<vmem>>, vector<512x256xf32>
    %cst_24 = arith.constant dense<0.000000e+00> : vector<512x256xf32>
    %31 = tpu.matmul %29, %30, %cst_24 {dimension_numbers = #tpu.dot_dimension_numbers<[1], [0], [0], [1], [0, 0, 1, 1], [], []>} : vector<512x512xf32>, vector<512x256xf32>, vector<512x256xf32> -> vector<512x256xf32>
    %c0_25 = arith.constant 0 : index
    %c0_26 = arith.constant 0 : index
    %32 = vector.load %arg10[%c0_25, %c0_26] : memref<1x256xf32, #tpu.memory_space<vmem>>, vector<1x256xf32>
    %33 = vector.broadcast %32 : vector<1x256xf32> to vector<512x256xf32>
    %34 = arith.addf %31, %33 : vector<512x256xf32>
    %35 = vector.shape_cast %34 : vector<512x256xf32> to vector<16x32x256xf32>
    %cst_27 = arith.constant dense<0xFF800000> : vector<16x256xf32>
    %36 = vector.multi_reduction <maximumf>, %35, %cst_27 [1] : vector<16x32x256xf32> to vector<16x256xf32>
    %c0_28 = arith.constant 0 : index
    %c0_29 = arith.constant 0 : index
    %37 = vector.load %arg11[%c0_28, %c0_29] : memref<16x256xf32, #tpu.memory_space<vmem>>, vector<16x256xf32>
    tpu.vector_store %arg11[%c0_28, %c0_29], %36 {strides = array<i32>} : memref<16x256xf32, #tpu.memory_space<vmem>>, vector<16x256xf32>,
    return
  }
  func.func @transform_0(%arg0: i32) -> (i32, i32, i32) {
    %c0_i32 = arith.constant 0 : i32
    %c0_i32_0 = arith.constant 0 : i32
    %c0_i32_1 = arith.constant 0 : i32
    return %arg0, %c0_i32, %c0_i32_0 : i32, i32, i32
  }
  func.func @transform_1(%arg0: i32) -> (i32, i32) {
    %c0_i32 = arith.constant 0 : i32
    %c0_i32_0 = arith.constant 0 : i32
    %c0_i32_1 = arith.constant 0 : i32
    return %c0_i32, %c0_i32_0 : i32, i32
  }
  func.func @transform_2(%arg0: i32) -> (i32, i32) {
    %c0_i32 = arith.constant 0 : i32
    %c0_i32_0 = arith.constant 0 : i32
    %c0_i32_1 = arith.constant 0 : i32
    return %c0_i32, %c0_i32_0 : i32, i32
  }
  func.func @transform_3(%arg0: i32) -> (i32, i32) {
    %c0_i32 = arith.constant 0 : i32
    %c0_i32_0 = arith.constant 0 : i32
    %c0_i32_1 = arith.constant 0 : i32
    return %c0_i32, %c0_i32_0 : i32, i32
  }
  func.func @transform_4(%arg0: i32) -> (i32, i32) {
    %c0_i32 = arith.constant 0 : i32
    %c0_i32_0 = arith.constant 0 : i32
    %c0_i32_1 = arith.constant 0 : i32
    return %c0_i32, %c0_i32_0 : i32, i32
  }
  func.func @transform_5(%arg0: i32) -> (i32, i32) {
    %c0_i32 = arith.constant 0 : i32
    %c0_i32_0 = arith.constant 0 : i32
    %c0_i32_1 = arith.constant 0 : i32
    return %c0_i32, %c0_i32_0 : i32, i32
  }
  func.func @transform_6(%arg0: i32) -> (i32, i32) {
    %c0_i32 = arith.constant 0 : i32
    %c0_i32_0 = arith.constant 0 : i32
    %c0_i32_1 = arith.constant 0 : i32
    return %c0_i32, %c0_i32_0 : i32, i32
  }
  func.func @transform_7(%arg0: i32) -> (i32, i32) {
    %c0_i32 = arith.constant 0 : i32
    %c0_i32_0 = arith.constant 0 : i32
    %c0_i32_1 = arith.constant 0 : i32
    return %c0_i32, %c0_i32_0 : i32, i32
  }
  func.func @transform_8(%arg0: i32) -> (i32, i32) {
    %c0_i32 = arith.constant 0 : i32
    %c0_i32_0 = arith.constant 0 : i32
    %c0_i32_1 = arith.constant 0 : i32
    return %c0_i32, %c0_i32_0 : i32, i32
  }
  func.func @transform_9(%arg0: i32) -> (i32, i32) {
    %c0_i32 = arith.constant 0 : i32
    %c0_i32_0 = arith.constant 0 : i32
    %c0_i32_1 = arith.constant 0 : i32
    return %c0_i32, %c0_i32_0 : i32, i32
  }
  func.func @transform_10(%arg0: i32) -> (i32, i32) {
    %c0_i32 = arith.constant 0 : i32
    %c0_i32_0 = arith.constant 0 : i32
    return %arg0, %c0_i32 : i32, i32
  }
}

</mosaic_0001>

<llo_original>
// kernel: tpu_custom_call.1
$region0: #{tpu_custom_call.1}
  #allocation0 [shape = 'u32[]', space=smem, size = 0x4, offset = 0x4, fixed_abs, tag = 'smem constant byte address 0x4 - core index']
  #allocation1 [shape = 'u32[144,128]{1,0:T(1,128)}', space=vmem, size = 0x12000, scoped, tag = 'internal scratch']
  %s0 = inlined_call_operand.vmem [shape: f32[16,32,8], index: 0, kind: input, shape index: {}]
  %s1 = inlined_call_operand.vmem [shape: f32[8,128], index: 1, kind: input, shape index: {}]
  %s2 = inlined_call_operand.vmem [shape: f32[1,128], index: 2, kind: input, shape index: {}]
  %s3 = inlined_call_operand.vmem [shape: f32[128,256], index: 3, kind: input, shape index: {}]
  %s4 = inlined_call_operand.vmem [shape: f32[1,256], index: 4, kind: input, shape index: {}]
  %s5 = inlined_call_operand.hbm [shape: f32[256,512], index: 5, kind: input, shape index: {}]
  %s6 = inlined_call_operand.hbm [shape: f32[256,512], index: 6, kind: input, shape index: {}]
  %s7 = inlined_call_operand.vmem [shape: f32[1,512], index: 7, kind: input, shape index: {}]
  %s8 = inlined_call_operand.hbm [shape: f32[512,256], index: 8, kind: input, shape index: {}]
  %s9 = inlined_call_operand.vmem [shape: f32[1,256], index: 9, kind: input, shape index: {}]
  %s10 = inlined_call_operand.hbm [shape: f32[16,256], index: 10, kind: output, shape index: {}]
  %s11 = sld [smem:[#allocation0]]
  $region62: #{tpu_custom_call.1} parent=0
    _
  %s13 = ssub.s32 1, %s11
  %s14 = scalar_select 0, %s13, %s11
  $region1: #{tpu_custom_call.1} parent=0
    #allocation2 [shape = 'u8[524288]{0}', space=vmem, size = 0x80000, scoped, tag = 'input window, operand 5, single buffered']
    #allocation3 [shape = 's32[1]{0}', space=sflag, size = 0x4, scoped, tag = 'scoped memory for tpu_custom_call.1']
    #allocation4 [shape = 's32[1]{0}', space=sflag, size = 0x4, scoped, tag = 'scoped memory for tpu_custom_call.1']
    #allocation5 [shape = 'u8[524288]{0}', space=vmem, size = 0x80000, scoped, tag = 'input window, operand 6, single buffered']
    #allocation6 [shape = 's32[1]{0}', space=sflag, size = 0x4, scoped, tag = 'scoped memory for tpu_custom_call.1']
    #allocation7 [shape = 'u8[524288]{0}', space=vmem, size = 0x80000, scoped, tag = 'input window, operand 8, single buffered']
    #allocation8 [shape = 'u8[16384]{0}', space=vmem, size = 0x4000, scoped, tag = 'output window, operand 0, single buffered']
    %15 = vsyncpa [#allocation3], 0
    %16 = vsyncpa [#allocation6], 0
    %17 = vsyncpa [#allocation4], 0
    // Predicated region
    $region2: #{tpu_custom_call.1} parent=1 // pred_check
      _
    $region3: #{tpu_custom_call.1} parent=1 // pred_check_branch
      %19 = sbr.rel (0) target = $region5
    $region4: #{tpu_custom_call.1} parent=1 // pred_region
      _
    $region5: #{tpu_custom_call.1} parent=1 // pred_fallthru
      _
    // Predicated region
    $region6: #{tpu_custom_call.1} parent=1 // pred_check
      _
    $region7: #{tpu_custom_call.1} parent=1 // pred_check_branch
      %21 = sbr.rel (0) target = $region9
    $region8: #{tpu_custom_call.1} parent=1 // pred_region
      _
    $region9: #{tpu_custom_call.1} parent=1 // pred_fallthru
      _
    // Predicated region
    $region10: #{tpu_custom_call.1} parent=1 // pred_check
      _
    $region11: #{tpu_custom_call.1} parent=1 // pred_check_branch
      %23 = sbr.rel (0) target = $region13
    $region12: #{tpu_custom_call.1} parent=1 // pred_region
      _
    $region13: #{tpu_custom_call.1} parent=1 // pred_fallthru
      _
    // Predicated region
    $region14: #{tpu_custom_call.1} parent=1 // pred_check
      _
    $region15: #{tpu_custom_call.1} parent=1 // pred_check_branch
      %25 = sbr.rel (0) target = $region17
    $region16: #{tpu_custom_call.1} parent=1 // pred_region
      _
    $region17: #{tpu_custom_call.1} parent=1 // pred_fallthru
      _
    // Predicated region
    $region18: #{tpu_custom_call.1} parent=1 // pred_check
      _
    $region19: #{tpu_custom_call.1} parent=1 // pred_check_branch
      %27 = sbr.rel (0) target = $region21
    $region20: #{tpu_custom_call.1} parent=1 // pred_region
      _
    $region21: #{tpu_custom_call.1} parent=1 // pred_fallthru
      _
    // Predicated region
    $region22: #{tpu_custom_call.1} parent=1 // pred_check
      _
    $region23: #{tpu_custom_call.1} parent=1 // pred_check_branch
      %29 = sbr.rel (0) target = $region25
    $region24: #{tpu_custom_call.1} parent=1 // pred_region
      %s31 = ssub.s32 16384, 16384
      %32 = vsyncadd [#allocation3], %s31
      %s33 = sshll.u32 [#allocation2], 4
      %s34 = int_to_ptr.vmem [resolvable:$true] %s33
      %39 = dma.hbm_to_vmem [thread:$0]  %s5, 16384, %s34, [#allocation3], 512, 512, 32
    $region25: #{tpu_custom_call.1} parent=1 // pred_fallthru
      _
    // Predicated region
    $region26: #{tpu_custom_call.1} parent=1 // pred_check
      _
    $region27: #{tpu_custom_call.1} parent=1 // pred_check_branch
      %41 = sbr.rel (0) target = $region29
    $region28: #{tpu_custom_call.1} parent=1 // pred_region
      %s43 = ssub.s32 16384, 16384
      %44 = vsyncadd [#allocation6], %s43
      %s45 = sshll.u32 [#allocation5], 4
      %s46 = int_to_ptr.vmem [resolvable:$true] %s45
      %51 = dma.hbm_to_vmem [thread:$0]  %s6, 16384, %s46, [#allocation6], 512, 512, 32
    $region29: #{tpu_custom_call.1} parent=1 // pred_fallthru
      _
    // Predicated region
    $region30: #{tpu_custom_call.1} parent=1 // pred_check
      _
    $region31: #{tpu_custom_call.1} parent=1 // pred_check_branch
      %53 = sbr.rel (0) target = $region33
    $region32: #{tpu_custom_call.1} parent=1 // pred_region
      _
    $region33: #{tpu_custom_call.1} parent=1 // pred_fallthru
      _
    // Predicated region
    $region34: #{tpu_custom_call.1} parent=1 // pred_check
      _
    $region35: #{tpu_custom_call.1} parent=1 // pred_check_branch
      %55 = sbr.rel (0) target = $region37
    $region36: #{tpu_custom_call.1} parent=1 // pred_region
      %s57 = ssub.s32 16384, 16384
      %58 = vsyncadd [#allocation6], %s57
      %s59 = sshll.u32 [#allocation7], 4
      %s60 = int_to_ptr.vmem [resolvable:$true] %s59
      %65 = dma.hbm_to_vmem [thread:$0]  %s8, 16384, %s60, [#allocation6], 256, 256, 16
    $region37: #{tpu_custom_call.1} parent=1 // pred_fallthru
      _
    // Predicated region
    $region38: #{tpu_custom_call.1} parent=1 // pred_check
      _
    $region39: #{tpu_custom_call.1} parent=1 // pred_check_branch
      %67 = sbr.rel (0) target = $region41
    $region40: #{tpu_custom_call.1} parent=1 // pred_region
      _
    $region41: #{tpu_custom_call.1} parent=1 // pred_fallthru
      _
    // Predicated region
    $region42: #{tpu_custom_call.1} parent=1 // pred_check
      _
    $region43: #{tpu_custom_call.1} parent=1 // pred_check_branch
      %69 = sbr.rel (0) target = $region45
    $region44: #{tpu_custom_call.1} parent=1 // pred_region
      %70 = dma.done [#allocation3], 16384
    $region45: #{tpu_custom_call.1} parent=1 // pred_fallthru
      _
    // Predicated region
    $region46: #{tpu_custom_call.1} parent=1 // pred_check
      _
    $region47: #{tpu_custom_call.1} parent=1 // pred_check_branch
      %72 = sbr.rel (0) target = $region49
    $region48: #{tpu_custom_call.1} parent=1 // pred_region
      %73 = dma.done [#allocation6], 16384
    $region49: #{tpu_custom_call.1} parent=1 // pred_fallthru
      _
    // Predicated region
    $region50: #{tpu_custom_call.1} parent=1 // pred_check
      _
    $region51: #{tpu_custom_call.1} parent=1 // pred_check_branch
      %75 = sbr.rel (0) target = $region53
    $region52: #{tpu_custom_call.1} parent=1 // pred_region
      %76 = dma.done [#allocation6], 16384
    $region53: #{tpu_custom_call.1} parent=1 // pred_fallthru
      _
    %v77 = vld [vmem:[%s0] sm:$0xff]
    %v78 = vld [vmem:[%s0 + $0x8] sm:$0xff]
    %v79 = vld [vmem:[%s0 + $0x10] sm:$0xff]
    %v80 = vld [vmem:[%s0 + $0x18] sm:$0xff]
    %v81 = vld [vmem:[%s0 + $0x20] sm:$0xff]
    %v82 = vld [vmem:[%s0 + $0x28] sm:$0xff]
    %v83 = vld [vmem:[%s0 + $0x30] sm:$0xff]
    %v84 = vld [vmem:[%s0 + $0x38] sm:$0xff]
    %v85 = vld [vmem:[%s0 + $0x40] sm:$0xff]
    %v86 = vld [vmem:[%s0 + $0x48] sm:$0xff]
    %v87 = vld [vmem:[%s0 + $0x50] sm:$0xff]
    %v88 = vld [vmem:[%s0 + $0x58] sm:$0xff]
    %v89 = vld [vmem:[%s0 + $0x60] sm:$0xff]
    %v90 = vld [vmem:[%s0 + $0x68] sm:$0xff]
    %v91 = vld [vmem:[%s0 + $0x70] sm:$0xff]
    %v92 = vld [vmem:[%s0 + $0x78] sm:$0xff]
    %v93 = vld [vmem:[%s0 + $0x80] sm:$0xff]
    %v94 = vld [vmem:[%s0 + $0x88] sm:$0xff]
    %v95 = vld [vmem:[%s0 + $0x90] sm:$0xff]
    %v96 = vld [vmem:[%s0 + $0x98] sm:$0xff]
    %v97 = vld [vmem:[%s0 + $0xa0] sm:$0xff]
    %v98 = vld [vmem:[%s0 + $0xa8] sm:$0xff]
    %v99 = vld [vmem:[%s0 + $0xb0] sm:$0xff]
    %v100 = vld [vmem:[%s0 + $0xb8] sm:$0xff]
    %v101 = vld [vmem:[%s0 + $0xc0] sm:$0xff]
    %v102 = vld [vmem:[%s0 + $0xc8] sm:$0xff]
    %v103 = vld [vmem:[%s0 + $0xd0] sm:$0xff]
    %v104 = vld [vmem:[%s0 + $0xd8] sm:$0xff]
    %v105 = vld [vmem:[%s0 + $0xe0] sm:$0xff]
    %v106 = vld [vmem:[%s0 + $0xe8] sm:$0xff]
    %v107 = vld [vmem:[%s0 + $0xf0] sm:$0xff]
    %v108 = vld [vmem:[%s0 + $0xf8] sm:$0xff]
    %v109 = vld [vmem:[%s0 + $0x100] sm:$0xff]
    %v110 = vld [vmem:[%s0 + $0x108] sm:$0xff]
    %v111 = vld [vmem:[%s0 + $0x110] sm:$0xff]
    %v112 = vld [vmem:[%s0 + $0x118] sm:$0xff]
    %v113 = vld [vmem:[%s0 + $0x120] sm:$0xff]
    %v114 = vld [vmem:[%s0 + $0x128] sm:$0xff]
    %v115 = vld [vmem:[%s0 + $0x130] sm:$0xff]
    %v116 = vld [vmem:[%s0 + $0x138] sm:$0xff]
    %v117 = vld [vmem:[%s0 + $0x140] sm:$0xff]
    %v118 = vld [vmem:[%s0 + $0x148] sm:$0xff]
    %v119 = vld [vmem:[%s0 + $0x150] sm:$0xff]
    %v120 = vld [vmem:[%s0 + $0x158] sm:$0xff]
    %v121 = vld [vmem:[%s0 + $0x160] sm:$0xff]
    %v122 = vld [vmem:[%s0 + $0x168] sm:$0xff]
    %v123 = vld [vmem:[%s0 + $0x170] sm:$0xff]
    %v124 = vld [vmem:[%s0 + $0x178] sm:$0xff]
    %v125 = vld [vmem:[%s0 + $0x180] sm:$0xff]
    %v126 = vld [vmem:[%s0 + $0x188] sm:$0xff]
    %v127 = vld [vmem:[%s0 + $0x190] sm:$0xff]
    %v128 = vld [vmem:[%s0 + $0x198] sm:$0xff]
    %v129 = vld [vmem:[%s0 + $0x1a0] sm:$0xff]
    %v130 = vld [vmem:[%s0 + $0x1a8] sm:$0xff]
    %v131 = vld [vmem:[%s0 + $0x1b0] sm:$0xff]
    %v132 = vld [vmem:[%s0 + $0x1b8] sm:$0xff]
    %v133 = vld [vmem:[%s0 + $0x1c0] sm:$0xff]
    %v134 = vld [vmem:[%s0 + $0x1c8] sm:$0xff]
    %v135 = vld [vmem:[%s0 + $0x1d0] sm:$0xff]
    %v136 = vld [vmem:[%s0 + $0x1d8] sm:$0xff]
    %v137 = vld [vmem:[%s0 + $0x1e0] sm:$0xff]
    %v138 = vld [vmem:[%s0 + $0x1e8] sm:$0xff]
    %v139 = vld [vmem:[%s0 + $0x1f0] sm:$0xff]
    %v140 = vld [vmem:[%s0 + $0x1f8] sm:$0xff]
    %v141 = vld [vmem:[%s1] sm:$0xff]
    %v142 = vld [vmem:[%s2] sm:$0x1]
    %v144 = vlaneseq
    %v145 = vshrl.u32 %v144, 7
    %v146 = vsub.s32 0, %v145
    %v147 = vrot.slane %v142, %v146
    %vm149 = vcmask 64512
    %v151 = vsel %vm149, %v77, 0
    %v154 = vsel %vm149, %v78, 0
    %v157 = vsel %vm149, %v79, 0
    %v160 = vsel %vm149, %v80, 0
    %v163 = vsel %vm149, %v81, 0
    %v166 = vsel %vm149, %v82, 0
    %v169 = vsel %vm149, %v83, 0
    %v172 = vsel %vm149, %v84, 0
    %v175 = vsel %vm149, %v85, 0
    %v178 = vsel %vm149, %v86, 0
    %v181 = vsel %vm149, %v87, 0
    %v184 = vsel %vm149, %v88, 0
    %v187 = vsel %vm149, %v89, 0
    %v190 = vsel %vm149, %v90, 0
    %v193 = vsel %vm149, %v91, 0
    %v196 = vsel %vm149, %v92, 0
    %v199 = vsel %vm149, %v93, 0
    %v202 = vsel %vm149, %v94, 0
    %v205 = vsel %vm149, %v95, 0
    %v208 = vsel %vm149, %v96, 0
    %v211 = vsel %vm149, %v97, 0
    %v214 = vsel %vm149, %v98, 0
    %v217 = vsel %vm149, %v99, 0
    %v220 = vsel %vm149, %v100, 0
    %v223 = vsel %vm149, %v101, 0
    %v226 = vsel %vm149, %v102, 0
    %v229 = vsel %vm149, %v103, 0
    %v232 = vsel %vm149, %v104, 0
    %v235 = vsel %vm149, %v105, 0
    %v238 = vsel %vm149, %v106, 0
    %v241 = vsel %vm149, %v107, 0
    %v244 = vsel %vm149, %v108, 0
    %v247 = vsel %vm149, %v109, 0
    %v250 = vsel %vm149, %v110, 0
    %v253 = vsel %vm149, %v111, 0
    %v256 = vsel %vm149, %v112, 0
    %v259 = vsel %vm149, %v113, 0
    %v262 = vsel %vm149, %v114, 0
    %v265 = vsel %vm149, %v115, 0
    %v268 = vsel %vm149, %v116, 0
    %v271 = vsel %vm149, %v117, 0
    %v274 = vsel %vm149, %v118, 0
    %v277 = vsel %vm149, %v119, 0
    %v280 = vsel %vm149, %v120, 0
    %v283 = vsel %vm149, %v121, 0
    %v286 = vsel %vm149, %v122, 0
    %v289 = vsel %vm149, %v123, 0
    %v292 = vsel %vm149, %v124, 0
    %v295 = vsel %vm149, %v125, 0
    %v298 = vsel %vm149, %v126, 0
    %v301 = vsel %vm149, %v127, 0
    %v304 = vsel %vm149, %v128, 0
    %v307 = vsel %vm149, %v129, 0
    %v310 = vsel %vm149, %v130, 0
    %v313 = vsel %vm149, %v131, 0
    %v316 = vsel %vm149, %v132, 0
    %v319 = vsel %vm149, %v133, 0
    %v322 = vsel %vm149, %v134, 0
    %v325 = vsel %vm149, %v135, 0
    %v328 = vsel %vm149, %v136, 0
    %v331 = vsel %vm149, %v137, 0
    %v334 = vsel %vm149, %v138, 0
    %v337 = vsel %vm149, %v139, 0
    %v340 = vsel %vm149, %v140, 0
    %342 = vmatprep.subr.mxu0 0.0
    %343 = vmatpush1.msra.mxu0 0.0
    %344 = vmatprep.subr.mxu0 0.0
    %345 = vmatpush1.msra.mxu0 0.0
    %346 = vmatprep.subr.mxu0 0.0
    %347 = vmatpush1.msra.mxu0 0.0
    %348 = vmatprep.subr.mxu0 0.0
    %349 = vmatpush1.msra.mxu0 0.0
    %350 = vmatprep.subr.mxu0 0.0
    %351 = vmatpush1.msra.mxu0 0.0
    %352 = vmatprep.subr.mxu0 0.0
    %353 = vmatpush1.msra.mxu0 0.0
    %354 = vmatprep.subr.mxu0 0.0
    %355 = vmatpush1.msra.mxu0 0.0
    %356 = vmatprep.subr.mxu0 0.0
    %357 = vmatpush1.msra.mxu0 0.0
    %358 = vmatprep.subr.mxu0 0.0
    %359 = vmatpush1.msra.mxu0 0.0
    %360 = vmatprep.subr.mxu0 0.0
    %361 = vmatpush1.msra.mxu0 0.0
    %362 = vmatprep.subr.mxu0 0.0
    %363 = vmatpush1.msra.mxu0 0.0
    %364 = vmatprep.subr.mxu0 0.0
    %365 = vmatpush1.msra.mxu0 0.0
    %366 = vmatprep.subr.mxu0 0.0
    %367 = vmatpush1.msra.mxu0 0.0
    %368 = vmatprep.subr.mxu0 0.0
    %369 = vmatpush1.msra.mxu0 0.0
    %370 = vmatprep.subr.mxu0 0.0
    %371 = vmatpush1.msra.mxu0 0.0
    %372 = vmatprep.subr.mxu0 0.0
    %373 = vmatpush1.msra.mxu0 %v141
    %374 = vmatprep.subr.mxu0 0.0
    %375 = vmatpush2.msra.mxu0 0.0
    %376 = vmatprep.subr.mxu0 0.0
    %377 = vmatpush2.msra.mxu0 0.0
    %378 = vmatprep.subr.mxu0 0.0
    %379 = vmatpush2.msra.mxu0 0.0
    %380 = vmatprep.subr.mxu0 0.0
    %381 = vmatpush2.msra.mxu0 0.0
    %382 = vmatprep.subr.mxu0 0.0
    %383 = vmatpush2.msra.mxu0 0.0
    %384 = vmatprep.subr.mxu0 0.0
    %385 = vmatpush2.msra.mxu0 0.0
    %386 = vmatprep.subr.mxu0 0.0
    %387 = vmatpush2.msra.mxu0 0.0
    %388 = vmatprep.subr.mxu0 0.0
    %389 = vmatpush2.msra.mxu0 0.0
    %390 = vmatprep.subr.mxu0 0.0
    %391 = vmatpush2.msra.mxu0 0.0
    %392 = vmatprep.subr.mxu0 0.0
    %393 = vmatpush2.msra.mxu0 0.0
    %394 = vmatprep.subr.mxu0 0.0
    %395 = vmatpush2.msra.mxu0 0.0
    %396 = vmatprep.subr.mxu0 0.0
    %397 = vmatpush2.msra.mxu0 0.0
    %398 = vmatprep.subr.mxu0 0.0
    %399 = vmatpush2.msra.mxu0 0.0
    %400 = vmatprep.subr.mxu0 0.0
    %401 = vmatpush2.msra.mxu0 0.0
    %402 = vmatprep.subr.mxu0 0.0
    %403 = vmatpush2.msra.mxu0 0.0
    %404 = vmatprep.subr.mxu0 0.0
    %405 = vmatpush2.msra.mxu0 0.0
    %406 = vmatprep.mubr.f32.mxu0 0.0
    %407 = vmatmul.mubr.f32.gmra.mxu0 %v151
    %v408 = vpop.f32.mrf.mxu0
    %v409 = vadd.f32 %v147, %v408
    %v410 = vpop.f32.mrf.mxu0
    %411 = vmatprep.mubr.f32.mxu0 0.0
    %412 = vmatmul.mubr.f32.gmra.mxu0 %v154
    %v413 = vpop.f32.mrf.mxu0
    %v414 = vadd.f32 %v147, %v413
    %v415 = vpop.f32.mrf.mxu0
    %416 = vmatprep.mubr.f32.mxu0 0.0
    %417 = vmatmul.mubr.f32.gmra.mxu0 %v157
    %v418 = vpop.f32.mrf.mxu0
    %v419 = vadd.f32 %v147, %v418
    %v420 = vpop.f32.mrf.mxu0
    %421 = vmatprep.mubr.f32.mxu0 0.0
    %422 = vmatmul.mubr.f32.gmra.mxu0 %v160
    %v423 = vpop.f32.mrf.mxu0
    %v424 = vadd.f32 %v147, %v423
    %v425 = vpop.f32.mrf.mxu0
    %426 = vmatprep.mubr.f32.mxu0 0.0
    %427 = vmatmul.mubr.f32.gmra.mxu0 %v163
    %v428 = vpop.f32.mrf.mxu0
    %v429 = vadd.f32 %v147, %v428
    %v430 = vpop.f32.mrf.mxu0
    %431 = vmatprep.mubr.f32.mxu0 0.0
    %432 = vmatmul.mubr.f32.gmra.mxu0 %v166
    %v433 = vpop.f32.mrf.mxu0
    %v434 = vadd.f32 %v147, %v433
    %v435 = vpop.f32.mrf.mxu0
    %436 = vmatprep.mubr.f32.mxu0 0.0
    %437 = vmatmul.mubr.f32.gmra.mxu0 %v169
    %v438 = vpop.f32.mrf.mxu0
    %v439 = vadd.f32 %v147, %v438
    %v440 = vpop.f32.mrf.mxu0
    %441 = vmatprep.mubr.f32.mxu0 0.0
    %442 = vmatmul.mubr.f32.gmra.mxu0 %v172
    %v443 = vpop.f32.mrf.mxu0
    %v444 = vadd.f32 %v147, %v443
    %v445 = vpop.f32.mrf.mxu0
    %446 = vmatprep.mubr.f32.mxu0 0.0
    %447 = vmatmul.mubr.f32.gmra.mxu0 %v175
    %v448 = vpop.f32.mrf.mxu0
    %v449 = vadd.f32 %v147, %v448
    %v450 = vpop.f32.mrf.mxu0
    %451 = vmatprep.mubr.f32.mxu0 0.0
    %452 = vmatmul.mubr.f32.gmra.mxu0 %v178
    %v453 = vpop.f32.mrf.mxu0
    %v454 = vadd.f32 %v147, %v453
    %v455 = vpop.f32.mrf.mxu0
    %456 = vmatprep.mubr.f32.mxu0 0.0
    %457 = vmatmul.mubr.f32.gmra.mxu0 %v181
    %v458 = vpop.f32.mrf.mxu0
    %v459 = vadd.f32 %v147, %v458
    %v460 = vpop.f32.mrf.mxu0
    %461 = vmatprep.mubr.f32.mxu0 0.0
    %462 = vmatmul.mubr.f32.gmra.mxu0 %v184
    %v463 = vpop.f32.mrf.mxu0
    %v464 = vadd.f32 %v147, %v463
    %v465 = vpop.f32.mrf.mxu0
    %466 = vmatprep.mubr.f32.mxu0 0.0
    %467 = vmatmul.mubr.f32.gmra.mxu0 %v187
    %v468 = vpop.f32.mrf.mxu0
    %v469 = vadd.f32 %v147, %v468
    %v470 = vpop.f32.mrf.mxu0
    %471 = vmatprep.mubr.f32.mxu0 0.0
    %472 = vmatmul.mubr.f32.gmra.mxu0 %v190
    %v473 = vpop.f32.mrf.mxu0
    %v474 = vadd.f32 %v147, %v473
    %v475 = vpop.f32.mrf.mxu0
    %476 = vmatprep.mubr.f32.mxu0 0.0
    %477 = vmatmul.mubr.f32.gmra.mxu0 %v193
    %v478 = vpop.f32.mrf.mxu0
    %v479 = vadd.f32 %v147, %v478
    %v480 = vpop.f32.mrf.mxu0
    %481 = vmatprep.mubr.f32.mxu0 0.0
    %482 = vmatmul.mubr.f32.gmra.mxu0 %v196
    %v483 = vpop.f32.mrf.mxu0
    %v484 = vadd.f32 %v147, %v483
    %v485 = vpop.f32.mrf.mxu0
    %486 = vmatprep.mubr.f32.mxu0 0.0
    %487 = vmatmul.mubr.f32.gmra.mxu0 %v199
    %v488 = vpop.f32.mrf.mxu0
    %v489 = vadd.f32 %v147, %v488
    %v490 = vpop.f32.mrf.mxu0
    %491 = vmatprep.mubr.f32.mxu0 0.0
    %492 = vmatmul.mubr.f32.gmra.mxu0 %v202
    %v493 = vpop.f32.mrf.mxu0
    %v494 = vadd.f32 %v147, %v493
    %v495 = vpop.f32.mrf.mxu0
    %496 = vmatprep.mubr.f32.mxu0 0.0
    %497 = vmatmul.mubr.f32.gmra.mxu0 %v205
    %v498 = vpop.f32.mrf.mxu0
    %v499 = vadd.f32 %v147, %v498
    %v500 = vpop.f32.mrf.mxu0
    %501 = vmatprep.mubr.f32.mxu0 0.0
    %502 = vmatmul.mubr.f32.gmra.mxu0 %v208
    %v503 = vpop.f32.mrf.mxu0
    %v504 = vadd.f32 %v147, %v503
    %v505 = vpop.f32.mrf.mxu0
    %506 = vmatprep.mubr.f32.mxu0 0.0
    %507 = vmatmul.mubr.f32.gmra.mxu0 %v211
    %v508 = vpop.f32.mrf.mxu0
    %v509 = vadd.f32 %v147, %v508
    %v510 = vpop.f32.mrf.mxu0
    %511 = vmatprep.mubr.f32.mxu0 0.0
    %512 = vmatmul.mubr.f32.gmra.mxu0 %v214
    %v513 = vpop.f32.mrf.mxu0
    %v514 = vadd.f32 %v147, %v513
    %v515 = vpop.f32.mrf.mxu0
    %516 = vmatprep.mubr.f32.mxu0 0.0
    %517 = vmatmul.mubr.f32.gmra.mxu0 %v217
    %v518 = vpop.f32.mrf.mxu0
    %v519 = vadd.f32 %v147, %v518
    %v520 = vpop.f32.mrf.mxu0
    %521 = vmatprep.mubr.f32.mxu0 0.0
    %522 = vmatmul.mubr.f32.gmra.mxu0 %v220
    %v523 = vpop.f32.mrf.mxu0
    %v524 = vadd.f32 %v147, %v523
    %v525 = vpop.f32.mrf.mxu0
    %526 = vmatprep.mubr.f32.mxu0 0.0
    %527 = vmatmul.mubr.f32.gmra.mxu0 %v223
    %v528 = vpop.f32.mrf.mxu0
    %v529 = vadd.f32 %v147, %v528
    %v530 = vpop.f32.mrf.mxu0
    %531 = vmatprep.mubr.f32.mxu0 0.0
    %532 = vmatmul.mubr.f32.gmra.mxu0 %v226
    %v533 = vpop.f32.mrf.mxu0
    %v534 = vadd.f32 %v147, %v533
    %v535 = vpop.f32.mrf.mxu0
    %536 = vmatprep.mubr.f32.mxu0 0.0
    %537 = vmatmul.mubr.f32.gmra.mxu0 %v229
    %v538 = vpop.f32.mrf.mxu0
    %v539 = vadd.f32 %v147, %v538
    %v540 = vpop.f32.mrf.mxu0
    %541 = vmatprep.mubr.f32.mxu0 0.0
    %542 = vmatmul.mubr.f32.gmra.mxu0 %v232
    %v543 = vpop.f32.mrf.mxu0
    %v544 = vadd.f32 %v147, %v543
    %v545 = vpop.f32.mrf.mxu0
    %546 = vmatprep.mubr.f32.mxu0 0.0
    %547 = vmatmul.mubr.f32.gmra.mxu0 %v235
    %v548 = vpop.f32.mrf.mxu0
    %v549 = vadd.f32 %v147, %v548
    %v550 = vpop.f32.mrf.mxu0
    %551 = vmatprep.mubr.f32.mxu0 0.0
    %552 = vmatmul.mubr.f32.gmra.mxu0 %v238
    %v553 = vpop.f32.mrf.mxu0
    %v554 = vadd.f32 %v147, %v553
    %v555 = vpop.f32.mrf.mxu0
    %556 = vmatprep.mubr.f32.mxu0 0.0
    %557 = vmatmul.mubr.f32.gmra.mxu0 %v241
    %v558 = vpop.f32.mrf.mxu0
    %v559 = vadd.f32 %v147, %v558
    %v560 = vpop.f32.mrf.mxu0
    %561 = vmatprep.mubr.f32.mxu0 0.0
    %562 = vmatmul.mubr.f32.gmra.mxu0 %v244
    %v563 = vpop.f32.mrf.mxu0
    %v564 = vadd.f32 %v147, %v563
    %v565 = vpop.f32.mrf.mxu0
    %566 = vmatprep.mubr.f32.mxu0 0.0
    %567 = vmatmul.mubr.f32.gmra.mxu0 %v247
    %v568 = vpop.f32.mrf.mxu0
    %v569 = vadd.f32 %v147, %v568
    %v570 = vpop.f32.mrf.mxu0
    %571 = vmatprep.mubr.f32.mxu0 0.0
    %572 = vmatmul.mubr.f32.gmra.mxu0 %v250
    %v573 = vpop.f32.mrf.mxu0
    %v574 = vadd.f32 %v147, %v573
    %v575 = vpop.f32.mrf.mxu0
    %576 = vmatprep.mubr.f32.mxu0 0.0
    %577 = vmatmul.mubr.f32.gmra.mxu0 %v253
    %v578 = vpop.f32.mrf.mxu0
    %v579 = vadd.f32 %v147, %v578
    %v580 = vpop.f32.mrf.mxu0
    %581 = vmatprep.mubr.f32.mxu0 0.0
    %582 = vmatmul.mubr.f32.gmra.mxu0 %v256
    %v583 = vpop.f32.mrf.mxu0
    %v584 = vadd.f32 %v147, %v583
    %v585 = vpop.f32.mrf.mxu0
    %586 = vmatprep.mubr.f32.mxu0 0.0
    %587 = vmatmul.mubr.f32.gmra.mxu0 %v259
    %v588 = vpop.f32.mrf.mxu0
    %v589 = vadd.f32 %v147, %v588
    %v590 = vpop.f32.mrf.mxu0
    %591 = vmatprep.mubr.f32.mxu0 0.0
    %592 = vmatmul.mubr.f32.gmra.mxu0 %v262
    %v593 = vpop.f32.mrf.mxu0
    %v594 = vadd.f32 %v147, %v593
    %v595 = vpop.f32.mrf.mxu0
    %596 = vmatprep.mubr.f32.mxu0 0.0
    %597 = vmatmul.mubr.f32.gmra.mxu0 %v265
    %v598 = vpop.f32.mrf.mxu0
    %v599 = vadd.f32 %v147, %v598
    %v600 = vpop.f32.mrf.mxu0
    %601 = vmatprep.mubr.f32.mxu0 0.0
    %602 = vmatmul.mubr.f32.gmra.mxu0 %v268
    %v603 = vpop.f32.mrf.mxu0
    %v604 = vadd.f32 %v147, %v603
    %v605 = vpop.f32.mrf.mxu0
    %606 = vmatprep.mubr.f32.mxu0 0.0
    %607 = vmatmul.mubr.f32.gmra.mxu0 %v271
    %v608 = vpop.f32.mrf.mxu0
    %v609 = vadd.f32 %v147, %v608
    %v610 = vpop.f32.mrf.mxu0
    %611 = vmatprep.mubr.f32.mxu0 0.0
    %612 = vmatmul.mubr.f32.gmra.mxu0 %v274
    %v613 = vpop.f32.mrf.mxu0
    %v614 = vadd.f32 %v147, %v613
    %v615 = vpop.f32.mrf.mxu0
    %616 = vmatprep.mubr.f32.mxu0 0.0
    %617 = vmatmul.mubr.f32.gmra.mxu0 %v277
    %v618 = vpop.f32.mrf.mxu0
    %v619 = vadd.f32 %v147, %v618
    %v620 = vpop.f32.mrf.mxu0
    %621 = vmatprep.mubr.f32.mxu0 0.0
    %622 = vmatmul.mubr.f32.gmra.mxu0 %v280
    %v623 = vpop.f32.mrf.mxu0
    %v624 = vadd.f32 %v147, %v623
    %v625 = vpop.f32.mrf.mxu0
    %626 = vmatprep.mubr.f32.mxu0 0.0
    %627 = vmatmul.mubr.f32.gmra.mxu0 %v283
    %v628 = vpop.f32.mrf.mxu0
    %v629 = vadd.f32 %v147, %v628
    %v630 = vpop.f32.mrf.mxu0
    %631 = vmatprep.mubr.f32.mxu0 0.0
    %632 = vmatmul.mubr.f32.gmra.mxu0 %v286
    %v633 = vpop.f32.mrf.mxu0
    %v634 = vadd.f32 %v147, %v633
    %v635 = vpop.f32.mrf.mxu0
    %636 = vmatprep.mubr.f32.mxu0 0.0
    %637 = vmatmul.mubr.f32.gmra.mxu0 %v289
    %v638 = vpop.f32.mrf.mxu0
    %v639 = vadd.f32 %v147, %v638
    %v640 = vpop.f32.mrf.mxu0
    %641 = vmatprep.mubr.f32.mxu0 0.0
    %642 = vmatmul.mubr.f32.gmra.mxu0 %v292
    %v643 = vpop.f32.mrf.mxu0
    %v644 = vadd.f32 %v147, %v643
    %v645 = vpop.f32.mrf.mxu0
    %646 = vmatprep.mubr.f32.mxu0 0.0
    %647 = vmatmul.mubr.f32.gmra.mxu0 %v295
    %v648 = vpop.f32.mrf.mxu0
    %v649 = vadd.f32 %v147, %v648
    %v650 = vpop.f32.mrf.mxu0
    %651 = vmatprep.mubr.f32.mxu0 0.0
    %652 = vmatmul.mubr.f32.gmra.mxu0 %v298
    %v653 = vpop.f32.mrf.mxu0
    %v654 = vadd.f32 %v147, %v653
    %v655 = vpop.f32.mrf.mxu0
    %656 = vmatprep.mubr.f32.mxu0 0.0
    %657 = vmatmul.mubr.f32.gmra.mxu0 %v301
    %v658 = vpop.f32.mrf.mxu0
    %v659 = vadd.f32 %v147, %v658
    %v660 = vpop.f32.mrf.mxu0
    %661 = vmatprep.mubr.f32.mxu0 0.0
    %662 = vmatmul.mubr.f32.gmra.mxu0 %v304
    %v663 = vpop.f32.mrf.mxu0
    %v664 = vadd.f32 %v147, %v663
    %v665 = vpop.f32.mrf.mxu0
    %666 = vmatprep.mubr.f32.mxu0 0.0
    %667 = vmatmul.mubr.f32.gmra.mxu0 %v307
    %v668 = vpop.f32.mrf.mxu0
    %v669 = vadd.f32 %v147, %v668
    %v670 = vpop.f32.mrf.mxu0
    %671 = vmatprep.mubr.f32.mxu0 0.0
    %672 = vmatmul.mubr.f32.gmra.mxu0 %v310
    %v673 = vpop.f32.mrf.mxu0
    %v674 = vadd.f32 %v147, %v673
    %v675 = vpop.f32.mrf.mxu0
    %676 = vmatprep.mubr.f32.mxu0 0.0
    %677 = vmatmul.mubr.f32.gmra.mxu0 %v313
    %v678 = vpop.f32.mrf.mxu0
    %v679 = vadd.f32 %v147, %v678
    %v680 = vpop.f32.mrf.mxu0
    %681 = vmatprep.mubr.f32.mxu0 0.0
    %682 = vmatmul.mubr.f32.gmra.mxu0 %v316
    %v683 = vpop.f32.mrf.mxu0
    %v684 = vadd.f32 %v147, %v683
    %v685 = vpop.f32.mrf.mxu0
    %686 = vmatprep.mubr.f32.mxu0 0.0
    %687 = vmatmul.mubr.f32.gmra.mxu0 %v319
    %v688 = vpop.f32.mrf.mxu0
    %v689 = vadd.f32 %v147, %v688
    %v690 = vpop.f32.mrf.mxu0
    %691 = vmatprep.mubr.f32.mxu0 0.0
    %692 = vmatmul.mubr.f32.gmra.mxu0 %v322
    %v693 = vpop.f32.mrf.mxu0
    %v694 = vadd.f32 %v147, %v693
    %v695 = vpop.f32.mrf.mxu0
    %696 = vmatprep.mubr.f32.mxu0 0.0
    %697 = vmatmul.mubr.f32.gmra.mxu0 %v325
    %v698 = vpop.f32.mrf.mxu0
    %v699 = vadd.f32 %v147, %v698
    %v700 = vpop.f32.mrf.mxu0
    %701 = vmatprep.mubr.f32.mxu0 0.0
    %702 = vmatmul.mubr.f32.gmra.mxu0 %v328
    %v703 = vpop.f32.mrf.mxu0
    %v704 = vadd.f32 %v147, %v703
    %v705 = vpop.f32.mrf.mxu0
    %706 = vmatprep.mubr.f32.mxu0 0.0
    %707 = vmatmul.mubr.f32.gmra.mxu0 %v331
    %v708 = vpop.f32.mrf.mxu0
    %v709 = vadd.f32 %v147, %v708
    %v710 = vpop.f32.mrf.mxu0
    %711 = vmatprep.mubr.f32.mxu0 0.0
    %712 = vmatmul.mubr.f32.gmra.mxu0 %v334
    %v713 = vpop.f32.mrf.mxu0
    %v714 = vadd.f32 %v147, %v713
    %v715 = vpop.f32.mrf.mxu0
    %716 = vmatprep.mubr.f32.mxu0 0.0
    %717 = vmatmul.mubr.f32.gmra.mxu0 %v337
    %v718 = vpop.f32.mrf.mxu0
    %v719 = vadd.f32 %v147, %v718
    %v720 = vpop.f32.mrf.mxu0
    %721 = vmatprep.mubr.f32.mxu0 0.0
    %722 = vmatmul.mubr.f32.gmra.mxu0 %v340
    %v723 = vpop.f32.mrf.mxu0
    %v724 = vadd.f32 %v147, %v723
    %v725 = vpop.f32.mrf.mxu0
    %726 = vdwg.mxu0
    %v727 = vmax.f32 %v409, 0.0
    %v728 = vmax.f32 %v414, 0.0
    %v729 = vmax.f32 %v419, 0.0
    %v730 = vmax.f32 %v424, 0.0
    %v731 = vmax.f32 %v429, 0.0
    %v732 = vmax.f32 %v434, 0.0
    %v733 = vmax.f32 %v439, 0.0
    %v734 = vmax.f32 %v444, 0.0
    %v735 = vmax.f32 %v449, 0.0
    %v736 = vmax.f32 %v454, 0.0
    %v737 = vmax.f32 %v459, 0.0
    %v738 = vmax.f32 %v464, 0.0
    %v739 = vmax.f32 %v469, 0.0
    %v740 = vmax.f32 %v474, 0.0
    %v741 = vmax.f32 %v479, 0.0
    %v742 = vmax.f32 %v484, 0.0
    %v743 = vmax.f32 %v489, 0.0
    %v744 = vmax.f32 %v494, 0.0
    %v745 = vmax.f32 %v499, 0.0
    %v746 = vmax.f32 %v504, 0.0
    %v747 = vmax.f32 %v509, 0.0
    %v748 = vmax.f32 %v514, 0.0
    %v749 = vmax.f32 %v519, 0.0
    %v750 = vmax.f32 %v524, 0.0
    %v751 = vmax.f32 %v529, 0.0
    %v752 = vmax.f32 %v534, 0.0
    %v753 = vmax.f32 %v539, 0.0
    %v754 = vmax.f32 %v544, 0.0
    %v755 = vmax.f32 %v549, 0.0
    %v756 = vmax.f32 %v554, 0.0
    %v757 = vmax.f32 %v559, 0.0
    %v758 = vmax.f32 %v564, 0.0
    %v759 = vmax.f32 %v569, 0.0
    %v760 = vmax.f32 %v574, 0.0
    %v761 = vmax.f32 %v579, 0.0
    %v762 = vmax.f32 %v584, 0.0
    %v763 = vmax.f32 %v589, 0.0
    %v764 = vmax.f32 %v594, 0.0
    %v765 = vmax.f32 %v599, 0.0
    %v766 = vmax.f32 %v604, 0.0
    %v767 = vmax.f32 %v609, 0.0
    %v768 = vmax.f32 %v614, 0.0
    %v769 = vmax.f32 %v619, 0.0
    %v770 = vmax.f32 %v624, 0.0
    %v771 = vmax.f32 %v629, 0.0
    %v772 = vmax.f32 %v634, 0.0
    %v773 = vmax.f32 %v639, 0.0
    %v774 = vmax.f32 %v644, 0.0
    %v775 = vmax.f32 %v649, 0.0
    %v776 = vmax.f32 %v654, 0.0
    %v777 = vmax.f32 %v659, 0.0
    %v778 = vmax.f32 %v664, 0.0
    %v779 = vmax.f32 %v669, 0.0
    %v780 = vmax.f32 %v674, 0.0
    %v781 = vmax.f32 %v679, 0.0
    %v782 = vmax.f32 %v684, 0.0
    %v783 = vmax.f32 %v689, 0.0
    %v784 = vmax.f32 %v694, 0.0
    %v785 = vmax.f32 %v699, 0.0
    %v786 = vmax.f32 %v704, 0.0
    %v787 = vmax.f32 %v709, 0.0
    %v788 = vmax.f32 %v714, 0.0
    %v789 = vmax.f32 %v719, 0.0
    %v790 = vmax.f32 %v724, 0.0
    %v791 = vld [vmem:[%s3] sm:$0xff]
    %v792 = vld [vmem:[%s3 + $0x8] sm:$0xff]
    %v793 = vld [vmem:[%s3 + $0x10] sm:$0xff]
    %v794 = vld [vmem:[%s3 + $0x18] sm:$0xff]
    %v795 = vld [vmem:[%s3 + $0x20] sm:$0xff]
    %v796 = vld [vmem:[%s3 + $0x28] sm:$0xff]
    %v797 = vld [vmem:[%s3 + $0x30] sm:$0xff]
    %v798 = vld [vmem:[%s3 + $0x38] sm:$0xff]
    %v799 = vld [vmem:[%s3 + $0x40] sm:$0xff]
    %v800 = vld [vmem:[%s3 + $0x48] sm:$0xff]
    %v801 = vld [vmem:[%s3 + $0x50] sm:$0xff]
    %v802 = vld [vmem:[%s3 + $0x58] sm:$0xff]
    %v803 = vld [vmem:[%s3 + $0x60] sm:$0xff]
    %v804 = vld [vmem:[%s3 + $0x68] sm:$0xff]
    %v805 = vld [vmem:[%s3 + $0x70] sm:$0xff]
    %v806 = vld [vmem:[%s3 + $0x78] sm:$0xff]
    %v807 = vld [vmem:[%s3 + $0x80] sm:$0xff]
    %v808 = vld [vmem:[%s3 + $0x88] sm:$0xff]
    %v809 = vld [vmem:[%s3 + $0x90] sm:$0xff]
    %v810 = vld [vmem:[%s3 + $0x98] sm:$0xff]
    %v811 = vld [vmem:[%s3 + $0xa0] sm:$0xff]
    %v812 = vld [vmem:[%s3 + $0xa8] sm:$0xff]
    %v813 = vld [vmem:[%s3 + $0xb0] sm:$0xff]
    %v814 = vld [vmem:[%s3 + $0xb8] sm:$0xff]
    %v815 = vld [vmem:[%s3 + $0xc0] sm:$0xff]
    %v816 = vld [vmem:[%s3 + $0xc8] sm:$0xff]
    %v817 = vld [vmem:[%s3 + $0xd0] sm:$0xff]
    %v818 = vld [vmem:[%s3 + $0xd8] sm:$0xff]
    %v819 = vld [vmem:[%s3 + $0xe0] sm:$0xff]
    %v820 = vld [vmem:[%s3 + $0xe8] sm:$0xff]
    %v821 = vld [vmem:[%s3 + $0xf0] sm:$0xff]
    %v822 = vld [vmem:[%s3 + $0xf8] sm:$0xff]
    %v823 = vld [vmem:[%s4] sm:$0x3]
    %v825 = vlaneseq
    %v826 = vshrl.u32 %v825, 7
    %v827 = vsub.s32 0, %v826
    %v828 = vrot.slane %v823, %v827
    %v829 = vlaneseq
    %v830 = vshrl.u32 %v829, 7
    %v831 = vsub.s32 1, %v830
    %v832 = vrot.slane %v823, %v831
    %835 = vmatprep.subr.mxu0 %v822
    %836 = vmatpush1.msra.mxu0 %v821
    %837 = vmatprep.subr.mxu0 %v820
    %838 = vmatpush1.msra.mxu0 %v819
    %839 = vmatprep.subr.mxu0 %v818
    %840 = vmatpush1.msra.mxu0 %v817
    %841 = vmatprep.subr.mxu0 %v816
    %842 = vmatpush1.msra.mxu0 %v815
    %843 = vmatprep.subr.mxu0 %v814
    %844 = vmatpush1.msra.mxu0 %v813
    %845 = vmatprep.subr.mxu0 %v812
    %846 = vmatpush1.msra.mxu0 %v811
    %847 = vmatprep.subr.mxu0 %v810
    %848 = vmatpush1.msra.mxu0 %v809
    %849 = vmatprep.subr.mxu0 %v808
    %850 = vmatpush1.msra.mxu0 %v807
    %851 = vmatprep.subr.mxu0 %v806
    %852 = vmatpush1.msra.mxu0 %v805
    %853 = vmatprep.subr.mxu0 %v804
    %854 = vmatpush1.msra.mxu0 %v803
    %855 = vmatprep.subr.mxu0 %v802
    %856 = vmatpush1.msra.mxu0 %v801
    %857 = vmatprep.subr.mxu0 %v800
    %858 = vmatpush1.msra.mxu0 %v799
    %859 = vmatprep.subr.mxu0 %v798
    %860 = vmatpush1.msra.mxu0 %v797
    %861 = vmatprep.subr.mxu0 %v796
    %862 = vmatpush1.msra.mxu0 %v795
    %863 = vmatprep.subr.mxu0 %v794
    %864 = vmatpush1.msra.mxu0 %v793
    %865 = vmatprep.subr.mxu0 %v792
    %866 = vmatpush1.msra.mxu0 %v791
    %867 = vmatprep.subr.mxu0 0.0
    %868 = vmatpush2.msra.mxu0 0.0
    %869 = vmatprep.subr.mxu0 0.0
    %870 = vmatpush2.msra.mxu0 0.0
    %871 = vmatprep.subr.mxu0 0.0
    %872 = vmatpush2.msra.mxu0 0.0
    %873 = vmatprep.subr.mxu0 0.0
    %874 = vmatpush2.msra.mxu0 0.0
    %875 = vmatprep.subr.mxu0 0.0
    %876 = vmatpush2.msra.mxu0 0.0
    %877 = vmatprep.subr.mxu0 0.0
    %878 = vmatpush2.msra.mxu0 0.0
    %879 = vmatprep.subr.mxu0 0.0
    %880 = vmatpush2.msra.mxu0 0.0
    %881 = vmatprep.subr.mxu0 0.0
    %882 = vmatpush2.msra.mxu0 0.0
    %883 = vmatprep.subr.mxu0 0.0
    %884 = vmatpush2.msra.mxu0 0.0
    %885 = vmatprep.subr.mxu0 0.0
    %886 = vmatpush2.msra.mxu0 0.0
    %887 = vmatprep.subr.mxu0 0.0
    %888 = vmatpush2.msra.mxu0 0.0
    %889 = vmatprep.subr.mxu0 0.0
    %890 = vmatpush2.msra.mxu0 0.0
    %891 = vmatprep.subr.mxu0 0.0
    %892 = vmatpush2.msra.mxu0 0.0
    %893 = vmatprep.subr.mxu0 0.0
    %894 = vmatpush2.msra.mxu0 0.0
    %895 = vmatprep.subr.mxu0 0.0
    %896 = vmatpush2.msra.mxu0 0.0
    %897 = vmatprep.subr.mxu0 0.0
    %898 = vmatpush2.msra.mxu0 0.0
    %899 = vmatprep.mubr.f32.mxu0 0.0
    %900 = vmatmul.mubr.f32.gmra.mxu0 %v727
    %v901 = vpop.f32.mrf.mxu0
    %v902 = vadd.f32 %v828, %v901
    %v903 = vpop.f32.mrf.mxu0
    %v904 = vadd.f32 %v832, %v903
    %905 = vmatprep.mubr.f32.mxu0 0.0
    %906 = vmatmul.mubr.f32.gmra.mxu0 %v728
    %v907 = vpop.f32.mrf.mxu0
    %v908 = vadd.f32 %v828, %v907
    %v909 = vpop.f32.mrf.mxu0
    %v910 = vadd.f32 %v832, %v909
    %911 = vmatprep.mubr.f32.mxu0 0.0
    %912 = vmatmul.mubr.f32.gmra.mxu0 %v729
    %v913 = vpop.f32.mrf.mxu0
    %v914 = vadd.f32 %v828, %v913
    %v915 = vpop.f32.mrf.mxu0
    %v916 = vadd.f32 %v832, %v915
    %917 = vmatprep.mubr.f32.mxu0 0.0
    %918 = vmatmul.mubr.f32.gmra.mxu0 %v730
    %v919 = vpop.f32.mrf.mxu0
    %v920 = vadd.f32 %v828, %v919
    %v921 = vpop.f32.mrf.mxu0
    %v922 = vadd.f32 %v832, %v921
    %923 = vmatprep.mubr.f32.mxu0 0.0
    %924 = vmatmul.mubr.f32.gmra.mxu0 %v731
    %v925 = vpop.f32.mrf.mxu0
    %v926 = vadd.f32 %v828, %v925
    %v927 = vpop.f32.mrf.mxu0
    %v928 = vadd.f32 %v832, %v927
    %929 = vmatprep.mubr.f32.mxu0 0.0
    %930 = vmatmul.mubr.f32.gmra.mxu0 %v732
    %v931 = vpop.f32.mrf.mxu0
    %v932 = vadd.f32 %v828, %v931
    %v933 = vpop.f32.mrf.mxu0
    %v934 = vadd.f32 %v832, %v933
    %935 = vmatprep.mubr.f32.mxu0 0.0
    %936 = vmatmul.mubr.f32.gmra.mxu0 %v733
    %v937 = vpop.f32.mrf.mxu0
    %v938 = vadd.f32 %v828, %v937
    %v939 = vpop.f32.mrf.mxu0
    %v940 = vadd.f32 %v832, %v939
    %941 = vmatprep.mubr.f32.mxu0 0.0
    %942 = vmatmul.mubr.f32.gmra.mxu0 %v734
    %v943 = vpop.f32.mrf.mxu0
    %v944 = vadd.f32 %v828, %v943
    %v945 = vpop.f32.mrf.mxu0
    %v946 = vadd.f32 %v832, %v945
    %947 = vmatprep.mubr.f32.mxu0 0.0
    %948 = vmatmul.mubr.f32.gmra.mxu0 %v735
    %v949 = vpop.f32.mrf.mxu0
    %v950 = vadd.f32 %v828, %v949
    %v951 = vpop.f32.mrf.mxu0
    %v952 = vadd.f32 %v832, %v951
    %953 = vmatprep.mubr.f32.mxu0 0.0
    %954 = vmatmul.mubr.f32.gmra.mxu0 %v736
    %v955 = vpop.f32.mrf.mxu0
    %v956 = vadd.f32 %v828, %v955
    %v957 = vpop.f32.mrf.mxu0
    %v958 = vadd.f32 %v832, %v957
    %959 = vmatprep.mubr.f32.mxu0 0.0
    %960 = vmatmul.mubr.f32.gmra.mxu0 %v737
    %v961 = vpop.f32.mrf.mxu0
    %v962 = vadd.f32 %v828, %v961
    %v963 = vpop.f32.mrf.mxu0
    %v964 = vadd.f32 %v832, %v963
    %965 = vmatprep.mubr.f32.mxu0 0.0
    %966 = vmatmul.mubr.f32.gmra.mxu0 %v738
    %v967 = vpop.f32.mrf.mxu0
    %v968 = vadd.f32 %v828, %v967
    %v969 = vpop.f32.mrf.mxu0
    %v970 = vadd.f32 %v832, %v969
    %971 = vmatprep.mubr.f32.mxu0 0.0
    %972 = vmatmul.mubr.f32.gmra.mxu0 %v739
    %v973 = vpop.f32.mrf.mxu0
    %v974 = vadd.f32 %v828, %v973
    %v975 = vpop.f32.mrf.mxu0
    %v976 = vadd.f32 %v832, %v975
    %977 = vmatprep.mubr.f32.mxu0 0.0
    %978 = vmatmul.mubr.f32.gmra.mxu0 %v740
    %v979 = vpop.f32.mrf.mxu0
    %v980 = vadd.f32 %v828, %v979
    %v981 = vpop.f32.mrf.mxu0
    %v982 = vadd.f32 %v832, %v981
    %983 = vmatprep.mubr.f32.mxu0 0.0
    %984 = vmatmul.mubr.f32.gmra.mxu0 %v741
    %v985 = vpop.f32.mrf.mxu0
    %v986 = vadd.f32 %v828, %v985
    %v987 = vpop.f32.mrf.mxu0
    %v988 = vadd.f32 %v832, %v987
    %989 = vmatprep.mubr.f32.mxu0 0.0
    %990 = vmatmul.mubr.f32.gmra.mxu0 %v742
    %v991 = vpop.f32.mrf.mxu0
    %v992 = vadd.f32 %v828, %v991
    %v993 = vpop.f32.mrf.mxu0
    %v994 = vadd.f32 %v832, %v993
    %995 = vmatprep.mubr.f32.mxu0 0.0
    %996 = vmatmul.mubr.f32.gmra.mxu0 %v743
    %v997 = vpop.f32.mrf.mxu0
    %v998 = vadd.f32 %v828, %v997
    %v999 = vpop.f32.mrf.mxu0
    %v1000 = vadd.f32 %v832, %v999
    %1001 = vmatprep.mubr.f32.mxu0 0.0
    %1002 = vmatmul.mubr.f32.gmra.mxu0 %v744
    %v1003 = vpop.f32.mrf.mxu0
    %v1004 = vadd.f32 %v828, %v1003
    %v1005 = vpop.f32.mrf.mxu0
    %v1006 = vadd.f32 %v832, %v1005
    %1007 = vmatprep.mubr.f32.mxu0 0.0
    %1008 = vmatmul.mubr.f32.gmra.mxu0 %v745
    %v1009 = vpop.f32.mrf.mxu0
    %v1010 = vadd.f32 %v828, %v1009
    %v1011 = vpop.f32.mrf.mxu0
    %v1012 = vadd.f32 %v832, %v1011
    %1013 = vmatprep.mubr.f32.mxu0 0.0
    %1014 = vmatmul.mubr.f32.gmra.mxu0 %v746
    %v1015 = vpop.f32.mrf.mxu0
    %v1016 = vadd.f32 %v828, %v1015
    %v1017 = vpop.f32.mrf.mxu0
    %v1018 = vadd.f32 %v832, %v1017
    %1019 = vmatprep.mubr.f32.mxu0 0.0
    %1020 = vmatmul.mubr.f32.gmra.mxu0 %v747
    %v1021 = vpop.f32.mrf.mxu0
    %v1022 = vadd.f32 %v828, %v1021
    %v1023 = vpop.f32.mrf.mxu0
    %v1024 = vadd.f32 %v832, %v1023
    %1025 = vmatprep.mubr.f32.mxu0 0.0
    %1026 = vmatmul.mubr.f32.gmra.mxu0 %v748
    %v1027 = vpop.f32.mrf.mxu0
    %v1028 = vadd.f32 %v828, %v1027
    %v1029 = vpop.f32.mrf.mxu0
    %v1030 = vadd.f32 %v832, %v1029
    %1031 = vmatprep.mubr.f32.mxu0 0.0
    %1032 = vmatmul.mubr.f32.gmra.mxu0 %v749
    %v1033 = vpop.f32.mrf.mxu0
    %v1034 = vadd.f32 %v828, %v1033
    %v1035 = vpop.f32.mrf.mxu0
    %v1036 = vadd.f32 %v832, %v1035
    %1037 = vmatprep.mubr.f32.mxu0 0.0
    %1038 = vmatmul.mubr.f32.gmra.mxu0 %v750
    %v1039 = vpop.f32.mrf.mxu0
    %v1040 = vadd.f32 %v828, %v1039
    %v1041 = vpop.f32.mrf.mxu0
    %v1042 = vadd.f32 %v832, %v1041
    %1043 = vmatprep.mubr.f32.mxu0 0.0
    %1044 = vmatmul.mubr.f32.gmra.mxu0 %v751
    %v1045 = vpop.f32.mrf.mxu0
    %v1046 = vadd.f32 %v828, %v1045
    %v1047 = vpop.f32.mrf.mxu0
    %v1048 = vadd.f32 %v832, %v1047
    %1049 = vmatprep.mubr.f32.mxu0 0.0
    %1050 = vmatmul.mubr.f32.gmra.mxu0 %v752
    %v1051 = vpop.f32.mrf.mxu0
    %v1052 = vadd.f32 %v828, %v1051
    %v1053 = vpop.f32.mrf.mxu0
    %v1054 = vadd.f32 %v832, %v1053
    %1055 = vmatprep.mubr.f32.mxu0 0.0
    %1056 = vmatmul.mubr.f32.gmra.mxu0 %v753
    %v1057 = vpop.f32.mrf.mxu0
    %v1058 = vadd.f32 %v828, %v1057
    %v1059 = vpop.f32.mrf.mxu0
    %v1060 = vadd.f32 %v832, %v1059
    %1061 = vmatprep.mubr.f32.mxu0 0.0
    %1062 = vmatmul.mubr.f32.gmra.mxu0 %v754
    %v1063 = vpop.f32.mrf.mxu0
    %v1064 = vadd.f32 %v828, %v1063
    %v1065 = vpop.f32.mrf.mxu0
    %v1066 = vadd.f32 %v832, %v1065
    %1067 = vmatprep.mubr.f32.mxu0 0.0
    %1068 = vmatmul.mubr.f32.gmra.mxu0 %v755
    %v1069 = vpop.f32.mrf.mxu0
    %v1070 = vadd.f32 %v828, %v1069
    %v1071 = vpop.f32.mrf.mxu0
    %v1072 = vadd.f32 %v832, %v1071
    %1073 = vmatprep.mubr.f32.mxu0 0.0
    %1074 = vmatmul.mubr.f32.gmra.mxu0 %v756
    %v1075 = vpop.f32.mrf.mxu0
    %v1076 = vadd.f32 %v828, %v1075
    %v1077 = vpop.f32.mrf.mxu0
    %v1078 = vadd.f32 %v832, %v1077
    %1079 = vmatprep.mubr.f32.mxu0 0.0
    %1080 = vmatmul.mubr.f32.gmra.mxu0 %v757
    %v1081 = vpop.f32.mrf.mxu0
    %v1082 = vadd.f32 %v828, %v1081
    %v1083 = vpop.f32.mrf.mxu0
    %v1084 = vadd.f32 %v832, %v1083
    %1085 = vmatprep.mubr.f32.mxu0 0.0
    %1086 = vmatmul.mubr.f32.gmra.mxu0 %v758
    %v1087 = vpop.f32.mrf.mxu0
    %v1088 = vadd.f32 %v828, %v1087
    %v1089 = vpop.f32.mrf.mxu0
    %v1090 = vadd.f32 %v832, %v1089
    %1091 = vmatprep.mubr.f32.mxu0 0.0
    %1092 = vmatmul.mubr.f32.gmra.mxu0 %v759
    %v1093 = vpop.f32.mrf.mxu0
    %v1094 = vadd.f32 %v828, %v1093
    %v1095 = vpop.f32.mrf.mxu0
    %v1096 = vadd.f32 %v832, %v1095
    %1097 = vmatprep.mubr.f32.mxu0 0.0
    %1098 = vmatmul.mubr.f32.gmra.mxu0 %v760
    %v1099 = vpop.f32.mrf.mxu0
    %v1100 = vadd.f32 %v828, %v1099
    %v1101 = vpop.f32.mrf.mxu0
    %v1102 = vadd.f32 %v832, %v1101
    %1103 = vmatprep.mubr.f32.mxu0 0.0
    %1104 = vmatmul.mubr.f32.gmra.mxu0 %v761
    %v1105 = vpop.f32.mrf.mxu0
    %v1106 = vadd.f32 %v828, %v1105
    %v1107 = vpop.f32.mrf.mxu0
    %v1108 = vadd.f32 %v832, %v1107
    %1109 = vmatprep.mubr.f32.mxu0 0.0
    %1110 = vmatmul.mubr.f32.gmra.mxu0 %v762
    %v1111 = vpop.f32.mrf.mxu0
    %v1112 = vadd.f32 %v828, %v1111
    %v1113 = vpop.f32.mrf.mxu0
    %v1114 = vadd.f32 %v832, %v1113
    %1115 = vmatprep.mubr.f32.mxu0 0.0
    %1116 = vmatmul.mubr.f32.gmra.mxu0 %v763
    %v1117 = vpop.f32.mrf.mxu0
    %v1118 = vadd.f32 %v828, %v1117
    %v1119 = vpop.f32.mrf.mxu0
    %v1120 = vadd.f32 %v832, %v1119
    %1121 = vmatprep.mubr.f32.mxu0 0.0
    %1122 = vmatmul.mubr.f32.gmra.mxu0 %v764
    %v1123 = vpop.f32.mrf.mxu0
    %v1124 = vadd.f32 %v828, %v1123
    %v1125 = vpop.f32.mrf.mxu0
    %v1126 = vadd.f32 %v832, %v1125
    %1127 = vmatprep.mubr.f32.mxu0 0.0
    %1128 = vmatmul.mubr.f32.gmra.mxu0 %v765
    %v1129 = vpop.f32.mrf.mxu0
    %v1130 = vadd.f32 %v828, %v1129
    %v1131 = vpop.f32.mrf.mxu0
    %v1132 = vadd.f32 %v832, %v1131
    %1133 = vmatprep.mubr.f32.mxu0 0.0
    %1134 = vmatmul.mubr.f32.gmra.mxu0 %v766
    %v1135 = vpop.f32.mrf.mxu0
    %v1136 = vadd.f32 %v828, %v1135
    %v1137 = vpop.f32.mrf.mxu0
    %v1138 = vadd.f32 %v832, %v1137
    %1139 = vmatprep.mubr.f32.mxu0 0.0
    %1140 = vmatmul.mubr.f32.gmra.mxu0 %v767
    %v1141 = vpop.f32.mrf.mxu0
    %v1142 = vadd.f32 %v828, %v1141
    %v1143 = vpop.f32.mrf.mxu0
    %v1144 = vadd.f32 %v832, %v1143
    %1145 = vmatprep.mubr.f32.mxu0 0.0
    %1146 = vmatmul.mubr.f32.gmra.mxu0 %v768
    %v1147 = vpop.f32.mrf.mxu0
    %v1148 = vadd.f32 %v828, %v1147
    %v1149 = vpop.f32.mrf.mxu0
    %v1150 = vadd.f32 %v832, %v1149
    %1151 = vmatprep.mubr.f32.mxu0 0.0
    %1152 = vmatmul.mubr.f32.gmra.mxu0 %v769
    %v1153 = vpop.f32.mrf.mxu0
    %v1154 = vadd.f32 %v828, %v1153
    %v1155 = vpop.f32.mrf.mxu0
    %v1156 = vadd.f32 %v832, %v1155
    %1157 = vmatprep.mubr.f32.mxu0 0.0
    %1158 = vmatmul.mubr.f32.gmra.mxu0 %v770
    %v1159 = vpop.f32.mrf.mxu0
    %v1160 = vadd.f32 %v828, %v1159
    %v1161 = vpop.f32.mrf.mxu0
    %v1162 = vadd.f32 %v832, %v1161
    %1163 = vmatprep.mubr.f32.mxu0 0.0
    %1164 = vmatmul.mubr.f32.gmra.mxu0 %v771
    %v1165 = vpop.f32.mrf.mxu0
    %v1166 = vadd.f32 %v828, %v1165
    %v1167 = vpop.f32.mrf.mxu0
    %v1168 = vadd.f32 %v832, %v1167
    %1169 = vmatprep.mubr.f32.mxu0 0.0
    %1170 = vmatmul.mubr.f32.gmra.mxu0 %v772
    %v1171 = vpop.f32.mrf.mxu0
    %v1172 = vadd.f32 %v828, %v1171
    %v1173 = vpop.f32.mrf.mxu0
    %v1174 = vadd.f32 %v832, %v1173
    %1175 = vmatprep.mubr.f32.mxu0 0.0
    %1176 = vmatmul.mubr.f32.gmra.mxu0 %v773
    %v1177 = vpop.f32.mrf.mxu0
    %v1178 = vadd.f32 %v828, %v1177
    %v1179 = vpop.f32.mrf.mxu0
    %v1180 = vadd.f32 %v832, %v1179
    %1181 = vmatprep.mubr.f32.mxu0 0.0
    %1182 = vmatmul.mubr.f32.gmra.mxu0 %v774
    %v1183 = vpop.f32.mrf.mxu0
    %v1184 = vadd.f32 %v828, %v1183
    %v1185 = vpop.f32.mrf.mxu0
    %v1186 = vadd.f32 %v832, %v1185
    %1187 = vmatprep.mubr.f32.mxu0 0.0
    %1188 = vmatmul.mubr.f32.gmra.mxu0 %v775
    %v1189 = vpop.f32.mrf.mxu0
    %v1190 = vadd.f32 %v828, %v1189
    %v1191 = vpop.f32.mrf.mxu0
    %v1192 = vadd.f32 %v832, %v1191
    %1193 = vmatprep.mubr.f32.mxu0 0.0
    %1194 = vmatmul.mubr.f32.gmra.mxu0 %v776
    %v1195 = vpop.f32.mrf.mxu0
    %v1196 = vadd.f32 %v828, %v1195
    %v1197 = vpop.f32.mrf.mxu0
    %v1198 = vadd.f32 %v832, %v1197
    %1199 = vmatprep.mubr.f32.mxu0 0.0
    %1200 = vmatmul.mubr.f32.gmra.mxu0 %v777
    %v1201 = vpop.f32.mrf.mxu0
    %v1202 = vadd.f32 %v828, %v1201
    %v1203 = vpop.f32.mrf.mxu0
    %v1204 = vadd.f32 %v832, %v1203
    %1205 = vmatprep.mubr.f32.mxu0 0.0
    %1206 = vmatmul.mubr.f32.gmra.mxu0 %v778
    %v1207 = vpop.f32.mrf.mxu0
    %v1208 = vadd.f32 %v828, %v1207
    %v1209 = vpop.f32.mrf.mxu0
    %v1210 = vadd.f32 %v832, %v1209
    %1211 = vmatprep.mubr.f32.mxu0 0.0
    %1212 = vmatmul.mubr.f32.gmra.mxu0 %v779
    %v1213 = vpop.f32.mrf.mxu0
    %v1214 = vadd.f32 %v828, %v1213
    %v1215 = vpop.f32.mrf.mxu0
    %v1216 = vadd.f32 %v832, %v1215
    %1217 = vmatprep.mubr.f32.mxu0 0.0
    %1218 = vmatmul.mubr.f32.gmra.mxu0 %v780
    %v1219 = vpop.f32.mrf.mxu0
    %v1220 = vadd.f32 %v828, %v1219
    %v1221 = vpop.f32.mrf.mxu0
    %v1222 = vadd.f32 %v832, %v1221
    %1223 = vmatprep.mubr.f32.mxu0 0.0
    %1224 = vmatmul.mubr.f32.gmra.mxu0 %v781
    %v1225 = vpop.f32.mrf.mxu0
    %v1226 = vadd.f32 %v828, %v1225
    %v1227 = vpop.f32.mrf.mxu0
    %v1228 = vadd.f32 %v832, %v1227
    %1229 = vmatprep.mubr.f32.mxu0 0.0
    %1230 = vmatmul.mubr.f32.gmra.mxu0 %v782
    %v1231 = vpop.f32.mrf.mxu0
    %v1232 = vadd.f32 %v828, %v1231
    %v1233 = vpop.f32.mrf.mxu0
    %v1234 = vadd.f32 %v832, %v1233
    %1235 = vmatprep.mubr.f32.mxu0 0.0
    %1236 = vmatmul.mubr.f32.gmra.mxu0 %v783
    %v1237 = vpop.f32.mrf.mxu0
    %v1238 = vadd.f32 %v828, %v1237
    %v1239 = vpop.f32.mrf.mxu0
    %v1240 = vadd.f32 %v832, %v1239
    %1241 = vmatprep.mubr.f32.mxu0 0.0
    %1242 = vmatmul.mubr.f32.gmra.mxu0 %v784
    %v1243 = vpop.f32.mrf.mxu0
    %v1244 = vadd.f32 %v828, %v1243
    %v1245 = vpop.f32.mrf.mxu0
    %v1246 = vadd.f32 %v832, %v1245
    %1247 = vmatprep.mubr.f32.mxu0 0.0
    %1248 = vmatmul.mubr.f32.gmra.mxu0 %v785
    %v1249 = vpop.f32.mrf.mxu0
    %v1250 = vadd.f32 %v828, %v1249
    %v1251 = vpop.f32.mrf.mxu0
    %v1252 = vadd.f32 %v832, %v1251
    %1253 = vmatprep.mubr.f32.mxu0 0.0
    %1254 = vmatmul.mubr.f32.gmra.mxu0 %v786
    %v1255 = vpop.f32.mrf.mxu0
    %v1256 = vadd.f32 %v828, %v1255
    %v1257 = vpop.f32.mrf.mxu0
    %v1258 = vadd.f32 %v832, %v1257
    %1259 = vmatprep.mubr.f32.mxu0 0.0
    %1260 = vmatmul.mubr.f32.gmra.mxu0 %v787
    %v1261 = vpop.f32.mrf.mxu0
    %v1262 = vadd.f32 %v828, %v1261
    %v1263 = vpop.f32.mrf.mxu0
    %v1264 = vadd.f32 %v832, %v1263
    %1265 = vmatprep.mubr.f32.mxu0 0.0
    %1266 = vmatmul.mubr.f32.gmra.mxu0 %v788
    %v1267 = vpop.f32.mrf.mxu0
    %v1268 = vadd.f32 %v828, %v1267
    %v1269 = vpop.f32.mrf.mxu0
    %v1270 = vadd.f32 %v832, %v1269
    %1271 = vmatprep.mubr.f32.mxu0 0.0
    %1272 = vmatmul.mubr.f32.gmra.mxu0 %v789
    %v1273 = vpop.f32.mrf.mxu0
    %v1274 = vadd.f32 %v828, %v1273
    %v1275 = vpop.f32.mrf.mxu0
    %v1276 = vadd.f32 %v832, %v1275
    %1277 = vmatprep.mubr.f32.mxu0 0.0
    %1278 = vmatmul.mubr.f32.gmra.mxu0 %v790
    %v1279 = vpop.f32.mrf.mxu0
    %v1280 = vadd.f32 %v828, %v1279
    %v1281 = vpop.f32.mrf.mxu0
    %v1282 = vadd.f32 %v832, %v1281
    %1283 = vdwg.mxu0
    %v1284 = vmax.f32 %v902, %v908
    %v1285 = vmax.f32 %v1284, %v914
    %v1286 = vmax.f32 %v1285, %v920
    %v1287 = vrot.slane %v1286, 4
    %v1288 = vmax.f32 %v1286, %v1287
    %v1289 = vrot.slane %v1288, 2
    %v1290 = vmax.f32 %v1288, %v1289
    %v1291 = vrot.slane %v1290, 1
    %v1292 = vmax.f32 %v1290, %v1291
    %v1293 = vmax.f32 %v904, %v910
    %v1294 = vmax.f32 %v1293, %v916
    %v1295 = vmax.f32 %v1294, %v922
    %v1296 = vrot.slane %v1295, 4
    %v1297 = vmax.f32 %v1295, %v1296
    %v1298 = vrot.slane %v1297, 2
    %v1299 = vmax.f32 %v1297, %v1298
    %v1300 = vrot.slane %v1299, 1
    %v1301 = vmax.f32 %v1299, %v1300
    %v1302 = vmax.f32 %v926, %v932
    %v1303 = vmax.f32 %v1302, %v938
    %v1304 = vmax.f32 %v1303, %v944
    %v1305 = vrot.slane %v1304, 4
    %v1306 = vmax.f32 %v1304, %v1305
    %v1307 = vrot.slane %v1306, 2
    %v1308 = vmax.f32 %v1306, %v1307
    %v1309 = vrot.slane %v1308, 1
    %v1310 = vmax.f32 %v1308, %v1309
    %v1311 = vmax.f32 %v928, %v934
    %v1312 = vmax.f32 %v1311, %v940
    %v1313 = vmax.f32 %v1312, %v946
    %v1314 = vrot.slane %v1313, 4
    %v1315 = vmax.f32 %v1313, %v1314
    %v1316 = vrot.slane %v1315, 2
    %v1317 = vmax.f32 %v1315, %v1316
    %v1318 = vrot.slane %v1317, 1
    %v1319 = vmax.f32 %v1317, %v1318
    %v1320 = vmax.f32 %v950, %v956
    %v1321 = vmax.f32 %v1320, %v962
    %v1322 = vmax.f32 %v1321, %v968
    %v1323 = vrot.slane %v1322, 4
    %v1324 = vmax.f32 %v1322, %v1323
    %v1325 = vrot.slane %v1324, 2
    %v1326 = vmax.f32 %v1324, %v1325
    %v1327 = vrot.slane %v1326, 1
    %v1328 = vmax.f32 %v1326, %v1327
    %v1329 = vmax.f32 %v952, %v958
    %v1330 = vmax.f32 %v1329, %v964
    %v1331 = vmax.f32 %v1330, %v970
    %v1332 = vrot.slane %v1331, 4
    %v1333 = vmax.f32 %v1331, %v1332
    %v1334 = vrot.slane %v1333, 2
    %v1335 = vmax.f32 %v1333, %v1334
    %v1336 = vrot.slane %v1335, 1
    %v1337 = vmax.f32 %v1335, %v1336
    %v1338 = vmax.f32 %v974, %v980
    %v1339 = vmax.f32 %v1338, %v986
    %v1340 = vmax.f32 %v1339, %v992
    %v1341 = vrot.slane %v1340, 4
    %v1342 = vmax.f32 %v1340, %v1341
    %v1343 = vrot.slane %v1342, 2
    %v1344 = vmax.f32 %v1342, %v1343
    %v1345 = vrot.slane %v1344, 1
    %v1346 = vmax.f32 %v1344, %v1345
    %v1347 = vmax.f32 %v976, %v982
    %v1348 = vmax.f32 %v1347, %v988
    %v1349 = vmax.f32 %v1348, %v994
    %v1350 = vrot.slane %v1349, 4
    %v1351 = vmax.f32 %v1349, %v1350
    %v1352 = vrot.slane %v1351, 2
    %v1353 = vmax.f32 %v1351, %v1352
    %v1354 = vrot.slane %v1353, 1
    %v1355 = vmax.f32 %v1353, %v1354
    %v1356 = vmax.f32 %v998, %v1004
    %v1357 = vmax.f32 %v1356, %v1010
    %v1358 = vmax.f32 %v1357, %v1016
    %v1359 = vrot.slane %v1358, 4
    %v1360 = vmax.f32 %v1358, %v1359
    %v1361 = vrot.slane %v1360, 2
    %v1362 = vmax.f32 %v1360, %v1361
    %v1363 = vrot.slane %v1362, 1
    %v1364 = vmax.f32 %v1362, %v1363
    %v1365 = vmax.f32 %v1000, %v1006
    %v1366 = vmax.f32 %v1365, %v1012
    %v1367 = vmax.f32 %v1366, %v1018
    %v1368 = vrot.slane %v1367, 4
    %v1369 = vmax.f32 %v1367, %v1368
    %v1370 = vrot.slane %v1369, 2
    %v1371 = vmax.f32 %v1369, %v1370
    %v1372 = vrot.slane %v1371, 1
    %v1373 = vmax.f32 %v1371, %v1372
    %v1374 = vmax.f32 %v1022, %v1028
    %v1375 = vmax.f32 %v1374, %v1034
    %v1376 = vmax.f32 %v1375, %v1040
    %v1377 = vrot.slane %v1376, 4
    %v1378 = vmax.f32 %v1376, %v1377
    %v1379 = vrot.slane %v1378, 2
    %v1380 = vmax.f32 %v1378, %v1379
    %v1381 = vrot.slane %v1380, 1
    %v1382 = vmax.f32 %v1380, %v1381
    %v1383 = vmax.f32 %v1024, %v1030
    %v1384 = vmax.f32 %v1383, %v1036
    %v1385 = vmax.f32 %v1384, %v1042
    %v1386 = vrot.slane %v1385, 4
    %v1387 = vmax.f32 %v1385, %v1386
    %v1388 = vrot.slane %v1387, 2
    %v1389 = vmax.f32 %v1387, %v1388
    %v1390 = vrot.slane %v1389, 1
    %v1391 = vmax.f32 %v1389, %v1390
    %v1392 = vmax.f32 %v1046, %v1052
    %v1393 = vmax.f32 %v1392, %v1058
    %v1394 = vmax.f32 %v1393, %v1064
    %v1395 = vrot.slane %v1394, 4
    %v1396 = vmax.f32 %v1394, %v1395
    %v1397 = vrot.slane %v1396, 2
    %v1398 = vmax.f32 %v1396, %v1397
    %v1399 = vrot.slane %v1398, 1
    %v1400 = vmax.f32 %v1398, %v1399
    %v1401 = vmax.f32 %v1048, %v1054
    %v1402 = vmax.f32 %v1401, %v1060
    %v1403 = vmax.f32 %v1402, %v1066
    %v1404 = vrot.slane %v1403, 4
    %v1405 = vmax.f32 %v1403, %v1404
    %v1406 = vrot.slane %v1405, 2
    %v1407 = vmax.f32 %v1405, %v1406
    %v1408 = vrot.slane %v1407, 1
    %v1409 = vmax.f32 %v1407, %v1408
    %v1410 = vmax.f32 %v1070, %v1076
    %v1411 = vmax.f32 %v1410, %v1082
    %v1412 = vmax.f32 %v1411, %v1088
    %v1413 = vrot.slane %v1412, 4
    %v1414 = vmax.f32 %v1412, %v1413
    %v1415 = vrot.slane %v1414, 2
    %v1416 = vmax.f32 %v1414, %v1415
    %v1417 = vrot.slane %v1416, 1
    %v1418 = vmax.f32 %v1416, %v1417
    %v1419 = vmax.f32 %v1072, %v1078
    %v1420 = vmax.f32 %v1419, %v1084
    %v1421 = vmax.f32 %v1420, %v1090
    %v1422 = vrot.slane %v1421, 4
    %v1423 = vmax.f32 %v1421, %v1422
    %v1424 = vrot.slane %v1423, 2
    %v1425 = vmax.f32 %v1423, %v1424
    %v1426 = vrot.slane %v1425, 1
    %v1427 = vmax.f32 %v1425, %v1426
    %v1428 = vmax.f32 %v1094, %v1100
    %v1429 = vmax.f32 %v1428, %v1106
    %v1430 = vmax.f32 %v1429, %v1112
    %v1431 = vrot.slane %v1430, 4
    %v1432 = vmax.f32 %v1430, %v1431
    %v1433 = vrot.slane %v1432, 2
    %v1434 = vmax.f32 %v1432, %v1433
    %v1435 = vrot.slane %v1434, 1
    %v1436 = vmax.f32 %v1434, %v1435
    %v1437 = vmax.f32 %v1096, %v1102
    %v1438 = vmax.f32 %v1437, %v1108
    %v1439 = vmax.f32 %v1438, %v1114
    %v1440 = vrot.slane %v1439, 4
    %v1441 = vmax.f32 %v1439, %v1440
    %v1442 = vrot.slane %v1441, 2
    %v1443 = vmax.f32 %v1441, %v1442
    %v1444 = vrot.slane %v1443, 1
    %v1445 = vmax.f32 %v1443, %v1444
    %v1446 = vmax.f32 %v1118, %v1124
    %v1447 = vmax.f32 %v1446, %v1130
    %v1448 = vmax.f32 %v1447, %v1136
    %v1449 = vrot.slane %v1448, 4
    %v1450 = vmax.f32 %v1448, %v1449
    %v1451 = vrot.slane %v1450, 2
    %v1452 = vmax.f32 %v1450, %v1451
    %v1453 = vrot.slane %v1452, 1
    %v1454 = vmax.f32 %v1452, %v1453
    %v1455 = vmax.f32 %v1120, %v1126
    %v1456 = vmax.f32 %v1455, %v1132
    %v1457 = vmax.f32 %v1456, %v1138
    %v1458 = vrot.slane %v1457, 4
    %v1459 = vmax.f32 %v1457, %v1458
    %v1460 = vrot.slane %v1459, 2
    %v1461 = vmax.f32 %v1459, %v1460
    %v1462 = vrot.slane %v1461, 1
    %v1463 = vmax.f32 %v1461, %v1462
    %v1464 = vmax.f32 %v1142, %v1148
    %v1465 = vmax.f32 %v1464, %v1154
    %v1466 = vmax.f32 %v1465, %v1160
    %v1467 = vrot.slane %v1466, 4
    %v1468 = vmax.f32 %v1466, %v1467
    %v1469 = vrot.slane %v1468, 2
    %v1470 = vmax.f32 %v1468, %v1469
    %v1471 = vrot.slane %v1470, 1
    %v1472 = vmax.f32 %v1470, %v1471
    %v1473 = vmax.f32 %v1144, %v1150
    %v1474 = vmax.f32 %v1473, %v1156
    %v1475 = vmax.f32 %v1474, %v1162
    %v1476 = vrot.slane %v1475, 4
    %v1477 = vmax.f32 %v1475, %v1476
    %v1478 = vrot.slane %v1477, 2
    %v1479 = vmax.f32 %v1477, %v1478
    %v1480 = vrot.slane %v1479, 1
    %v1481 = vmax.f32 %v1479, %v1480
    %v1482 = vmax.f32 %v1166, %v1172
    %v1483 = vmax.f32 %v1482, %v1178
    %v1484 = vmax.f32 %v1483, %v1184
    %v1485 = vrot.slane %v1484, 4
    %v1486 = vmax.f32 %v1484, %v1485
    %v1487 = vrot.slane %v1486, 2
    %v1488 = vmax.f32 %v1486, %v1487
    %v1489 = vrot.slane %v1488, 1
    %v1490 = vmax.f32 %v1488, %v1489
    %v1491 = vmax.f32 %v1168, %v1174
    %v1492 = vmax.f32 %v1491, %v1180
    %v1493 = vmax.f32 %v1492, %v1186
    %v1494 = vrot.slane %v1493, 4
    %v1495 = vmax.f32 %v1493, %v1494
    %v1496 = vrot.slane %v1495, 2
    %v1497 = vmax.f32 %v1495, %v1496
    %v1498 = vrot.slane %v1497, 1
    %v1499 = vmax.f32 %v1497, %v1498
    %v1500 = vmax.f32 %v1190, %v1196
    %v1501 = vmax.f32 %v1500, %v1202
    %v1502 = vmax.f32 %v1501, %v1208
    %v1503 = vrot.slane %v1502, 4
    %v1504 = vmax.f32 %v1502, %v1503
    %v1505 = vrot.slane %v1504, 2
    %v1506 = vmax.f32 %v1504, %v1505
    %v1507 = vrot.slane %v1506, 1
    %v1508 = vmax.f32 %v1506, %v1507
    %v1509 = vmax.f32 %v1192, %v1198
    %v1510 = vmax.f32 %v1509, %v1204
    %v1511 = vmax.f32 %v1510, %v1210
    %v1512 = vrot.slane %v1511, 4
    %v1513 = vmax.f32 %v1511, %v1512
    %v1514 = vrot.slane %v1513, 2
    %v1515 = vmax.f32 %v1513, %v1514
    %v1516 = vrot.slane %v1515, 1
    %v1517 = vmax.f32 %v1515, %v1516
    %v1518 = vmax.f32 %v1214, %v1220
    %v1519 = vmax.f32 %v1518, %v1226
    %v1520 = vmax.f32 %v1519, %v1232
    %v1521 = vrot.slane %v1520, 4
    %v1522 = vmax.f32 %v1520, %v1521
    %v1523 = vrot.slane %v1522, 2
    %v1524 = vmax.f32 %v1522, %v1523
    %v1525 = vrot.slane %v1524, 1
    %v1526 = vmax.f32 %v1524, %v1525
    %v1527 = vmax.f32 %v1216, %v1222
    %v1528 = vmax.f32 %v1527, %v1228
    %v1529 = vmax.f32 %v1528, %v1234
    %v1530 = vrot.slane %v1529, 4
    %v1531 = vmax.f32 %v1529, %v1530
    %v1532 = vrot.slane %v1531, 2
    %v1533 = vmax.f32 %v1531, %v1532
    %v1534 = vrot.slane %v1533, 1
    %v1535 = vmax.f32 %v1533, %v1534
    %v1536 = vmax.f32 %v1238, %v1244
    %v1537 = vmax.f32 %v1536, %v1250
    %v1538 = vmax.f32 %v1537, %v1256
    %v1539 = vrot.slane %v1538, 4
    %v1540 = vmax.f32 %v1538, %v1539
    %v1541 = vrot.slane %v1540, 2
    %v1542 = vmax.f32 %v1540, %v1541
    %v1543 = vrot.slane %v1542, 1
    %v1544 = vmax.f32 %v1542, %v1543
    %v1545 = vmax.f32 %v1240, %v1246
    %v1546 = vmax.f32 %v1545, %v1252
    %v1547 = vmax.f32 %v1546, %v1258
    %v1548 = vrot.slane %v1547, 4
    %v1549 = vmax.f32 %v1547, %v1548
    %v1550 = vrot.slane %v1549, 2
    %v1551 = vmax.f32 %v1549, %v1550
    %v1552 = vrot.slane %v1551, 1
    %v1553 = vmax.f32 %v1551, %v1552
    %v1554 = vmax.f32 %v1262, %v1268
    %v1555 = vmax.f32 %v1554, %v1274
    %v1556 = vmax.f32 %v1555, %v1280
    %v1557 = vrot.slane %v1556, 4
    %v1558 = vmax.f32 %v1556, %v1557
    %v1559 = vrot.slane %v1558, 2
    %v1560 = vmax.f32 %v1558, %v1559
    %v1561 = vrot.slane %v1560, 1
    %v1562 = vmax.f32 %v1560, %v1561
    %v1563 = vmax.f32 %v1264, %v1270
    %v1564 = vmax.f32 %v1563, %v1276
    %v1565 = vmax.f32 %v1564, %v1282
    %v1566 = vrot.slane %v1565, 4
    %v1567 = vmax.f32 %v1565, %v1566
    %v1568 = vrot.slane %v1567, 2
    %v1569 = vmax.f32 %v1567, %v1568
    %v1570 = vrot.slane %v1569, 1
    %v1571 = vmax.f32 %v1569, %v1570
    %v1572 = vld [vmem:[#allocation2] sm:$0xff]
    %v1573 = vld [vmem:[#allocation2 + $0x8] sm:$0xff]
    %v1574 = vld [vmem:[#allocation2 + $0x10] sm:$0xff]
    %v1575 = vld [vmem:[#allocation2 + $0x18] sm:$0xff]
    %v1576 = vld [vmem:[#allocation2 + $0x20] sm:$0xff]
    %v1577 = vld [vmem:[#allocation2 + $0x28] sm:$0xff]
    %v1578 = vld [vmem:[#allocation2 + $0x30] sm:$0xff]
    %v1579 = vld [vmem:[#allocation2 + $0x38] sm:$0xff]
    %v1580 = vld [vmem:[#allocation2 + $0x40] sm:$0xff]
    %v1581 = vld [vmem:[#allocation2 + $0x48] sm:$0xff]
    %v1582 = vld [vmem:[#allocation2 + $0x50] sm:$0xff]
    %v1583 = vld [vmem:[#allocation2 + $0x58] sm:$0xff]
    %v1584 = vld [vmem:[#allocation2 + $0x60] sm:$0xff]
    %v1585 = vld [vmem:[#allocation2 + $0x68] sm:$0xff]
    %v1586 = vld [vmem:[#allocation2 + $0x70] sm:$0xff]
    %v1587 = vld [vmem:[#allocation2 + $0x78] sm:$0xff]
    %v1588 = vld [vmem:[#allocation2 + $0x80] sm:$0xff]
    %v1589 = vld [vmem:[#allocation2 + $0x88] sm:$0xff]
    %v1590 = vld [vmem:[#allocation2 + $0x90] sm:$0xff]
    %v1591 = vld [vmem:[#allocation2 + $0x98] sm:$0xff]
    %v1592 = vld [vmem:[#allocation2 + $0xa0] sm:$0xff]
    %v1593 = vld [vmem:[#allocation2 + $0xa8] sm:$0xff]
    %v1594 = vld [vmem:[#allocation2 + $0xb0] sm:$0xff]
    %v1595 = vld [vmem:[#allocation2 + $0xb8] sm:$0xff]
    %v1596 = vld [vmem:[#allocation2 + $0xc0] sm:$0xff]
    %v1597 = vld [vmem:[#allocation2 + $0xc8] sm:$0xff]
    %v1598 = vld [vmem:[#allocation2 + $0xd0] sm:$0xff]
    %v1599 = vld [vmem:[#allocation2 + $0xd8] sm:$0xff]
    %v1600 = vld [vmem:[#allocation2 + $0xe0] sm:$0xff]
    %v1601 = vld [vmem:[#allocation2 + $0xe8] sm:$0xff]
    %v1602 = vld [vmem:[#allocation2 + $0xf0] sm:$0xff]
    %v1603 = vld [vmem:[#allocation2 + $0xf8] sm:$0xff]
    %v1604 = vld [vmem:[#allocation2 + $0x100] sm:$0xff]
    %v1605 = vld [vmem:[#allocation2 + $0x108] sm:$0xff]
    %v1606 = vld [vmem:[#allocation2 + $0x110] sm:$0xff]
    %v1607 = vld [vmem:[#allocation2 + $0x118] sm:$0xff]
    %v1608 = vld [vmem:[#allocation2 + $0x120] sm:$0xff]
    %v1609 = vld [vmem:[#allocation2 + $0x128] sm:$0xff]
    %v1610 = vld [vmem:[#allocation2 + $0x130] sm:$0xff]
    %v1611 = vld [vmem:[#allocation2 + $0x138] sm:$0xff]
    %v1612 = vld [vmem:[#allocation2 + $0x140] sm:$0xff]
    %v1613 = vld [vmem:[#allocation2 + $0x148] sm:$0xff]
    %v1614 = vld [vmem:[#allocation2 + $0x150] sm:$0xff]
    %v1615 = vld [vmem:[#allocation2 + $0x158] sm:$0xff]
    %v1616 = vld [vmem:[#allocation2 + $0x160] sm:$0xff]
    %v1617 = vld [vmem:[#allocation2 + $0x168] sm:$0xff]
    %v1618 = vld [vmem:[#allocation2 + $0x170] sm:$0xff]
    %v1619 = vld [vmem:[#allocation2 + $0x178] sm:$0xff]
    %v1620 = vld [vmem:[#allocation2 + $0x180] sm:$0xff]
    %v1621 = vld [vmem:[#allocation2 + $0x188] sm:$0xff]
    %v1622 = vld [vmem:[#allocation2 + $0x190] sm:$0xff]
    %v1623 = vld [vmem:[#allocation2 + $0x198] sm:$0xff]
    %v1624 = vld [vmem:[#allocation2 + $0x1a0] sm:$0xff]
    %v1625 = vld [vmem:[#allocation2 + $0x1a8] sm:$0xff]
    %v1626 = vld [vmem:[#allocation2 + $0x1b0] sm:$0xff]
    %v1627 = vld [vmem:[#allocation2 + $0x1b8] sm:$0xff]
    %v1628 = vld [vmem:[#allocation2 + $0x1c0] sm:$0xff]
    %v1629 = vld [vmem:[#allocation2 + $0x1c8] sm:$0xff]
    %v1630 = vld [vmem:[#allocation2 + $0x1d0] sm:$0xff]
    %v1631 = vld [vmem:[#allocation2 + $0x1d8] sm:$0xff]
    %v1632 = vld [vmem:[#allocation2 + $0x1e0] sm:$0xff]
    %v1633 = vld [vmem:[#allocation2 + $0x1e8] sm:$0xff]
    %v1634 = vld [vmem:[#allocation2 + $0x1f0] sm:$0xff]
    %v1635 = vld [vmem:[#allocation2 + $0x1f8] sm:$0xff]
    %v1636 = vld [vmem:[#allocation2 + $0x200] sm:$0xff]
    %v1637 = vld [vmem:[#allocation2 + $0x208] sm:$0xff]
    %v1638 = vld [vmem:[#allocation2 + $0x210] sm:$0xff]
    %v1639 = vld [vmem:[#allocation2 + $0x218] sm:$0xff]
    %v1640 = vld [vmem:[#allocation2 + $0x220] sm:$0xff]
    %v1641 = vld [vmem:[#allocation2 + $0x228] sm:$0xff]
    %v1642 = vld [vmem:[#allocation2 + $0x230] sm:$0xff]
    %v1643 = vld [vmem:[#allocation2 + $0x238] sm:$0xff]
    %v1644 = vld [vmem:[#allocation2 + $0x240] sm:$0xff]
    %v1645 = vld [vmem:[#allocation2 + $0x248] sm:$0xff]
    %v1646 = vld [vmem:[#allocation2 + $0x250] sm:$0xff]
    %v1647 = vld [vmem:[#allocation2 + $0x258] sm:$0xff]
    %v1648 = vld [vmem:[#allocation2 + $0x260] sm:$0xff]
    %v1649 = vld [vmem:[#allocation2 + $0x268] sm:$0xff]
    %v1650 = vld [vmem:[#allocation2 + $0x270] sm:$0xff]
    %v1651 = vld [vmem:[#allocation2 + $0x278] sm:$0xff]
    %v1652 = vld [vmem:[#allocation2 + $0x280] sm:$0xff]
    %v1653 = vld [vmem:[#allocation2 + $0x288] sm:$0xff]
    %v1654 = vld [vmem:[#allocation2 + $0x290] sm:$0xff]
    %v1655 = vld [vmem:[#allocation2 + $0x298] sm:$0xff]
    %v1656 = vld [vmem:[#allocation2 + $0x2a0] sm:$0xff]
    %v1657 = vld [vmem:[#allocation2 + $0x2a8] sm:$0xff]
    %v1658 = vld [vmem:[#allocation2 + $0x2b0] sm:$0xff]
    %v1659 = vld [vmem:[#allocation2 + $0x2b8] sm:$0xff]
    %v1660 = vld [vmem:[#allocation2 + $0x2c0] sm:$0xff]
    %v1661 = vld [vmem:[#allocation2 + $0x2c8] sm:$0xff]
    %v1662 = vld [vmem:[#allocation2 + $0x2d0] sm:$0xff]
    %v1663 = vld [vmem:[#allocation2 + $0x2d8] sm:$0xff]
    %v1664 = vld [vmem:[#allocation2 + $0x2e0] sm:$0xff]
    %v1665 = vld [vmem:[#allocation2 + $0x2e8] sm:$0xff]
    %v1666 = vld [vmem:[#allocation2 + $0x2f0] sm:$0xff]
    %v1667 = vld [vmem:[#allocation2 + $0x2f8] sm:$0xff]
    %v1668 = vld [vmem:[#allocation2 + $0x300] sm:$0xff]
    %v1669 = vld [vmem:[#allocation2 + $0x308] sm:$0xff]
    %v1670 = vld [vmem:[#allocation2 + $0x310] sm:$0xff]
    %v1671 = vld [vmem:[#allocation2 + $0x318] sm:$0xff]
    %v1672 = vld [vmem:[#allocation2 + $0x320] sm:$0xff]
    %v1673 = vld [vmem:[#allocation2 + $0x328] sm:$0xff]
    %v1674 = vld [vmem:[#allocation2 + $0x330] sm:$0xff]
    %v1675 = vld [vmem:[#allocation2 + $0x338] sm:$0xff]
    %v1676 = vld [vmem:[#allocation2 + $0x340] sm:$0xff]
    %v1677 = vld [vmem:[#allocation2 + $0x348] sm:$0xff]
    %v1678 = vld [vmem:[#allocation2 + $0x350] sm:$0xff]
    %v1679 = vld [vmem:[#allocation2 + $0x358] sm:$0xff]
    %v1680 = vld [vmem:[#allocation2 + $0x360] sm:$0xff]
    %v1681 = vld [vmem:[#allocation2 + $0x368] sm:$0xff]
    %v1682 = vld [vmem:[#allocation2 + $0x370] sm:$0xff]
    %v1683 = vld [vmem:[#allocation2 + $0x378] sm:$0xff]
    %v1684 = vld [vmem:[#allocation2 + $0x380] sm:$0xff]
    %v1685 = vld [vmem:[#allocation2 + $0x388] sm:$0xff]
    %v1686 = vld [vmem:[#allocation2 + $0x390] sm:$0xff]
    %v1687 = vld [vmem:[#allocation2 + $0x398] sm:$0xff]
    %v1688 = vld [vmem:[#allocation2 + $0x3a0] sm:$0xff]
    %v1689 = vld [vmem:[#allocation2 + $0x3a8] sm:$0xff]
    %v1690 = vld [vmem:[#allocation2 + $0x3b0] sm:$0xff]
    %v1691 = vld [vmem:[#allocation2 + $0x3b8] sm:$0xff]
    %v1692 = vld [vmem:[#allocation2 + $0x3c0] sm:$0xff]
    %v1693 = vld [vmem:[#allocation2 + $0x3c8] sm:$0xff]
    %v1694 = vld [vmem:[#allocation2 + $0x3d0] sm:$0xff]
    %v1695 = vld [vmem:[#allocation2 + $0x3d8] sm:$0xff]
    %v1696 = vld [vmem:[#allocation2 + $0x3e0] sm:$0xff]
    %v1697 = vld [vmem:[#allocation2 + $0x3e8] sm:$0xff]
    %v1698 = vld [vmem:[#allocation2 + $0x3f0] sm:$0xff]
    %v1699 = vld [vmem:[#allocation2 + $0x3f8] sm:$0xff]
    %v1700 = vld [vmem:[%s7] sm:$0xf]
    %v1702 = vlaneseq
    %v1703 = vshrl.u32 %v1702, 7
    %v1704 = vsub.s32 0, %v1703
    %v1705 = vrot.slane %v1700, %v1704
    %v1706 = vlaneseq
    %v1707 = vshrl.u32 %v1706, 7
    %v1708 = vsub.s32 1, %v1707
    %v1709 = vrot.slane %v1700, %v1708
    %v1710 = vlaneseq
    %v1711 = vshrl.u32 %v1710, 7
    %v1712 = vsub.s32 2, %v1711
    %v1713 = vrot.slane %v1700, %v1712
    %v1714 = vlaneseq
    %v1715 = vshrl.u32 %v1714, 7
    %v1716 = vsub.s32 3, %v1715
    %v1717 = vrot.slane %v1700, %v1716
    %vm1754 = vcmask 1041409
    %v1755 = vsel %vm1754, %v1310, %v1292
    %vm1756 = vcmask 1042434
    %v1757 = vsel %vm1756, %v1328, %v1755
    %vm1758 = vcmask 1043459
    %v1759 = vsel %vm1758, %v1346, %v1757
    %vm1760 = vcmask 1044484
    %v1761 = vsel %vm1760, %v1364, %v1759
    %vm1762 = vcmask 1045509
    %v1763 = vsel %vm1762, %v1382, %v1761
    %vm1764 = vcmask 1046534
    %v1765 = vsel %vm1764, %v1400, %v1763
    %vm1766 = vcmask 1047559
    %v1767 = vsel %vm1766, %v1418, %v1765
    %v1768 = vsel %vm1754, %v1319, %v1301
    %v1769 = vsel %vm1756, %v1337, %v1768
    %v1770 = vsel %vm1758, %v1355, %v1769
    %v1771 = vsel %vm1760, %v1373, %v1770
    %v1772 = vsel %vm1762, %v1391, %v1771
    %v1773 = vsel %vm1764, %v1409, %v1772
    %v1774 = vsel %vm1766, %v1427, %v1773
    %v1775 = vsel %vm1754, %v1454, %v1436
    %v1776 = vsel %vm1756, %v1472, %v1775
    %v1777 = vsel %vm1758, %v1490, %v1776
    %v1778 = vsel %vm1760, %v1508, %v1777
    %v1779 = vsel %vm1762, %v1526, %v1778
    %v1780 = vsel %vm1764, %v1544, %v1779
    %v1781 = vsel %vm1766, %v1562, %v1780
    %v1782 = vsel %vm1754, %v1463, %v1445
    %v1783 = vsel %vm1756, %v1481, %v1782
    %v1784 = vsel %vm1758, %v1499, %v1783
    %v1785 = vsel %vm1760, %v1517, %v1784
    %v1786 = vsel %vm1762, %v1535, %v1785
    %v1787 = vsel %vm1764, %v1553, %v1786
    %v1788 = vsel %vm1766, %v1571, %v1787
    %1793 = vmatprep.subr.mxu0 %v1633
    %1794 = vmatpush1.msra.mxu0 %v1632
    %1795 = vmatprep.subr.mxu0 %v1629
    %1796 = vmatpush1.msra.mxu0 %v1628
    %1797 = vmatprep.subr.mxu0 %v1625
    %1798 = vmatpush1.msra.mxu0 %v1624
    %1799 = vmatprep.subr.mxu0 %v1621
    %1800 = vmatpush1.msra.mxu0 %v1620
    %1801 = vmatprep.subr.mxu0 %v1617
    %1802 = vmatpush1.msra.mxu0 %v1616
    %1803 = vmatprep.subr.mxu0 %v1613
    %1804 = vmatpush1.msra.mxu0 %v1612
    %1805 = vmatprep.subr.mxu0 %v1609
    %1806 = vmatpush1.msra.mxu0 %v1608
    %1807 = vmatprep.subr.mxu0 %v1605
    %1808 = vmatpush1.msra.mxu0 %v1604
    %1809 = vmatprep.subr.mxu0 %v1601
    %1810 = vmatpush1.msra.mxu0 %v1600
    %1811 = vmatprep.subr.mxu0 %v1597
    %1812 = vmatpush1.msra.mxu0 %v1596
    %1813 = vmatprep.subr.mxu0 %v1593
    %1814 = vmatpush1.msra.mxu0 %v1592
    %1815 = vmatprep.subr.mxu0 %v1589
    %1816 = vmatpush1.msra.mxu0 %v1588
    %1817 = vmatprep.subr.mxu0 %v1585
    %1818 = vmatpush1.msra.mxu0 %v1584
    %1819 = vmatprep.subr.mxu0 %v1581
    %1820 = vmatpush1.msra.mxu0 %v1580
    %1821 = vmatprep.subr.mxu0 %v1577
    %1822 = vmatpush1.msra.mxu0 %v1576
    %1823 = vmatprep.subr.mxu0 %v1573
    %1824 = vmatpush1.msra.mxu0 %v1572
    %1825 = vmatprep.subr.mxu0 %v1697
    %1826 = vmatpush2.msra.mxu0 %v1696
    %1827 = vmatprep.subr.mxu0 %v1693
    %1828 = vmatpush2.msra.mxu0 %v1692
    %1829 = vmatprep.subr.mxu0 %v1689
    %1830 = vmatpush2.msra.mxu0 %v1688
    %1831 = vmatprep.subr.mxu0 %v1685
    %1832 = vmatpush2.msra.mxu0 %v1684
    %1833 = vmatprep.subr.mxu0 %v1681
    %1834 = vmatpush2.msra.mxu0 %v1680
    %1835 = vmatprep.subr.mxu0 %v1677
    %1836 = vmatpush2.msra.mxu0 %v1676
    %1837 = vmatprep.subr.mxu0 %v1673
    %1838 = vmatpush2.msra.mxu0 %v1672
    %1839 = vmatprep.subr.mxu0 %v1669
    %1840 = vmatpush2.msra.mxu0 %v1668
    %1841 = vmatprep.subr.mxu0 %v1665
    %1842 = vmatpush2.msra.mxu0 %v1664
    %1843 = vmatprep.subr.mxu0 %v1661
    %1844 = vmatpush2.msra.mxu0 %v1660
    %1845 = vmatprep.subr.mxu0 %v1657
    %1846 = vmatpush2.msra.mxu0 %v1656
    %1847 = vmatprep.subr.mxu0 %v1653
    %1848 = vmatpush2.msra.mxu0 %v1652
    %1849 = vmatprep.subr.mxu0 %v1649
    %1850 = vmatpush2.msra.mxu0 %v1648
    %1851 = vmatprep.subr.mxu0 %v1645
    %1852 = vmatpush2.msra.mxu0 %v1644
    %1853 = vmatprep.subr.mxu0 %v1641
    %1854 = vmatpush2.msra.mxu0 %v1640
    %1855 = vmatprep.subr.mxu0 %v1637
    %1856 = vmatpush2.msra.mxu0 %v1636
    %1857 = vmatprep.mubr.f32.mxu0 %v1774
    %1858 = vmatmul.mubr.f32.gmra.mxu0 %v1767
    %v1859 = vpop.f32.mrf.mxu0
    %v1860 = vadd.f32 %v1705, %v1859
    %v1861 = vpop.f32.mrf.mxu0
    %v1862 = vadd.f32 %v1709, %v1861
    %1863 = vmatprep.mubr.f32.mxu0 %v1788
    %1864 = vmatmul.mubr.f32.gmra.mxu0 %v1781
    %v1865 = vpop.f32.mrf.mxu0
    %v1866 = vadd.f32 %v1705, %v1865
    %v1867 = vpop.f32.mrf.mxu0
    %v1868 = vadd.f32 %v1709, %v1867
    %1869 = vdwg.mxu0
    %1870 = vmatprep.subr.mxu0 %v1635
    %1871 = vmatpush1.msra.mxu0 %v1634
    %1872 = vmatprep.subr.mxu0 %v1631
    %1873 = vmatpush1.msra.mxu0 %v1630
    %1874 = vmatprep.subr.mxu0 %v1627
    %1875 = vmatpush1.msra.mxu0 %v1626
    %1876 = vmatprep.subr.mxu0 %v1623
    %1877 = vmatpush1.msra.mxu0 %v1622
    %1878 = vmatprep.subr.mxu0 %v1619
    %1879 = vmatpush1.msra.mxu0 %v1618
    %1880 = vmatprep.subr.mxu0 %v1615
    %1881 = vmatpush1.msra.mxu0 %v1614
    %1882 = vmatprep.subr.mxu0 %v1611
    %1883 = vmatpush1.msra.mxu0 %v1610
    %1884 = vmatprep.subr.mxu0 %v1607
    %1885 = vmatpush1.msra.mxu0 %v1606
    %1886 = vmatprep.subr.mxu0 %v1603
    %1887 = vmatpush1.msra.mxu0 %v1602
    %1888 = vmatprep.subr.mxu0 %v1599
    %1889 = vmatpush1.msra.mxu0 %v1598
    %1890 = vmatprep.subr.mxu0 %v1595
    %1891 = vmatpush1.msra.mxu0 %v1594
    %1892 = vmatprep.subr.mxu0 %v1591
    %1893 = vmatpush1.msra.mxu0 %v1590
    %1894 = vmatprep.subr.mxu0 %v1587
    %1895 = vmatpush1.msra.mxu0 %v1586
    %1896 = vmatprep.subr.mxu0 %v1583
    %1897 = vmatpush1.msra.mxu0 %v1582
    %1898 = vmatprep.subr.mxu0 %v1579
    %1899 = vmatpush1.msra.mxu0 %v1578
    %1900 = vmatprep.subr.mxu0 %v1575
    %1901 = vmatpush1.msra.mxu0 %v1574
    %1902 = vmatprep.subr.mxu0 %v1699
    %1903 = vmatpush2.msra.mxu0 %v1698
    %1904 = vmatprep.subr.mxu0 %v1695
    %1905 = vmatpush2.msra.mxu0 %v1694
    %1906 = vmatprep.subr.mxu0 %v1691
    %1907 = vmatpush2.msra.mxu0 %v1690
    %1908 = vmatprep.subr.mxu0 %v1687
    %1909 = vmatpush2.msra.mxu0 %v1686
    %1910 = vmatprep.subr.mxu0 %v1683
    %1911 = vmatpush2.msra.mxu0 %v1682
    %1912 = vmatprep.subr.mxu0 %v1679
    %1913 = vmatpush2.msra.mxu0 %v1678
    %1914 = vmatprep.subr.mxu0 %v1675
    %1915 = vmatpush2.msra.mxu0 %v1674
    %1916 = vmatprep.subr.mxu0 %v1671
    %1917 = vmatpush2.msra.mxu0 %v1670
    %1918 = vmatprep.subr.mxu0 %v1667
    %1919 = vmatpush2.msra.mxu0 %v1666
    %1920 = vmatprep.subr.mxu0 %v1663
    %1921 = vmatpush2.msra.mxu0 %v1662
    %1922 = vmatprep.subr.mxu0 %v1659
    %1923 = vmatpush2.msra.mxu0 %v1658
    %1924 = vmatprep.subr.mxu0 %v1655
    %1925 = vmatpush2.msra.mxu0 %v1654
    %1926 = vmatprep.subr.mxu0 %v1651
    %1927 = vmatpush2.msra.mxu0 %v1650
    %1928 = vmatprep.subr.mxu0 %v1647
    %1929 = vmatpush2.msra.mxu0 %v1646
    %1930 = vmatprep.subr.mxu0 %v1643
    %1931 = vmatpush2.msra.mxu0 %v1642
    %1932 = vmatprep.subr.mxu0 %v1639
    %1933 = vmatpush2.msra.mxu0 %v1638
    %1934 = vmatprep.mubr.f32.mxu0 %v1774
    %1935 = vmatmul.mubr.f32.gmra.mxu0 %v1767
    %v1936 = vpop.f32.mrf.mxu0
    %v1937 = vadd.f32 %v1713, %v1936
    %v1938 = vpop.f32.mrf.mxu0
    %v1939 = vadd.f32 %v1717, %v1938
    %1940 = vmatprep.mubr.f32.mxu0 %v1788
    %1941 = vmatmul.mubr.f32.gmra.mxu0 %v1781
    %v1942 = vpop.f32.mrf.mxu0
    %v1943 = vadd.f32 %v1713, %v1942
    %v1944 = vpop.f32.mrf.mxu0
    %v1945 = vadd.f32 %v1717, %v1944
    %1946 = vdwg.mxu0
    %v1947 = vld [vmem:[#allocation5] sm:$0xff]
    %v1948 = vld [vmem:[#allocation5 + $0x8] sm:$0xff]
    %v1949 = vld [vmem:[#allocation5 + $0x10] sm:$0xff]
    %v1950 = vld [vmem:[#allocation5 + $0x18] sm:$0xff]
    %v1951 = vld [vmem:[#allocation5 + $0x20] sm:$0xff]
    %v1952 = vld [vmem:[#allocation5 + $0x28] sm:$0xff]
    %v1953 = vld [vmem:[#allocation5 + $0x30] sm:$0xff]
    %v1954 = vld [vmem:[#allocation5 + $0x38] sm:$0xff]
    %v1955 = vld [vmem:[#allocation5 + $0x40] sm:$0xff]
    %v1956 = vld [vmem:[#allocation5 + $0x48] sm:$0xff]
    %v1957 = vld [vmem:[#allocation5 + $0x50] sm:$0xff]
    %v1958 = vld [vmem:[#allocation5 + $0x58] sm:$0xff]
    %v1959 = vld [vmem:[#allocation5 + $0x60] sm:$0xff]
    %v1960 = vld [vmem:[#allocation5 + $0x68] sm:$0xff]
    %v1961 = vld [vmem:[#allocation5 + $0x70] sm:$0xff]
    %v1962 = vld [vmem:[#allocation5 + $0x78] sm:$0xff]
    %v1963 = vld [vmem:[#allocation5 + $0x80] sm:$0xff]
    %v1964 = vld [vmem:[#allocation5 + $0x88] sm:$0xff]
    %v1965 = vld [vmem:[#allocation5 + $0x90] sm:$0xff]
    %v1966 = vld [vmem:[#allocation5 + $0x98] sm:$0xff]
    %v1967 = vld [vmem:[#allocation5 + $0xa0] sm:$0xff]
    %v1968 = vld [vmem:[#allocation5 + $0xa8] sm:$0xff]
    %v1969 = vld [vmem:[#allocation5 + $0xb0] sm:$0xff]
    %v1970 = vld [vmem:[#allocation5 + $0xb8] sm:$0xff]
    %v1971 = vld [vmem:[#allocation5 + $0xc0] sm:$0xff]
    %v1972 = vld [vmem:[#allocation5 + $0xc8] sm:$0xff]
    %v1973 = vld [vmem:[#allocation5 + $0xd0] sm:$0xff]
    %v1974 = vld [vmem:[#allocation5 + $0xd8] sm:$0xff]
    %v1975 = vld [vmem:[#allocation5 + $0xe0] sm:$0xff]
    %v1976 = vld [vmem:[#allocation5 + $0xe8] sm:$0xff]
    %v1977 = vld [vmem:[#allocation5 + $0xf0] sm:$0xff]
    %v1978 = vld [vmem:[#allocation5 + $0xf8] sm:$0xff]
    %v1979 = vld [vmem:[#allocation5 + $0x100] sm:$0xff]
    %v1980 = vld [vmem:[#allocation5 + $0x108] sm:$0xff]
    %v1981 = vld [vmem:[#allocation5 + $0x110] sm:$0xff]
    %v1982 = vld [vmem:[#allocation5 + $0x118] sm:$0xff]
    %v1983 = vld [vmem:[#allocation5 + $0x120] sm:$0xff]
    %v1984 = vld [vmem:[#allocation5 + $0x128] sm:$0xff]
    %v1985 = vld [vmem:[#allocation5 + $0x130] sm:$0xff]
    %v1986 = vld [vmem:[#allocation5 + $0x138] sm:$0xff]
    %v1987 = vld [vmem:[#allocation5 + $0x140] sm:$0xff]
    %v1988 = vld [vmem:[#allocation5 + $0x148] sm:$0xff]
    %v1989 = vld [vmem:[#allocation5 + $0x150] sm:$0xff]
    %v1990 = vld [vmem:[#allocation5 + $0x158] sm:$0xff]
    %v1991 = vld [vmem:[#allocation5 + $0x160] sm:$0xff]
    %v1992 = vld [vmem:[#allocation5 + $0x168] sm:$0xff]
    %v1993 = vld [vmem:[#allocation5 + $0x170] sm:$0xff]
    %v1994 = vld [vmem:[#allocation5 + $0x178] sm:$0xff]
    %v1995 = vld [vmem:[#allocation5 + $0x180] sm:$0xff]
    %v1996 = vld [vmem:[#allocation5 + $0x188] sm:$0xff]
    %v1997 = vld [vmem:[#allocation5 + $0x190] sm:$0xff]
    %v1998 = vld [vmem:[#allocation5 + $0x198] sm:$0xff]
    %v1999 = vld [vmem:[#allocation5 + $0x1a0] sm:$0xff]
    %v2000 = vld [vmem:[#allocation5 + $0x1a8] sm:$0xff]
    %v2001 = vld [vmem:[#allocation5 + $0x1b0] sm:$0xff]
    %v2002 = vld [vmem:[#allocation5 + $0x1b8] sm:$0xff]
    %v2003 = vld [vmem:[#allocation5 + $0x1c0] sm:$0xff]
    %v2004 = vld [vmem:[#allocation5 + $0x1c8] sm:$0xff]
    %v2005 = vld [vmem:[#allocation5 + $0x1d0] sm:$0xff]
    %v2006 = vld [vmem:[#allocation5 + $0x1d8] sm:$0xff]
    %v2007 = vld [vmem:[#allocation5 + $0x1e0] sm:$0xff]
    %v2008 = vld [vmem:[#allocation5 + $0x1e8] sm:$0xff]
    %v2009 = vld [vmem:[#allocation5 + $0x1f0] sm:$0xff]
    %v2010 = vld [vmem:[#allocation5 + $0x1f8] sm:$0xff]
    %v2011 = vld [vmem:[#allocation5 + $0x200] sm:$0xff]
    %v2012 = vld [vmem:[#allocation5 + $0x208] sm:$0xff]
    %v2013 = vld [vmem:[#allocation5 + $0x210] sm:$0xff]
    %v2014 = vld [vmem:[#allocation5 + $0x218] sm:$0xff]
    %v2015 = vld [vmem:[#allocation5 + $0x220] sm:$0xff]
    %v2016 = vld [vmem:[#allocation5 + $0x228] sm:$0xff]
    %v2017 = vld [vmem:[#allocation5 + $0x230] sm:$0xff]
    %v2018 = vld [vmem:[#allocation5 + $0x238] sm:$0xff]
    %v2019 = vld [vmem:[#allocation5 + $0x240] sm:$0xff]
    %v2020 = vld [vmem:[#allocation5 + $0x248] sm:$0xff]
    %v2021 = vld [vmem:[#allocation5 + $0x250] sm:$0xff]
    %v2022 = vld [vmem:[#allocation5 + $0x258] sm:$0xff]
    %v2023 = vld [vmem:[#allocation5 + $0x260] sm:$0xff]
    %v2024 = vld [vmem:[#allocation5 + $0x268] sm:$0xff]
    %v2025 = vld [vmem:[#allocation5 + $0x270] sm:$0xff]
    %v2026 = vld [vmem:[#allocation5 + $0x278] sm:$0xff]
    %v2027 = vld [vmem:[#allocation5 + $0x280] sm:$0xff]
    %v2028 = vld [vmem:[#allocation5 + $0x288] sm:$0xff]
    %v2029 = vld [vmem:[#allocation5 + $0x290] sm:$0xff]
    %v2030 = vld [vmem:[#allocation5 + $0x298] sm:$0xff]
    %v2031 = vld [vmem:[#allocation5 + $0x2a0] sm:$0xff]
    %v2032 = vld [vmem:[#allocation5 + $0x2a8] sm:$0xff]
    %v2033 = vld [vmem:[#allocation5 + $0x2b0] sm:$0xff]
    %v2034 = vld [vmem:[#allocation5 + $0x2b8] sm:$0xff]
    %v2035 = vld [vmem:[#allocation5 + $0x2c0] sm:$0xff]
    %v2036 = vld [vmem:[#allocation5 + $0x2c8] sm:$0xff]
    %v2037 = vld [vmem:[#allocation5 + $0x2d0] sm:$0xff]
    %v2038 = vld [vmem:[#allocation5 + $0x2d8] sm:$0xff]
    %v2039 = vld [vmem:[#allocation5 + $0x2e0] sm:$0xff]
    %v2040 = vld [vmem:[#allocation5 + $0x2e8] sm:$0xff]
    %v2041 = vld [vmem:[#allocation5 + $0x2f0] sm:$0xff]
    %v2042 = vld [vmem:[#allocation5 + $0x2f8] sm:$0xff]
    %v2043 = vld [vmem:[#allocation5 + $0x300] sm:$0xff]
    %v2044 = vld [vmem:[#allocation5 + $0x308] sm:$0xff]
    %v2045 = vld [vmem:[#allocation5 + $0x310] sm:$0xff]
    %v2046 = vld [vmem:[#allocation5 + $0x318] sm:$0xff]
    %v2047 = vld [vmem:[#allocation5 + $0x320] sm:$0xff]
    %v2048 = vld [vmem:[#allocation5 + $0x328] sm:$0xff]
    %v2049 = vld [vmem:[#allocation5 + $0x330] sm:$0xff]
    %v2050 = vld [vmem:[#allocation5 + $0x338] sm:$0xff]
    %v2051 = vld [vmem:[#allocation5 + $0x340] sm:$0xff]
    %v2052 = vld [vmem:[#allocation5 + $0x348] sm:$0xff]
    %v2053 = vld [vmem:[#allocation5 + $0x350] sm:$0xff]
    %v2054 = vld [vmem:[#allocation5 + $0x358] sm:$0xff]
    %v2055 = vld [vmem:[#allocation5 + $0x360] sm:$0xff]
    %v2056 = vld [vmem:[#allocation5 + $0x368] sm:$0xff]
    %v2057 = vld [vmem:[#allocation5 + $0x370] sm:$0xff]
    %v2058 = vld [vmem:[#allocation5 + $0x378] sm:$0xff]
    %v2059 = vld [vmem:[#allocation5 + $0x380] sm:$0xff]
    %v2060 = vld [vmem:[#allocation5 + $0x388] sm:$0xff]
    %v2061 = vld [vmem:[#allocation5 + $0x390] sm:$0xff]
    %v2062 = vld [vmem:[#allocation5 + $0x398] sm:$0xff]
    %v2063 = vld [vmem:[#allocation5 + $0x3a0] sm:$0xff]
    %v2064 = vld [vmem:[#allocation5 + $0x3a8] sm:$0xff]
    %v2065 = vld [vmem:[#allocation5 + $0x3b0] sm:$0xff]
    %v2066 = vld [vmem:[#allocation5 + $0x3b8] sm:$0xff]
    %v2067 = vld [vmem:[#allocation5 + $0x3c0] sm:$0xff]
    %v2068 = vld [vmem:[#allocation5 + $0x3c8] sm:$0xff]
    %v2069 = vld [vmem:[#allocation5 + $0x3d0] sm:$0xff]
    %v2070 = vld [vmem:[#allocation5 + $0x3d8] sm:$0xff]
    %v2071 = vld [vmem:[#allocation5 + $0x3e0] sm:$0xff]
    %v2072 = vld [vmem:[#allocation5 + $0x3e8] sm:$0xff]
    %v2073 = vld [vmem:[#allocation5 + $0x3f0] sm:$0xff]
    %v2074 = vld [vmem:[#allocation5 + $0x3f8] sm:$0xff]
    %2075 = vmatprep.subr.mxu0 %v2008
    %2076 = vmatpush1.msra.mxu0 %v2007
    %2077 = vmatprep.subr.mxu0 %v2004
    %2078 = vmatpush1.msra.mxu0 %v2003
    %2079 = vmatprep.subr.mxu0 %v2000
    %2080 = vmatpush1.msra.mxu0 %v1999
    %2081 = vmatprep.subr.mxu0 %v1996
    %2082 = vmatpush1.msra.mxu0 %v1995
    %2083 = vmatprep.subr.mxu0 %v1992
    %2084 = vmatpush1.msra.mxu0 %v1991
    %2085 = vmatprep.subr.mxu0 %v1988
    %2086 = vmatpush1.msra.mxu0 %v1987
    %2087 = vmatprep.subr.mxu0 %v1984
    %2088 = vmatpush1.msra.mxu0 %v1983
    %2089 = vmatprep.subr.mxu0 %v1980
    %2090 = vmatpush1.msra.mxu0 %v1979
    %2091 = vmatprep.subr.mxu0 %v1976
    %2092 = vmatpush1.msra.mxu0 %v1975
    %2093 = vmatprep.subr.mxu0 %v1972
    %2094 = vmatpush1.msra.mxu0 %v1971
    %2095 = vmatprep.subr.mxu0 %v1968
    %2096 = vmatpush1.msra.mxu0 %v1967
    %2097 = vmatprep.subr.mxu0 %v1964
    %2098 = vmatpush1.msra.mxu0 %v1963
    %2099 = vmatprep.subr.mxu0 %v1960
    %2100 = vmatpush1.msra.mxu0 %v1959
    %2101 = vmatprep.subr.mxu0 %v1956
    %2102 = vmatpush1.msra.mxu0 %v1955
    %2103 = vmatprep.subr.mxu0 %v1952
    %2104 = vmatpush1.msra.mxu0 %v1951
    %2105 = vmatprep.subr.mxu0 %v1948
    %2106 = vmatpush1.msra.mxu0 %v1947
    %2107 = vmatprep.subr.mxu0 %v2072
    %2108 = vmatpush2.msra.mxu0 %v2071
    %2109 = vmatprep.subr.mxu0 %v2068
    %2110 = vmatpush2.msra.mxu0 %v2067
    %2111 = vmatprep.subr.mxu0 %v2064
    %2112 = vmatpush2.msra.mxu0 %v2063
    %2113 = vmatprep.subr.mxu0 %v2060
    %2114 = vmatpush2.msra.mxu0 %v2059
    %2115 = vmatprep.subr.mxu0 %v2056
    %2116 = vmatpush2.msra.mxu0 %v2055
    %2117 = vmatprep.subr.mxu0 %v2052
    %2118 = vmatpush2.msra.mxu0 %v2051
    %2119 = vmatprep.subr.mxu0 %v2048
    %2120 = vmatpush2.msra.mxu0 %v2047
    %2121 = vmatprep.subr.mxu0 %v2044
    %2122 = vmatpush2.msra.mxu0 %v2043
    %2123 = vmatprep.subr.mxu0 %v2040
    %2124 = vmatpush2.msra.mxu0 %v2039
    %2125 = vmatprep.subr.mxu0 %v2036
    %2126 = vmatpush2.msra.mxu0 %v2035
    %2127 = vmatprep.subr.mxu0 %v2032
    %2128 = vmatpush2.msra.mxu0 %v2031
    %2129 = vmatprep.subr.mxu0 %v2028
    %2130 = vmatpush2.msra.mxu0 %v2027
    %2131 = vmatprep.subr.mxu0 %v2024
    %2132 = vmatpush2.msra.mxu0 %v2023
    %2133 = vmatprep.subr.mxu0 %v2020
    %2134 = vmatpush2.msra.mxu0 %v2019
    %2135 = vmatprep.subr.mxu0 %v2016
    %2136 = vmatpush2.msra.mxu0 %v2015
    %2137 = vmatprep.subr.mxu0 %v2012
    %2138 = vmatpush2.msra.mxu0 %v2011
    %2139 = vmatprep.mubr.f32.mxu0 %v904
    %2140 = vmatmul.mubr.f32.gmra.mxu0 %v902
    %v2141 = vpop.f32.mrf.mxu0
    %v2142 = vadd.f32 0.0, %v2141
    %v2143 = vpop.f32.mrf.mxu0
    %v2144 = vadd.f32 0.0, %v2143
    %2145 = vmatprep.mubr.f32.mxu0 %v910
    %2146 = vmatmul.mubr.f32.gmra.mxu0 %v908
    %v2147 = vpop.f32.mrf.mxu0
    %v2148 = vadd.f32 0.0, %v2147
    %v2149 = vpop.f32.mrf.mxu0
    %v2150 = vadd.f32 0.0, %v2149
    %2151 = vmatprep.mubr.f32.mxu0 %v916
    %2152 = vmatmul.mubr.f32.gmra.mxu0 %v914
    %v2153 = vpop.f32.mrf.mxu0
    %v2154 = vadd.f32 0.0, %v2153
    %v2155 = vpop.f32.mrf.mxu0
    %v2156 = vadd.f32 0.0, %v2155
    %2157 = vmatprep.mubr.f32.mxu0 %v922
    %2158 = vmatmul.mubr.f32.gmra.mxu0 %v920
    %v2159 = vpop.f32.mrf.mxu0
    %v2160 = vadd.f32 0.0, %v2159
    %v2161 = vpop.f32.mrf.mxu0
    %v2162 = vadd.f32 0.0, %v2161
    %2163 = vmatprep.mubr.f32.mxu0 %v928
    %2164 = vmatmul.mubr.f32.gmra.mxu0 %v926
    %v2165 = vpop.f32.mrf.mxu0
    %v2166 = vadd.f32 0.0, %v2165
    %v2167 = vpop.f32.mrf.mxu0
    %v2168 = vadd.f32 0.0, %v2167
    %2169 = vmatprep.mubr.f32.mxu0 %v934
    %2170 = vmatmul.mubr.f32.gmra.mxu0 %v932
    %v2171 = vpop.f32.mrf.mxu0
    %v2172 = vadd.f32 0.0, %v2171
    %v2173 = vpop.f32.mrf.mxu0
    %v2174 = vadd.f32 0.0, %v2173
    %2175 = vmatprep.mubr.f32.mxu0 %v940
    %2176 = vmatmul.mubr.f32.gmra.mxu0 %v938
    %v2177 = vpop.f32.mrf.mxu0
    %v2178 = vadd.f32 0.0, %v2177
    %v2179 = vpop.f32.mrf.mxu0
    %v2180 = vadd.f32 0.0, %v2179
    %2181 = vmatprep.mubr.f32.mxu0 %v946
    %2182 = vmatmul.mubr.f32.gmra.mxu0 %v944
    %v2183 = vpop.f32.mrf.mxu0
    %v2184 = vadd.f32 0.0, %v2183
    %v2185 = vpop.f32.mrf.mxu0
    %v2186 = vadd.f32 0.0, %v2185
    %2187 = vmatprep.mubr.f32.mxu0 %v952
    %2188 = vmatmul.mubr.f32.gmra.mxu0 %v950
    %v2189 = vpop.f32.mrf.mxu0
    %v2190 = vadd.f32 0.0, %v2189
    %v2191 = vpop.f32.mrf.mxu0
    %v2192 = vadd.f32 0.0, %v2191
    %2193 = vmatprep.mubr.f32.mxu0 %v958
    %2194 = vmatmul.mubr.f32.gmra.mxu0 %v956
    %v2195 = vpop.f32.mrf.mxu0
    %v2196 = vadd.f32 0.0, %v2195
    %v2197 = vpop.f32.mrf.mxu0
    %v2198 = vadd.f32 0.0, %v2197
    %2199 = vmatprep.mubr.f32.mxu0 %v964
    %2200 = vmatmul.mubr.f32.gmra.mxu0 %v962
    %v2201 = vpop.f32.mrf.mxu0
    %v2202 = vadd.f32 0.0, %v2201
    %v2203 = vpop.f32.mrf.mxu0
    %v2204 = vadd.f32 0.0, %v2203
    %2205 = vmatprep.mubr.f32.mxu0 %v970
    %2206 = vmatmul.mubr.f32.gmra.mxu0 %v968
    %v2207 = vpop.f32.mrf.mxu0
    %v2208 = vadd.f32 0.0, %v2207
    %v2209 = vpop.f32.mrf.mxu0
    %v2210 = vadd.f32 0.0, %v2209
    %2211 = vmatprep.mubr.f32.mxu0 %v976
    %2212 = vmatmul.mubr.f32.gmra.mxu0 %v974
    %v2213 = vpop.f32.mrf.mxu0
    %v2214 = vadd.f32 0.0, %v2213
    %v2215 = vpop.f32.mrf.mxu0
    %v2216 = vadd.f32 0.0, %v2215
    %2217 = vmatprep.mubr.f32.mxu0 %v982
    %2218 = vmatmul.mubr.f32.gmra.mxu0 %v980
    %v2219 = vpop.f32.mrf.mxu0
    %v2220 = vadd.f32 0.0, %v2219
    %v2221 = vpop.f32.mrf.mxu0
    %v2222 = vadd.f32 0.0, %v2221
    %2223 = vmatprep.mubr.f32.mxu0 %v988
    %2224 = vmatmul.mubr.f32.gmra.mxu0 %v986
    %v2225 = vpop.f32.mrf.mxu0
    %v2226 = vadd.f32 0.0, %v2225
    %v2227 = vpop.f32.mrf.mxu0
    %v2228 = vadd.f32 0.0, %v2227
    %2229 = vmatprep.mubr.f32.mxu0 %v994
    %2230 = vmatmul.mubr.f32.gmra.mxu0 %v992
    %v2231 = vpop.f32.mrf.mxu0
    %v2232 = vadd.f32 0.0, %v2231
    %v2233 = vpop.f32.mrf.mxu0
    %v2234 = vadd.f32 0.0, %v2233
    %2235 = vmatprep.mubr.f32.mxu0 %v1000
    %2236 = vmatmul.mubr.f32.gmra.mxu0 %v998
    %v2237 = vpop.f32.mrf.mxu0
    %v2238 = vadd.f32 0.0, %v2237
    %v2239 = vpop.f32.mrf.mxu0
    %v2240 = vadd.f32 0.0, %v2239
    %2241 = vmatprep.mubr.f32.mxu0 %v1006
    %2242 = vmatmul.mubr.f32.gmra.mxu0 %v1004
    %v2243 = vpop.f32.mrf.mxu0
    %v2244 = vadd.f32 0.0, %v2243
    %v2245 = vpop.f32.mrf.mxu0
    %v2246 = vadd.f32 0.0, %v2245
    %2247 = vmatprep.mubr.f32.mxu0 %v1012
    %2248 = vmatmul.mubr.f32.gmra.mxu0 %v1010
    %v2249 = vpop.f32.mrf.mxu0
    %v2250 = vadd.f32 0.0, %v2249
    %v2251 = vpop.f32.mrf.mxu0
    %v2252 = vadd.f32 0.0, %v2251
    %2253 = vmatprep.mubr.f32.mxu0 %v1018
    %2254 = vmatmul.mubr.f32.gmra.mxu0 %v1016
    %v2255 = vpop.f32.mrf.mxu0
    %v2256 = vadd.f32 0.0, %v2255
    %v2257 = vpop.f32.mrf.mxu0
    %v2258 = vadd.f32 0.0, %v2257
    %2259 = vmatprep.mubr.f32.mxu0 %v1024
    %2260 = vmatmul.mubr.f32.gmra.mxu0 %v1022
    %v2261 = vpop.f32.mrf.mxu0
    %v2262 = vadd.f32 0.0, %v2261
    %v2263 = vpop.f32.mrf.mxu0
    %v2264 = vadd.f32 0.0, %v2263
    %2265 = vmatprep.mubr.f32.mxu0 %v1030
    %2266 = vmatmul.mubr.f32.gmra.mxu0 %v1028
    %v2267 = vpop.f32.mrf.mxu0
    %v2268 = vadd.f32 0.0, %v2267
    %v2269 = vpop.f32.mrf.mxu0
    %v2270 = vadd.f32 0.0, %v2269
    %2271 = vmatprep.mubr.f32.mxu0 %v1036
    %2272 = vmatmul.mubr.f32.gmra.mxu0 %v1034
    %v2273 = vpop.f32.mrf.mxu0
    %v2274 = vadd.f32 0.0, %v2273
    %v2275 = vpop.f32.mrf.mxu0
    %v2276 = vadd.f32 0.0, %v2275
    %2277 = vmatprep.mubr.f32.mxu0 %v1042
    %2278 = vmatmul.mubr.f32.gmra.mxu0 %v1040
    %v2279 = vpop.f32.mrf.mxu0
    %v2280 = vadd.f32 0.0, %v2279
    %v2281 = vpop.f32.mrf.mxu0
    %v2282 = vadd.f32 0.0, %v2281
    %2283 = vmatprep.mubr.f32.mxu0 %v1048
    %2284 = vmatmul.mubr.f32.gmra.mxu0 %v1046
    %v2285 = vpop.f32.mrf.mxu0
    %v2286 = vadd.f32 0.0, %v2285
    %v2287 = vpop.f32.mrf.mxu0
    %v2288 = vadd.f32 0.0, %v2287
    %2289 = vmatprep.mubr.f32.mxu0 %v1054
    %2290 = vmatmul.mubr.f32.gmra.mxu0 %v1052
    %v2291 = vpop.f32.mrf.mxu0
    %v2292 = vadd.f32 0.0, %v2291
    %v2293 = vpop.f32.mrf.mxu0
    %v2294 = vadd.f32 0.0, %v2293
    %2295 = vmatprep.mubr.f32.mxu0 %v1060
    %2296 = vmatmul.mubr.f32.gmra.mxu0 %v1058
    %v2297 = vpop.f32.mrf.mxu0
    %v2298 = vadd.f32 0.0, %v2297
    %v2299 = vpop.f32.mrf.mxu0
    %v2300 = vadd.f32 0.0, %v2299
    %2301 = vmatprep.mubr.f32.mxu0 %v1066
    %2302 = vmatmul.mubr.f32.gmra.mxu0 %v1064
    %v2303 = vpop.f32.mrf.mxu0
    %v2304 = vadd.f32 0.0, %v2303
    %v2305 = vpop.f32.mrf.mxu0
    %v2306 = vadd.f32 0.0, %v2305
    %2307 = vmatprep.mubr.f32.mxu0 %v1072
    %2308 = vmatmul.mubr.f32.gmra.mxu0 %v1070
    %v2309 = vpop.f32.mrf.mxu0
    %v2310 = vadd.f32 0.0, %v2309
    %v2311 = vpop.f32.mrf.mxu0
    %v2312 = vadd.f32 0.0, %v2311
    %2313 = vmatprep.mubr.f32.mxu0 %v1078
    %2314 = vmatmul.mubr.f32.gmra.mxu0 %v1076
    %v2315 = vpop.f32.mrf.mxu0
    %v2316 = vadd.f32 0.0, %v2315
    %v2317 = vpop.f32.mrf.mxu0
    %v2318 = vadd.f32 0.0, %v2317
    %2319 = vmatprep.mubr.f32.mxu0 %v1084
    %2320 = vmatmul.mubr.f32.gmra.mxu0 %v1082
    %v2321 = vpop.f32.mrf.mxu0
    %v2322 = vadd.f32 0.0, %v2321
    %v2323 = vpop.f32.mrf.mxu0
    %v2324 = vadd.f32 0.0, %v2323
    %2325 = vmatprep.mubr.f32.mxu0 %v1090
    %2326 = vmatmul.mubr.f32.gmra.mxu0 %v1088
    %v2327 = vpop.f32.mrf.mxu0
    %v2328 = vadd.f32 0.0, %v2327
    %v2329 = vpop.f32.mrf.mxu0
    %v2330 = vadd.f32 0.0, %v2329
    %2331 = vmatprep.mubr.f32.mxu0 %v1096
    %2332 = vmatmul.mubr.f32.gmra.mxu0 %v1094
    %v2333 = vpop.f32.mrf.mxu0
    %v2334 = vadd.f32 0.0, %v2333
    %v2335 = vpop.f32.mrf.mxu0
    %v2336 = vadd.f32 0.0, %v2335
    %2337 = vmatprep.mubr.f32.mxu0 %v1102
    %2338 = vmatmul.mubr.f32.gmra.mxu0 %v1100
    %v2339 = vpop.f32.mrf.mxu0
    %v2340 = vadd.f32 0.0, %v2339
    %v2341 = vpop.f32.mrf.mxu0
    %v2342 = vadd.f32 0.0, %v2341
    %2343 = vmatprep.mubr.f32.mxu0 %v1108
    %2344 = vmatmul.mubr.f32.gmra.mxu0 %v1106
    %v2345 = vpop.f32.mrf.mxu0
    %v2346 = vadd.f32 0.0, %v2345
    %v2347 = vpop.f32.mrf.mxu0
    %v2348 = vadd.f32 0.0, %v2347
    %2349 = vmatprep.mubr.f32.mxu0 %v1114
    %2350 = vmatmul.mubr.f32.gmra.mxu0 %v1112
    %v2351 = vpop.f32.mrf.mxu0
    %v2352 = vadd.f32 0.0, %v2351
    %v2353 = vpop.f32.mrf.mxu0
    %v2354 = vadd.f32 0.0, %v2353
    %2355 = vmatprep.mubr.f32.mxu0 %v1120
    %2356 = vmatmul.mubr.f32.gmra.mxu0 %v1118
    %v2357 = vpop.f32.mrf.mxu0
    %v2358 = vadd.f32 0.0, %v2357
    %v2359 = vpop.f32.mrf.mxu0
    %v2360 = vadd.f32 0.0, %v2359
    %2361 = vmatprep.mubr.f32.mxu0 %v1126
    %2362 = vmatmul.mubr.f32.gmra.mxu0 %v1124
    %v2363 = vpop.f32.mrf.mxu0
    %v2364 = vadd.f32 0.0, %v2363
    %v2365 = vpop.f32.mrf.mxu0
    %v2366 = vadd.f32 0.0, %v2365
    %2367 = vmatprep.mubr.f32.mxu0 %v1132
    %2368 = vmatmul.mubr.f32.gmra.mxu0 %v1130
    %v2369 = vpop.f32.mrf.mxu0
    %v2370 = vadd.f32 0.0, %v2369
    %v2371 = vpop.f32.mrf.mxu0
    %v2372 = vadd.f32 0.0, %v2371
    %2373 = vmatprep.mubr.f32.mxu0 %v1138
    %2374 = vmatmul.mubr.f32.gmra.mxu0 %v1136
    %v2375 = vpop.f32.mrf.mxu0
    %v2376 = vadd.f32 0.0, %v2375
    %v2377 = vpop.f32.mrf.mxu0
    %v2378 = vadd.f32 0.0, %v2377
    %2379 = vmatprep.mubr.f32.mxu0 %v1144
    %2380 = vmatmul.mubr.f32.gmra.mxu0 %v1142
    %v2381 = vpop.f32.mrf.mxu0
    %v2382 = vadd.f32 0.0, %v2381
    %v2383 = vpop.f32.mrf.mxu0
    %v2384 = vadd.f32 0.0, %v2383
    %2385 = vmatprep.mubr.f32.mxu0 %v1150
    %2386 = vmatmul.mubr.f32.gmra.mxu0 %v1148
    %v2387 = vpop.f32.mrf.mxu0
    %v2388 = vadd.f32 0.0, %v2387
    %v2389 = vpop.f32.mrf.mxu0
    %v2390 = vadd.f32 0.0, %v2389
    %2391 = vmatprep.mubr.f32.mxu0 %v1156
    %2392 = vmatmul.mubr.f32.gmra.mxu0 %v1154
    %v2393 = vpop.f32.mrf.mxu0
    %v2394 = vadd.f32 0.0, %v2393
    %v2395 = vpop.f32.mrf.mxu0
    %v2396 = vadd.f32 0.0, %v2395
    %2397 = vmatprep.mubr.f32.mxu0 %v1162
    %2398 = vmatmul.mubr.f32.gmra.mxu0 %v1160
    %v2399 = vpop.f32.mrf.mxu0
    %v2400 = vadd.f32 0.0, %v2399
    %v2401 = vpop.f32.mrf.mxu0
    %v2402 = vadd.f32 0.0, %v2401
    %2403 = vmatprep.mubr.f32.mxu0 %v1168
    %2404 = vmatmul.mubr.f32.gmra.mxu0 %v1166
    %v2405 = vpop.f32.mrf.mxu0
    %v2406 = vadd.f32 0.0, %v2405
    %v2407 = vpop.f32.mrf.mxu0
    %v2408 = vadd.f32 0.0, %v2407
    %2409 = vmatprep.mubr.f32.mxu0 %v1174
    %2410 = vmatmul.mubr.f32.gmra.mxu0 %v1172
    %v2411 = vpop.f32.mrf.mxu0
    %v2412 = vadd.f32 0.0, %v2411
    %v2413 = vpop.f32.mrf.mxu0
    %v2414 = vadd.f32 0.0, %v2413
    %2415 = vmatprep.mubr.f32.mxu0 %v1180
    %2416 = vmatmul.mubr.f32.gmra.mxu0 %v1178
    %v2417 = vpop.f32.mrf.mxu0
    %v2418 = vadd.f32 0.0, %v2417
    %v2419 = vpop.f32.mrf.mxu0
    %v2420 = vadd.f32 0.0, %v2419
    %2421 = vmatprep.mubr.f32.mxu0 %v1186
    %2422 = vmatmul.mubr.f32.gmra.mxu0 %v1184
    %v2423 = vpop.f32.mrf.mxu0
    %v2424 = vadd.f32 0.0, %v2423
    %v2425 = vpop.f32.mrf.mxu0
    %v2426 = vadd.f32 0.0, %v2425
    %2427 = vmatprep.mubr.f32.mxu0 %v1192
    %2428 = vmatmul.mubr.f32.gmra.mxu0 %v1190
    %v2429 = vpop.f32.mrf.mxu0
    %v2430 = vadd.f32 0.0, %v2429
    %v2431 = vpop.f32.mrf.mxu0
    %v2432 = vadd.f32 0.0, %v2431
    %2433 = vmatprep.mubr.f32.mxu0 %v1198
    %2434 = vmatmul.mubr.f32.gmra.mxu0 %v1196
    %v2435 = vpop.f32.mrf.mxu0
    %v2436 = vadd.f32 0.0, %v2435
    %v2437 = vpop.f32.mrf.mxu0
    %v2438 = vadd.f32 0.0, %v2437
    %2439 = vmatprep.mubr.f32.mxu0 %v1204
    %2440 = vmatmul.mubr.f32.gmra.mxu0 %v1202
    %v2441 = vpop.f32.mrf.mxu0
    %v2442 = vadd.f32 0.0, %v2441
    %v2443 = vpop.f32.mrf.mxu0
    %v2444 = vadd.f32 0.0, %v2443
    %2445 = vmatprep.mubr.f32.mxu0 %v1210
    %2446 = vmatmul.mubr.f32.gmra.mxu0 %v1208
    %v2447 = vpop.f32.mrf.mxu0
    %v2448 = vadd.f32 0.0, %v2447
    %v2449 = vpop.f32.mrf.mxu0
    %v2450 = vadd.f32 0.0, %v2449
    %2451 = vmatprep.mubr.f32.mxu0 %v1216
    %2452 = vmatmul.mubr.f32.gmra.mxu0 %v1214
    %v2453 = vpop.f32.mrf.mxu0
    %v2454 = vadd.f32 0.0, %v2453
    %v2455 = vpop.f32.mrf.mxu0
    %v2456 = vadd.f32 0.0, %v2455
    %2457 = vmatprep.mubr.f32.mxu0 %v1222
    %2458 = vmatmul.mubr.f32.gmra.mxu0 %v1220
    %v2459 = vpop.f32.mrf.mxu0
    %v2460 = vadd.f32 0.0, %v2459
    %v2461 = vpop.f32.mrf.mxu0
    %v2462 = vadd.f32 0.0, %v2461
    %2463 = vmatprep.mubr.f32.mxu0 %v1228
    %2464 = vmatmul.mubr.f32.gmra.mxu0 %v1226
    %v2465 = vpop.f32.mrf.mxu0
    %v2466 = vadd.f32 0.0, %v2465
    %v2467 = vpop.f32.mrf.mxu0
    %v2468 = vadd.f32 0.0, %v2467
    %2469 = vmatprep.mubr.f32.mxu0 %v1234
    %2470 = vmatmul.mubr.f32.gmra.mxu0 %v1232
    %v2471 = vpop.f32.mrf.mxu0
    %v2472 = vadd.f32 0.0, %v2471
    %v2473 = vpop.f32.mrf.mxu0
    %v2474 = vadd.f32 0.0, %v2473
    %2475 = vmatprep.mubr.f32.mxu0 %v1240
    %2476 = vmatmul.mubr.f32.gmra.mxu0 %v1238
    %v2477 = vpop.f32.mrf.mxu0
    %v2478 = vadd.f32 0.0, %v2477
    %v2479 = vpop.f32.mrf.mxu0
    %v2480 = vadd.f32 0.0, %v2479
    %2481 = vmatprep.mubr.f32.mxu0 %v1246
    %2482 = vmatmul.mubr.f32.gmra.mxu0 %v1244
    %v2483 = vpop.f32.mrf.mxu0
    %v2484 = vadd.f32 0.0, %v2483
    %v2485 = vpop.f32.mrf.mxu0
    %v2486 = vadd.f32 0.0, %v2485
    %2487 = vmatprep.mubr.f32.mxu0 %v1252
    %2488 = vmatmul.mubr.f32.gmra.mxu0 %v1250
    %v2489 = vpop.f32.mrf.mxu0
    %v2490 = vadd.f32 0.0, %v2489
    %v2491 = vpop.f32.mrf.mxu0
    %v2492 = vadd.f32 0.0, %v2491
    %2493 = vmatprep.mubr.f32.mxu0 %v1258
    %2494 = vmatmul.mubr.f32.gmra.mxu0 %v1256
    %v2495 = vpop.f32.mrf.mxu0
    %v2496 = vadd.f32 0.0, %v2495
    %v2497 = vpop.f32.mrf.mxu0
    %v2498 = vadd.f32 0.0, %v2497
    %2499 = vmatprep.mubr.f32.mxu0 %v1264
    %2500 = vmatmul.mubr.f32.gmra.mxu0 %v1262
    %v2501 = vpop.f32.mrf.mxu0
    %v2502 = vadd.f32 0.0, %v2501
    %v2503 = vpop.f32.mrf.mxu0
    %v2504 = vadd.f32 0.0, %v2503
    %2505 = vmatprep.mubr.f32.mxu0 %v1270
    %2506 = vmatmul.mubr.f32.gmra.mxu0 %v1268
    %v2507 = vpop.f32.mrf.mxu0
    %v2508 = vadd.f32 0.0, %v2507
    %v2509 = vpop.f32.mrf.mxu0
    %v2510 = vadd.f32 0.0, %v2509
    %2511 = vmatprep.mubr.f32.mxu0 %v1276
    %2512 = vmatmul.mubr.f32.gmra.mxu0 %v1274
    %v2513 = vpop.f32.mrf.mxu0
    %v2514 = vadd.f32 0.0, %v2513
    %v2515 = vpop.f32.mrf.mxu0
    %v2516 = vadd.f32 0.0, %v2515
    %2517 = vmatprep.mubr.f32.mxu0 %v1282
    %2518 = vmatmul.mubr.f32.gmra.mxu0 %v1280
    %v2519 = vpop.f32.mrf.mxu0
    %v2520 = vadd.f32 0.0, %v2519
    %v2521 = vpop.f32.mrf.mxu0
    %v2522 = vadd.f32 0.0, %v2521
    %2523 = vdwg.mxu0
    %2524 = vmatprep.subr.mxu0 %v2010
    %2525 = vmatpush1.msra.mxu0 %v2009
    %2526 = vmatprep.subr.mxu0 %v2006
    %2527 = vmatpush1.msra.mxu0 %v2005
    %2528 = vmatprep.subr.mxu0 %v2002
    %2529 = vmatpush1.msra.mxu0 %v2001
    %2530 = vmatprep.subr.mxu0 %v1998
    %2531 = vmatpush1.msra.mxu0 %v1997
    %2532 = vmatprep.subr.mxu0 %v1994
    %2533 = vmatpush1.msra.mxu0 %v1993
    %2534 = vmatprep.subr.mxu0 %v1990
    %2535 = vmatpush1.msra.mxu0 %v1989
    %2536 = vmatprep.subr.mxu0 %v1986
    %2537 = vmatpush1.msra.mxu0 %v1985
    %2538 = vmatprep.subr.mxu0 %v1982
    %2539 = vmatpush1.msra.mxu0 %v1981
    %2540 = vmatprep.subr.mxu0 %v1978
    %2541 = vmatpush1.msra.mxu0 %v1977
    %2542 = vmatprep.subr.mxu0 %v1974
    %2543 = vmatpush1.msra.mxu0 %v1973
    %2544 = vmatprep.subr.mxu0 %v1970
    %2545 = vmatpush1.msra.mxu0 %v1969
    %2546 = vmatprep.subr.mxu0 %v1966
    %2547 = vmatpush1.msra.mxu0 %v1965
    %2548 = vmatprep.subr.mxu0 %v1962
    %2549 = vmatpush1.msra.mxu0 %v1961
    %2550 = vmatprep.subr.mxu0 %v1958
    %2551 = vmatpush1.msra.mxu0 %v1957
    %2552 = vmatprep.subr.mxu0 %v1954
    %2553 = vmatpush1.msra.mxu0 %v1953
    %2554 = vmatprep.subr.mxu0 %v1950
    %2555 = vmatpush1.msra.mxu0 %v1949
    %2556 = vmatprep.subr.mxu0 %v2074
    %2557 = vmatpush2.msra.mxu0 %v2073
    %2558 = vmatprep.subr.mxu0 %v2070
    %2559 = vmatpush2.msra.mxu0 %v2069
    %2560 = vmatprep.subr.mxu0 %v2066
    %2561 = vmatpush2.msra.mxu0 %v2065
    %2562 = vmatprep.subr.mxu0 %v2062
    %2563 = vmatpush2.msra.mxu0 %v2061
    %2564 = vmatprep.subr.mxu0 %v2058
    %2565 = vmatpush2.msra.mxu0 %v2057
    %2566 = vmatprep.subr.mxu0 %v2054
    %2567 = vmatpush2.msra.mxu0 %v2053
    %2568 = vmatprep.subr.mxu0 %v2050
    %2569 = vmatpush2.msra.mxu0 %v2049
    %2570 = vmatprep.subr.mxu0 %v2046
    %2571 = vmatpush2.msra.mxu0 %v2045
    %2572 = vmatprep.subr.mxu0 %v2042
    %2573 = vmatpush2.msra.mxu0 %v2041
    %2574 = vmatprep.subr.mxu0 %v2038
    %2575 = vmatpush2.msra.mxu0 %v2037
    %2576 = vmatprep.subr.mxu0 %v2034
    %2577 = vmatpush2.msra.mxu0 %v2033
    %2578 = vmatprep.subr.mxu0 %v2030
    %2579 = vmatpush2.msra.mxu0 %v2029
    %2580 = vmatprep.subr.mxu0 %v2026
    %2581 = vmatpush2.msra.mxu0 %v2025
    %2582 = vmatprep.subr.mxu0 %v2022
    %2583 = vmatpush2.msra.mxu0 %v2021
    %2584 = vmatprep.subr.mxu0 %v2018
    %2585 = vmatpush2.msra.mxu0 %v2017
    %2586 = vmatprep.subr.mxu0 %v2014
    %2587 = vmatpush2.msra.mxu0 %v2013
    %2588 = vmatprep.mubr.f32.mxu0 %v904
    %2589 = vmatmul.mubr.f32.gmra.mxu0 %v902
    %v2590 = vpop.f32.mrf.mxu0
    %v2591 = vadd.f32 0.0, %v2590
    %v2592 = vpop.f32.mrf.mxu0
    %v2593 = vadd.f32 0.0, %v2592
    %2594 = vmatprep.mubr.f32.mxu0 %v910
    %2595 = vmatmul.mubr.f32.gmra.mxu0 %v908
    %v2596 = vpop.f32.mrf.mxu0
    %v2597 = vadd.f32 0.0, %v2596
    %v2598 = vpop.f32.mrf.mxu0
    %v2599 = vadd.f32 0.0, %v2598
    %2600 = vmatprep.mubr.f32.mxu0 %v916
    %2601 = vmatmul.mubr.f32.gmra.mxu0 %v914
    %v2602 = vpop.f32.mrf.mxu0
    %v2603 = vadd.f32 0.0, %v2602
    %v2604 = vpop.f32.mrf.mxu0
    %v2605 = vadd.f32 0.0, %v2604
    %2606 = vmatprep.mubr.f32.mxu0 %v922
    %2607 = vmatmul.mubr.f32.gmra.mxu0 %v920
    %v2608 = vpop.f32.mrf.mxu0
    %v2609 = vadd.f32 0.0, %v2608
    %v2610 = vpop.f32.mrf.mxu0
    %v2611 = vadd.f32 0.0, %v2610
    %2612 = vmatprep.mubr.f32.mxu0 %v928
    %2613 = vmatmul.mubr.f32.gmra.mxu0 %v926
    %v2614 = vpop.f32.mrf.mxu0
    %v2615 = vadd.f32 0.0, %v2614
    %v2616 = vpop.f32.mrf.mxu0
    %v2617 = vadd.f32 0.0, %v2616
    %2618 = vmatprep.mubr.f32.mxu0 %v934
    %2619 = vmatmul.mubr.f32.gmra.mxu0 %v932
    %v2620 = vpop.f32.mrf.mxu0
    %v2621 = vadd.f32 0.0, %v2620
    %v2622 = vpop.f32.mrf.mxu0
    %v2623 = vadd.f32 0.0, %v2622
    %2624 = vmatprep.mubr.f32.mxu0 %v940
    %2625 = vmatmul.mubr.f32.gmra.mxu0 %v938
    %v2626 = vpop.f32.mrf.mxu0
    %v2627 = vadd.f32 0.0, %v2626
    %v2628 = vpop.f32.mrf.mxu0
    %v2629 = vadd.f32 0.0, %v2628
    %2630 = vmatprep.mubr.f32.mxu0 %v946
    %2631 = vmatmul.mubr.f32.gmra.mxu0 %v944
    %v2632 = vpop.f32.mrf.mxu0
    %v2633 = vadd.f32 0.0, %v2632
    %v2634 = vpop.f32.mrf.mxu0
    %v2635 = vadd.f32 0.0, %v2634
    %2636 = vmatprep.mubr.f32.mxu0 %v952
    %2637 = vmatmul.mubr.f32.gmra.mxu0 %v950
    %v2638 = vpop.f32.mrf.mxu0
    %v2639 = vadd.f32 0.0, %v2638
    %v2640 = vpop.f32.mrf.mxu0
    %v2641 = vadd.f32 0.0, %v2640
    %2642 = vmatprep.mubr.f32.mxu0 %v958
    %2643 = vmatmul.mubr.f32.gmra.mxu0 %v956
    %v2644 = vpop.f32.mrf.mxu0
    %v2645 = vadd.f32 0.0, %v2644
    %v2646 = vpop.f32.mrf.mxu0
    %v2647 = vadd.f32 0.0, %v2646
    %2648 = vmatprep.mubr.f32.mxu0 %v964
    %2649 = vmatmul.mubr.f32.gmra.mxu0 %v962
    %v2650 = vpop.f32.mrf.mxu0
    %v2651 = vadd.f32 0.0, %v2650
    %v2652 = vpop.f32.mrf.mxu0
    %v2653 = vadd.f32 0.0, %v2652
    %2654 = vmatprep.mubr.f32.mxu0 %v970
    %2655 = vmatmul.mubr.f32.gmra.mxu0 %v968
    %v2656 = vpop.f32.mrf.mxu0
    %v2657 = vadd.f32 0.0, %v2656
    %v2658 = vpop.f32.mrf.mxu0
    %v2659 = vadd.f32 0.0, %v2658
    %2660 = vmatprep.mubr.f32.mxu0 %v976
    %2661 = vmatmul.mubr.f32.gmra.mxu0 %v974
    %v2662 = vpop.f32.mrf.mxu0
    %v2663 = vadd.f32 0.0, %v2662
    %v2664 = vpop.f32.mrf.mxu0
    %v2665 = vadd.f32 0.0, %v2664
    %2666 = vmatprep.mubr.f32.mxu0 %v982
    %2667 = vmatmul.mubr.f32.gmra.mxu0 %v980
    %v2668 = vpop.f32.mrf.mxu0
    %v2669 = vadd.f32 0.0, %v2668
    %v2670 = vpop.f32.mrf.mxu0
    %v2671 = vadd.f32 0.0, %v2670
    %2672 = vmatprep.mubr.f32.mxu0 %v988
    %2673 = vmatmul.mubr.f32.gmra.mxu0 %v986
    %v2674 = vpop.f32.mrf.mxu0
    %v2675 = vadd.f32 0.0, %v2674
    %v2676 = vpop.f32.mrf.mxu0
    %v2677 = vadd.f32 0.0, %v2676
    %2678 = vmatprep.mubr.f32.mxu0 %v994
    %2679 = vmatmul.mubr.f32.gmra.mxu0 %v992
    %v2680 = vpop.f32.mrf.mxu0
    %v2681 = vadd.f32 0.0, %v2680
    %v2682 = vpop.f32.mrf.mxu0
    %v2683 = vadd.f32 0.0, %v2682
    %2684 = vmatprep.mubr.f32.mxu0 %v1000
    %2685 = vmatmul.mubr.f32.gmra.mxu0 %v998
    %v2686 = vpop.f32.mrf.mxu0
    %v2687 = vadd.f32 0.0, %v2686
    %v2688 = vpop.f32.mrf.mxu0
    %v2689 = vadd.f32 0.0, %v2688
    %2690 = vmatprep.mubr.f32.mxu0 %v1006
    %2691 = vmatmul.mubr.f32.gmra.mxu0 %v1004
    %v2692 = vpop.f32.mrf.mxu0
    %v2693 = vadd.f32 0.0, %v2692
    %v2694 = vpop.f32.mrf.mxu0
    %v2695 = vadd.f32 0.0, %v2694
    %2696 = vmatprep.mubr.f32.mxu0 %v1012
    %2697 = vmatmul.mubr.f32.gmra.mxu0 %v1010
    %v2698 = vpop.f32.mrf.mxu0
    %v2699 = vadd.f32 0.0, %v2698
    %v2700 = vpop.f32.mrf.mxu0
    %v2701 = vadd.f32 0.0, %v2700
    %2702 = vmatprep.mubr.f32.mxu0 %v1018
    %2703 = vmatmul.mubr.f32.gmra.mxu0 %v1016
    %v2704 = vpop.f32.mrf.mxu0
    %v2705 = vadd.f32 0.0, %v2704
    %v2706 = vpop.f32.mrf.mxu0
    %v2707 = vadd.f32 0.0, %v2706
    %2708 = vmatprep.mubr.f32.mxu0 %v1024
    %2709 = vmatmul.mubr.f32.gmra.mxu0 %v1022
    %v2710 = vpop.f32.mrf.mxu0
    %v2711 = vadd.f32 0.0, %v2710
    %v2712 = vpop.f32.mrf.mxu0
    %v2713 = vadd.f32 0.0, %v2712
    %2714 = vmatprep.mubr.f32.mxu0 %v1030
    %2715 = vmatmul.mubr.f32.gmra.mxu0 %v1028
    %v2716 = vpop.f32.mrf.mxu0
    %v2717 = vadd.f32 0.0, %v2716
    %v2718 = vpop.f32.mrf.mxu0
    %v2719 = vadd.f32 0.0, %v2718
    %2720 = vmatprep.mubr.f32.mxu0 %v1036
    %2721 = vmatmul.mubr.f32.gmra.mxu0 %v1034
    %v2722 = vpop.f32.mrf.mxu0
    %v2723 = vadd.f32 0.0, %v2722
    %v2724 = vpop.f32.mrf.mxu0
    %v2725 = vadd.f32 0.0, %v2724
    %2726 = vmatprep.mubr.f32.mxu0 %v1042
    %2727 = vmatmul.mubr.f32.gmra.mxu0 %v1040
    %v2728 = vpop.f32.mrf.mxu0
    %v2729 = vadd.f32 0.0, %v2728
    %v2730 = vpop.f32.mrf.mxu0
    %v2731 = vadd.f32 0.0, %v2730
    %2732 = vmatprep.mubr.f32.mxu0 %v1048
    %2733 = vmatmul.mubr.f32.gmra.mxu0 %v1046
    %v2734 = vpop.f32.mrf.mxu0
    %v2735 = vadd.f32 0.0, %v2734
    %v2736 = vpop.f32.mrf.mxu0
    %v2737 = vadd.f32 0.0, %v2736
    %2738 = vmatprep.mubr.f32.mxu0 %v1054
    %2739 = vmatmul.mubr.f32.gmra.mxu0 %v1052
    %v2740 = vpop.f32.mrf.mxu0
    %v2741 = vadd.f32 0.0, %v2740
    %v2742 = vpop.f32.mrf.mxu0
    %v2743 = vadd.f32 0.0, %v2742
    %2744 = vmatprep.mubr.f32.mxu0 %v1060
    %2745 = vmatmul.mubr.f32.gmra.mxu0 %v1058
    %v2746 = vpop.f32.mrf.mxu0
    %v2747 = vadd.f32 0.0, %v2746
    %v2748 = vpop.f32.mrf.mxu0
    %v2749 = vadd.f32 0.0, %v2748
    %2750 = vmatprep.mubr.f32.mxu0 %v1066
    %2751 = vmatmul.mubr.f32.gmra.mxu0 %v1064
    %v2752 = vpop.f32.mrf.mxu0
    %v2753 = vadd.f32 0.0, %v2752
    %v2754 = vpop.f32.mrf.mxu0
    %v2755 = vadd.f32 0.0, %v2754
    %2756 = vmatprep.mubr.f32.mxu0 %v1072
    %2757 = vmatmul.mubr.f32.gmra.mxu0 %v1070
    %v2758 = vpop.f32.mrf.mxu0
    %v2759 = vadd.f32 0.0, %v2758
    %v2760 = vpop.f32.mrf.mxu0
    %v2761 = vadd.f32 0.0, %v2760
    %2762 = vmatprep.mubr.f32.mxu0 %v1078
    %2763 = vmatmul.mubr.f32.gmra.mxu0 %v1076
    %v2764 = vpop.f32.mrf.mxu0
    %v2765 = vadd.f32 0.0, %v2764
    %v2766 = vpop.f32.mrf.mxu0
    %v2767 = vadd.f32 0.0, %v2766
    %2768 = vmatprep.mubr.f32.mxu0 %v1084
    %2769 = vmatmul.mubr.f32.gmra.mxu0 %v1082
    %v2770 = vpop.f32.mrf.mxu0
    %v2771 = vadd.f32 0.0, %v2770
    %v2772 = vpop.f32.mrf.mxu0
    %v2773 = vadd.f32 0.0, %v2772
    %2774 = vmatprep.mubr.f32.mxu0 %v1090
    %2775 = vmatmul.mubr.f32.gmra.mxu0 %v1088
    %v2776 = vpop.f32.mrf.mxu0
    %v2777 = vadd.f32 0.0, %v2776
    %v2778 = vpop.f32.mrf.mxu0
    %v2779 = vadd.f32 0.0, %v2778
    %2780 = vmatprep.mubr.f32.mxu0 %v1096
    %2781 = vmatmul.mubr.f32.gmra.mxu0 %v1094
    %v2782 = vpop.f32.mrf.mxu0
    %v2783 = vadd.f32 0.0, %v2782
    %v2784 = vpop.f32.mrf.mxu0
    %v2785 = vadd.f32 0.0, %v2784
    %2786 = vmatprep.mubr.f32.mxu0 %v1102
    %2787 = vmatmul.mubr.f32.gmra.mxu0 %v1100
    %v2788 = vpop.f32.mrf.mxu0
    %v2789 = vadd.f32 0.0, %v2788
    %v2790 = vpop.f32.mrf.mxu0
    %v2791 = vadd.f32 0.0, %v2790
    %2792 = vmatprep.mubr.f32.mxu0 %v1108
    %2793 = vmatmul.mubr.f32.gmra.mxu0 %v1106
    %v2794 = vpop.f32.mrf.mxu0
    %v2795 = vadd.f32 0.0, %v2794
    %v2796 = vpop.f32.mrf.mxu0
    %v2797 = vadd.f32 0.0, %v2796
    %2798 = vmatprep.mubr.f32.mxu0 %v1114
    %2799 = vmatmul.mubr.f32.gmra.mxu0 %v1112
    %v2800 = vpop.f32.mrf.mxu0
    %v2801 = vadd.f32 0.0, %v2800
    %v2802 = vpop.f32.mrf.mxu0
    %v2803 = vadd.f32 0.0, %v2802
    %2804 = vmatprep.mubr.f32.mxu0 %v1120
    %2805 = vmatmul.mubr.f32.gmra.mxu0 %v1118
    %v2806 = vpop.f32.mrf.mxu0
    %v2807 = vadd.f32 0.0, %v2806
    %v2808 = vpop.f32.mrf.mxu0
    %v2809 = vadd.f32 0.0, %v2808
    %2810 = vmatprep.mubr.f32.mxu0 %v1126
    %2811 = vmatmul.mubr.f32.gmra.mxu0 %v1124
    %v2812 = vpop.f32.mrf.mxu0
    %v2813 = vadd.f32 0.0, %v2812
    %v2814 = vpop.f32.mrf.mxu0
    %v2815 = vadd.f32 0.0, %v2814
    %2816 = vmatprep.mubr.f32.mxu0 %v1132
    %2817 = vmatmul.mubr.f32.gmra.mxu0 %v1130
    %v2818 = vpop.f32.mrf.mxu0
    %v2819 = vadd.f32 0.0, %v2818
    %v2820 = vpop.f32.mrf.mxu0
    %v2821 = vadd.f32 0.0, %v2820
    %2822 = vmatprep.mubr.f32.mxu0 %v1138
    %2823 = vmatmul.mubr.f32.gmra.mxu0 %v1136
    %v2824 = vpop.f32.mrf.mxu0
    %v2825 = vadd.f32 0.0, %v2824
    %v2826 = vpop.f32.mrf.mxu0
    %v2827 = vadd.f32 0.0, %v2826
    %2828 = vmatprep.mubr.f32.mxu0 %v1144
    %2829 = vmatmul.mubr.f32.gmra.mxu0 %v1142
    %v2830 = vpop.f32.mrf.mxu0
    %v2831 = vadd.f32 0.0, %v2830
    %v2832 = vpop.f32.mrf.mxu0
    %v2833 = vadd.f32 0.0, %v2832
    %2834 = vmatprep.mubr.f32.mxu0 %v1150
    %2835 = vmatmul.mubr.f32.gmra.mxu0 %v1148
    %v2836 = vpop.f32.mrf.mxu0
    %v2837 = vadd.f32 0.0, %v2836
    %v2838 = vpop.f32.mrf.mxu0
    %v2839 = vadd.f32 0.0, %v2838
    %2840 = vmatprep.mubr.f32.mxu0 %v1156
    %2841 = vmatmul.mubr.f32.gmra.mxu0 %v1154
    %v2842 = vpop.f32.mrf.mxu0
    %v2843 = vadd.f32 0.0, %v2842
    %v2844 = vpop.f32.mrf.mxu0
    %v2845 = vadd.f32 0.0, %v2844
    %2846 = vmatprep.mubr.f32.mxu0 %v1162
    %2847 = vmatmul.mubr.f32.gmra.mxu0 %v1160
    %v2848 = vpop.f32.mrf.mxu0
    %v2849 = vadd.f32 0.0, %v2848
    %v2850 = vpop.f32.mrf.mxu0
    %v2851 = vadd.f32 0.0, %v2850
    %2852 = vmatprep.mubr.f32.mxu0 %v1168
    %2853 = vmatmul.mubr.f32.gmra.mxu0 %v1166
    %v2854 = vpop.f32.mrf.mxu0
    %v2855 = vadd.f32 0.0, %v2854
    %v2856 = vpop.f32.mrf.mxu0
    %v2857 = vadd.f32 0.0, %v2856
    %2858 = vmatprep.mubr.f32.mxu0 %v1174
    %2859 = vmatmul.mubr.f32.gmra.mxu0 %v1172
    %v2860 = vpop.f32.mrf.mxu0
    %v2861 = vadd.f32 0.0, %v2860
    %v2862 = vpop.f32.mrf.mxu0
    %v2863 = vadd.f32 0.0, %v2862
    %2864 = vmatprep.mubr.f32.mxu0 %v1180
    %2865 = vmatmul.mubr.f32.gmra.mxu0 %v1178
    %v2866 = vpop.f32.mrf.mxu0
    %v2867 = vadd.f32 0.0, %v2866
    %v2868 = vpop.f32.mrf.mxu0
    %v2869 = vadd.f32 0.0, %v2868
    %2870 = vmatprep.mubr.f32.mxu0 %v1186
    %2871 = vmatmul.mubr.f32.gmra.mxu0 %v1184
    %v2872 = vpop.f32.mrf.mxu0
    %v2873 = vadd.f32 0.0, %v2872
    %v2874 = vpop.f32.mrf.mxu0
    %v2875 = vadd.f32 0.0, %v2874
    %2876 = vmatprep.mubr.f32.mxu0 %v1192
    %2877 = vmatmul.mubr.f32.gmra.mxu0 %v1190
    %v2878 = vpop.f32.mrf.mxu0
    %v2879 = vadd.f32 0.0, %v2878
    %v2880 = vpop.f32.mrf.mxu0
    %v2881 = vadd.f32 0.0, %v2880
    %2882 = vmatprep.mubr.f32.mxu0 %v1198
    %2883 = vmatmul.mubr.f32.gmra.mxu0 %v1196
    %v2884 = vpop.f32.mrf.mxu0
    %v2885 = vadd.f32 0.0, %v2884
    %v2886 = vpop.f32.mrf.mxu0
    %v2887 = vadd.f32 0.0, %v2886
    %2888 = vmatprep.mubr.f32.mxu0 %v1204
    %2889 = vmatmul.mubr.f32.gmra.mxu0 %v1202
    %v2890 = vpop.f32.mrf.mxu0
    %v2891 = vadd.f32 0.0, %v2890
    %v2892 = vpop.f32.mrf.mxu0
    %v2893 = vadd.f32 0.0, %v2892
    %2894 = vmatprep.mubr.f32.mxu0 %v1210
    %2895 = vmatmul.mubr.f32.gmra.mxu0 %v1208
    %v2896 = vpop.f32.mrf.mxu0
    %v2897 = vadd.f32 0.0, %v2896
    %v2898 = vpop.f32.mrf.mxu0
    %v2899 = vadd.f32 0.0, %v2898
    %2900 = vmatprep.mubr.f32.mxu0 %v1216
    %2901 = vmatmul.mubr.f32.gmra.mxu0 %v1214
    %v2902 = vpop.f32.mrf.mxu0
    %v2903 = vadd.f32 0.0, %v2902
    %v2904 = vpop.f32.mrf.mxu0
    %v2905 = vadd.f32 0.0, %v2904
    %2906 = vmatprep.mubr.f32.mxu0 %v1222
    %2907 = vmatmul.mubr.f32.gmra.mxu0 %v1220
    %v2908 = vpop.f32.mrf.mxu0
    %v2909 = vadd.f32 0.0, %v2908
    %v2910 = vpop.f32.mrf.mxu0
    %v2911 = vadd.f32 0.0, %v2910
    %2912 = vmatprep.mubr.f32.mxu0 %v1228
    %2913 = vmatmul.mubr.f32.gmra.mxu0 %v1226
    %v2914 = vpop.f32.mrf.mxu0
    %v2915 = vadd.f32 0.0, %v2914
    %v2916 = vpop.f32.mrf.mxu0
    %v2917 = vadd.f32 0.0, %v2916
    %2918 = vmatprep.mubr.f32.mxu0 %v1234
    %2919 = vmatmul.mubr.f32.gmra.mxu0 %v1232
    %v2920 = vpop.f32.mrf.mxu0
    %v2921 = vadd.f32 0.0, %v2920
    %v2922 = vpop.f32.mrf.mxu0
    %v2923 = vadd.f32 0.0, %v2922
    %2924 = vmatprep.mubr.f32.mxu0 %v1240
    %2925 = vmatmul.mubr.f32.gmra.mxu0 %v1238
    %v2926 = vpop.f32.mrf.mxu0
    %v2927 = vadd.f32 0.0, %v2926
    %v2928 = vpop.f32.mrf.mxu0
    %v2929 = vadd.f32 0.0, %v2928
    %2930 = vmatprep.mubr.f32.mxu0 %v1246
    %2931 = vmatmul.mubr.f32.gmra.mxu0 %v1244
    %v2932 = vpop.f32.mrf.mxu0
    %v2933 = vadd.f32 0.0, %v2932
    %v2934 = vpop.f32.mrf.mxu0
    %v2935 = vadd.f32 0.0, %v2934
    %2936 = vmatprep.mubr.f32.mxu0 %v1252
    %2937 = vmatmul.mubr.f32.gmra.mxu0 %v1250
    %v2938 = vpop.f32.mrf.mxu0
    %v2939 = vadd.f32 0.0, %v2938
    %v2940 = vpop.f32.mrf.mxu0
    %v2941 = vadd.f32 0.0, %v2940
    %2942 = vmatprep.mubr.f32.mxu0 %v1258
    %2943 = vmatmul.mubr.f32.gmra.mxu0 %v1256
    %v2944 = vpop.f32.mrf.mxu0
    %v2945 = vadd.f32 0.0, %v2944
    %v2946 = vpop.f32.mrf.mxu0
    %v2947 = vadd.f32 0.0, %v2946
    %2948 = vmatprep.mubr.f32.mxu0 %v1264
    %2949 = vmatmul.mubr.f32.gmra.mxu0 %v1262
    %v2950 = vpop.f32.mrf.mxu0
    %v2951 = vadd.f32 0.0, %v2950
    %v2952 = vpop.f32.mrf.mxu0
    %v2953 = vadd.f32 0.0, %v2952
    %2954 = vmatprep.mubr.f32.mxu0 %v1270
    %2955 = vmatmul.mubr.f32.gmra.mxu0 %v1268
    %v2956 = vpop.f32.mrf.mxu0
    %v2957 = vadd.f32 0.0, %v2956
    %v2958 = vpop.f32.mrf.mxu0
    %v2959 = vadd.f32 0.0, %v2958
    %2960 = vmatprep.mubr.f32.mxu0 %v1276
    %2961 = vmatmul.mubr.f32.gmra.mxu0 %v1274
    %v2962 = vpop.f32.mrf.mxu0
    %v2963 = vadd.f32 0.0, %v2962
    %v2964 = vpop.f32.mrf.mxu0
    %v2965 = vadd.f32 0.0, %v2964
    %2966 = vmatprep.mubr.f32.mxu0 %v1282
    %2967 = vmatmul.mubr.f32.gmra.mxu0 %v1280
    %v2968 = vpop.f32.mrf.mxu0
    %v2969 = vadd.f32 0.0, %v2968
    %v2970 = vpop.f32.mrf.mxu0
    %v2971 = vadd.f32 0.0, %v2970
    %2972 = vdwg.mxu0
    %v2981 = vcombine.low %v1860, %v1862
    %v2982 = vcombine.high %v1860, %v1862
    %v2983 = vcombine.low %v1937, %v1939
    %v2984 = vcombine.high %v1937, %v1939
    %v2986 = vunpack.c.l.s4 1966171168
    %v2987 = vunpack.c.0.s8 %v2986
    %v2988 = vlaneseq
    %v2989 = vshrl.u32 %v2988, 7
    %v2990 = vsub.s32 %v2987, %v2989
    %v2991 = vrot.slane %v2981, %v2990
    %v2993 = vunpack.c.l.s4 1966171168
    %v2994 = vunpack.c.0.s8 %v2993
    %v2995 = vlaneseq
    %v2996 = vshrl.u32 %v2995, 7
    %v2997 = vsub.s32 %v2994, %v2996
    %v2998 = vrot.slane %v2982, %v2997
    %v3000 = vunpack.c.l.s4 1966171168
    %v3001 = vunpack.c.0.s8 %v3000
    %v3002 = vlaneseq
    %v3003 = vshrl.u32 %v3002, 7
    %v3004 = vsub.s32 %v3001, %v3003
    %v3005 = vrot.slane %v2983, %v3004
    %v3007 = vunpack.c.l.s4 1966171168
    %v3008 = vunpack.c.0.s8 %v3007
    %v3009 = vlaneseq
    %v3010 = vshrl.u32 %v3009, 7
    %v3011 = vsub.s32 %v3008, %v3010
    %v3012 = vrot.slane %v2984, %v3011
    %v3013 = vcombine.low %v2991, %v3005
    %v3014 = vcombine.high %v2991, %v3005
    %v3015 = vcombine.low %v2998, %v3012
    %v3016 = vcombine.high %v2998, %v3012
    %v3018 = vunpack.c.l.s4 1966171168
    %v3019 = vunpack.c.0.s8 %v3018
    %v3020 = vlaneseq
    %v3021 = vshrl.u32 %v3020, 7
    %v3022 = vsub.s32 %v3019, %v3021
    %v3023 = vrot.slane %v3013, %v3022
    %v3025 = vunpack.c.l.s4 1966171168
    %v3026 = vunpack.c.0.s8 %v3025
    %v3027 = vlaneseq
    %v3028 = vshrl.u32 %v3027, 7
    %v3029 = vsub.s32 %v3026, %v3028
    %v3030 = vrot.slane %v3015, %v3029
    %v3032 = vunpack.c.l.s4 1966171168
    %v3033 = vunpack.c.0.s8 %v3032
    %v3034 = vlaneseq
    %v3035 = vshrl.u32 %v3034, 7
    %v3036 = vsub.s32 %v3033, %v3035
    %v3037 = vrot.slane %v3014, %v3036
    %v3039 = vunpack.c.l.s4 1966171168
    %v3040 = vunpack.c.0.s8 %v3039
    %v3041 = vlaneseq
    %v3042 = vshrl.u32 %v3041, 7
    %v3043 = vsub.s32 %v3040, %v3042
    %v3044 = vrot.slane %v3016, %v3043
    %v3045 = vcombine.high %v3023, %v3023
    %v3046 = vcombine.high %v3030, %v3030
    %v3047 = vcombine.high %v3037, %v3037
    %v3048 = vcombine.high %v3044, %v3044
    %v3049 = vcombine.low %v1866, %v1868
    %v3050 = vcombine.high %v1866, %v1868
    %v3051 = vcombine.low %v1943, %v1945
    %v3052 = vcombine.high %v1943, %v1945
    %v3054 = vunpack.c.l.s4 1966171168
    %v3055 = vunpack.c.0.s8 %v3054
    %v3056 = vlaneseq
    %v3057 = vshrl.u32 %v3056, 7
    %v3058 = vsub.s32 %v3055, %v3057
    %v3059 = vrot.slane %v3049, %v3058
    %v3061 = vunpack.c.l.s4 1966171168
    %v3062 = vunpack.c.0.s8 %v3061
    %v3063 = vlaneseq
    %v3064 = vshrl.u32 %v3063, 7
    %v3065 = vsub.s32 %v3062, %v3064
    %v3066 = vrot.slane %v3050, %v3065
    %v3068 = vunpack.c.l.s4 1966171168
    %v3069 = vunpack.c.0.s8 %v3068
    %v3070 = vlaneseq
    %v3071 = vshrl.u32 %v3070, 7
    %v3072 = vsub.s32 %v3069, %v3071
    %v3073 = vrot.slane %v3051, %v3072
    %v3075 = vunpack.c.l.s4 1966171168
    %v3076 = vunpack.c.0.s8 %v3075
    %v3077 = vlaneseq
    %v3078 = vshrl.u32 %v3077, 7
    %v3079 = vsub.s32 %v3076, %v3078
    %v3080 = vrot.slane %v3052, %v3079
    %v3081 = vcombine.low %v3059, %v3073
    %v3082 = vcombine.high %v3059, %v3073
    %v3083 = vcombine.low %v3066, %v3080
    %v3084 = vcombine.high %v3066, %v3080
    %v3086 = vunpack.c.l.s4 1966171168
    %v3087 = vunpack.c.0.s8 %v3086
    %v3088 = vlaneseq
    %v3089 = vshrl.u32 %v3088, 7
    %v3090 = vsub.s32 %v3087, %v3089
    %v3091 = vrot.slane %v3081, %v3090
    %v3093 = vunpack.c.l.s4 1966171168
    %v3094 = vunpack.c.0.s8 %v3093
    %v3095 = vlaneseq
    %v3096 = vshrl.u32 %v3095, 7
    %v3097 = vsub.s32 %v3094, %v3096
    %v3098 = vrot.slane %v3083, %v3097
    %v3100 = vunpack.c.l.s4 1966171168
    %v3101 = vunpack.c.0.s8 %v3100
    %v3102 = vlaneseq
    %v3103 = vshrl.u32 %v3102, 7
    %v3104 = vsub.s32 %v3101, %v3103
    %v3105 = vrot.slane %v3082, %v3104
    %v3107 = vunpack.c.l.s4 1966171168
    %v3108 = vunpack.c.0.s8 %v3107
    %v3109 = vlaneseq
    %v3110 = vshrl.u32 %v3109, 7
    %v3111 = vsub.s32 %v3108, %v3110
    %v3112 = vrot.slane %v3084, %v3111
    %v3113 = vcombine.high %v3091, %v3091
    %v3114 = vcombine.high %v3098, %v3098
    %v3115 = vcombine.high %v3105, %v3105
    %v3116 = vcombine.high %v3112, %v3112
    %v3117 = vlaneseq
    %v3118 = vshrl.u32 %v3117, 7
    %v3119 = vsub.s32 0, %v3118
    %v3120 = vrot.slane %v3023, %v3119
    %v3121 = vlaneseq
    %v3122 = vshrl.u32 %v3121, 7
    %v3123 = vsub.s32 1, %v3122
    %v3124 = vrot.slane %v3023, %v3123
    %v3125 = vlaneseq
    %v3126 = vshrl.u32 %v3125, 7
    %v3127 = vsub.s32 2, %v3126
    %v3128 = vrot.slane %v3023, %v3127
    %v3129 = vlaneseq
    %v3130 = vshrl.u32 %v3129, 7
    %v3131 = vsub.s32 3, %v3130
    %v3132 = vrot.slane %v3023, %v3131
    %v3133 = vlaneseq
    %v3134 = vshrl.u32 %v3133, 7
    %v3135 = vsub.s32 0, %v3134
    %v3136 = vrot.slane %v3037, %v3135
    %v3137 = vlaneseq
    %v3138 = vshrl.u32 %v3137, 7
    %v3139 = vsub.s32 1, %v3138
    %v3140 = vrot.slane %v3037, %v3139
    %v3141 = vlaneseq
    %v3142 = vshrl.u32 %v3141, 7
    %v3143 = vsub.s32 2, %v3142
    %v3144 = vrot.slane %v3037, %v3143
    %v3145 = vlaneseq
    %v3146 = vshrl.u32 %v3145, 7
    %v3147 = vsub.s32 3, %v3146
    %v3148 = vrot.slane %v3037, %v3147
    %v3149 = vlaneseq
    %v3150 = vshrl.u32 %v3149, 7
    %v3151 = vsub.s32 0, %v3150
    %v3152 = vrot.slane %v3045, %v3151
    %v3153 = vlaneseq
    %v3154 = vshrl.u32 %v3153, 7
    %v3155 = vsub.s32 1, %v3154
    %v3156 = vrot.slane %v3045, %v3155
    %v3157 = vlaneseq
    %v3158 = vshrl.u32 %v3157, 7
    %v3159 = vsub.s32 2, %v3158
    %v3160 = vrot.slane %v3045, %v3159
    %v3161 = vlaneseq
    %v3162 = vshrl.u32 %v3161, 7
    %v3163 = vsub.s32 3, %v3162
    %v3164 = vrot.slane %v3045, %v3163
    %v3165 = vlaneseq
    %v3166 = vshrl.u32 %v3165, 7
    %v3167 = vsub.s32 0, %v3166
    %v3168 = vrot.slane %v3047, %v3167
    %v3169 = vlaneseq
    %v3170 = vshrl.u32 %v3169, 7
    %v3171 = vsub.s32 1, %v3170
    %v3172 = vrot.slane %v3047, %v3171
    %v3173 = vlaneseq
    %v3174 = vshrl.u32 %v3173, 7
    %v3175 = vsub.s32 2, %v3174
    %v3176 = vrot.slane %v3047, %v3175
    %v3177 = vlaneseq
    %v3178 = vshrl.u32 %v3177, 7
    %v3179 = vsub.s32 3, %v3178
    %v3180 = vrot.slane %v3047, %v3179
    %v3181 = vlaneseq
    %v3182 = vshrl.u32 %v3181, 7
    %v3183 = vsub.s32 0, %v3182
    %v3184 = vrot.slane %v3030, %v3183
    %v3185 = vlaneseq
    %v3186 = vshrl.u32 %v3185, 7
    %v3187 = vsub.s32 1, %v3186
    %v3188 = vrot.slane %v3030, %v3187
    %v3189 = vlaneseq
    %v3190 = vshrl.u32 %v3189, 7
    %v3191 = vsub.s32 2, %v3190
    %v3192 = vrot.slane %v3030, %v3191
    %v3193 = vlaneseq
    %v3194 = vshrl.u32 %v3193, 7
    %v3195 = vsub.s32 3, %v3194
    %v3196 = vrot.slane %v3030, %v3195
    %v3197 = vlaneseq
    %v3198 = vshrl.u32 %v3197, 7
    %v3199 = vsub.s32 0, %v3198
    %v3200 = vrot.slane %v3044, %v3199
    %v3201 = vlaneseq
    %v3202 = vshrl.u32 %v3201, 7
    %v3203 = vsub.s32 1, %v3202
    %v3204 = vrot.slane %v3044, %v3203
    %v3205 = vlaneseq
    %v3206 = vshrl.u32 %v3205, 7
    %v3207 = vsub.s32 2, %v3206
    %v3208 = vrot.slane %v3044, %v3207
    %v3209 = vlaneseq
    %v3210 = vshrl.u32 %v3209, 7
    %v3211 = vsub.s32 3, %v3210
    %v3212 = vrot.slane %v3044, %v3211
    %v3213 = vlaneseq
    %v3214 = vshrl.u32 %v3213, 7
    %v3215 = vsub.s32 0, %v3214
    %v3216 = vrot.slane %v3046, %v3215
    %v3217 = vlaneseq
    %v3218 = vshrl.u32 %v3217, 7
    %v3219 = vsub.s32 1, %v3218
    %v3220 = vrot.slane %v3046, %v3219
    %v3221 = vlaneseq
    %v3222 = vshrl.u32 %v3221, 7
    %v3223 = vsub.s32 2, %v3222
    %v3224 = vrot.slane %v3046, %v3223
    %v3225 = vlaneseq
    %v3226 = vshrl.u32 %v3225, 7
    %v3227 = vsub.s32 3, %v3226
    %v3228 = vrot.slane %v3046, %v3227
    %v3229 = vlaneseq
    %v3230 = vshrl.u32 %v3229, 7
    %v3231 = vsub.s32 0, %v3230
    %v3232 = vrot.slane %v3048, %v3231
    %v3233 = vlaneseq
    %v3234 = vshrl.u32 %v3233, 7
    %v3235 = vsub.s32 1, %v3234
    %v3236 = vrot.slane %v3048, %v3235
    %v3237 = vlaneseq
    %v3238 = vshrl.u32 %v3237, 7
    %v3239 = vsub.s32 2, %v3238
    %v3240 = vrot.slane %v3048, %v3239
    %v3241 = vlaneseq
    %v3242 = vshrl.u32 %v3241, 7
    %v3243 = vsub.s32 3, %v3242
    %v3244 = vrot.slane %v3048, %v3243
    %v3245 = vlaneseq
    %v3246 = vshrl.u32 %v3245, 7
    %v3247 = vsub.s32 0, %v3246
    %v3248 = vrot.slane %v3091, %v3247
    %v3249 = vlaneseq
    %v3250 = vshrl.u32 %v3249, 7
    %v3251 = vsub.s32 1, %v3250
    %v3252 = vrot.slane %v3091, %v3251
    %v3253 = vlaneseq
    %v3254 = vshrl.u32 %v3253, 7
    %v3255 = vsub.s32 2, %v3254
    %v3256 = vrot.slane %v3091, %v3255
    %v3257 = vlaneseq
    %v3258 = vshrl.u32 %v3257, 7
    %v3259 = vsub.s32 3, %v3258
    %v3260 = vrot.slane %v3091, %v3259
    %v3261 = vlaneseq
    %v3262 = vshrl.u32 %v3261, 7
    %v3263 = vsub.s32 0, %v3262
    %v3264 = vrot.slane %v3105, %v3263
    %v3265 = vlaneseq
    %v3266 = vshrl.u32 %v3265, 7
    %v3267 = vsub.s32 1, %v3266
    %v3268 = vrot.slane %v3105, %v3267
    %v3269 = vlaneseq
    %v3270 = vshrl.u32 %v3269, 7
    %v3271 = vsub.s32 2, %v3270
    %v3272 = vrot.slane %v3105, %v3271
    %v3273 = vlaneseq
    %v3274 = vshrl.u32 %v3273, 7
    %v3275 = vsub.s32 3, %v3274
    %v3276 = vrot.slane %v3105, %v3275
    %v3277 = vlaneseq
    %v3278 = vshrl.u32 %v3277, 7
    %v3279 = vsub.s32 0, %v3278
    %v3280 = vrot.slane %v3113, %v3279
    %v3281 = vlaneseq
    %v3282 = vshrl.u32 %v3281, 7
    %v3283 = vsub.s32 1, %v3282
    %v3284 = vrot.slane %v3113, %v3283
    %v3285 = vlaneseq
    %v3286 = vshrl.u32 %v3285, 7
    %v3287 = vsub.s32 2, %v3286
    %v3288 = vrot.slane %v3113, %v3287
    %v3289 = vlaneseq
    %v3290 = vshrl.u32 %v3289, 7
    %v3291 = vsub.s32 3, %v3290
    %v3292 = vrot.slane %v3113, %v3291
    %v3293 = vlaneseq
    %v3294 = vshrl.u32 %v3293, 7
    %v3295 = vsub.s32 0, %v3294
    %v3296 = vrot.slane %v3115, %v3295
    %v3297 = vlaneseq
    %v3298 = vshrl.u32 %v3297, 7
    %v3299 = vsub.s32 1, %v3298
    %v3300 = vrot.slane %v3115, %v3299
    %v3301 = vlaneseq
    %v3302 = vshrl.u32 %v3301, 7
    %v3303 = vsub.s32 2, %v3302
    %v3304 = vrot.slane %v3115, %v3303
    %v3305 = vlaneseq
    %v3306 = vshrl.u32 %v3305, 7
    %v3307 = vsub.s32 3, %v3306
    %v3308 = vrot.slane %v3115, %v3307
    %v3309 = vlaneseq
    %v3310 = vshrl.u32 %v3309, 7
    %v3311 = vsub.s32 0, %v3310
    %v3312 = vrot.slane %v3098, %v3311
    %v3313 = vlaneseq
    %v3314 = vshrl.u32 %v3313, 7
    %v3315 = vsub.s32 1, %v3314
    %v3316 = vrot.slane %v3098, %v3315
    %v3317 = vlaneseq
    %v3318 = vshrl.u32 %v3317, 7
    %v3319 = vsub.s32 2, %v3318
    %v3320 = vrot.slane %v3098, %v3319
    %v3321 = vlaneseq
    %v3322 = vshrl.u32 %v3321, 7
    %v3323 = vsub.s32 3, %v3322
    %v3324 = vrot.slane %v3098, %v3323
    %v3325 = vlaneseq
    %v3326 = vshrl.u32 %v3325, 7
    %v3327 = vsub.s32 0, %v3326
    %v3328 = vrot.slane %v3112, %v3327
    %v3329 = vlaneseq
    %v3330 = vshrl.u32 %v3329, 7
    %v3331 = vsub.s32 1, %v3330
    %v3332 = vrot.slane %v3112, %v3331
    %v3333 = vlaneseq
    %v3334 = vshrl.u32 %v3333, 7
    %v3335 = vsub.s32 2, %v3334
    %v3336 = vrot.slane %v3112, %v3335
    %v3337 = vlaneseq
    %v3338 = vshrl.u32 %v3337, 7
    %v3339 = vsub.s32 3, %v3338
    %v3340 = vrot.slane %v3112, %v3339
    %v3341 = vlaneseq
    %v3342 = vshrl.u32 %v3341, 7
    %v3343 = vsub.s32 0, %v3342
    %v3344 = vrot.slane %v3114, %v3343
    %v3345 = vlaneseq
    %v3346 = vshrl.u32 %v3345, 7
    %v3347 = vsub.s32 1, %v3346
    %v3348 = vrot.slane %v3114, %v3347
    %v3349 = vlaneseq
    %v3350 = vshrl.u32 %v3349, 7
    %v3351 = vsub.s32 2, %v3350
    %v3352 = vrot.slane %v3114, %v3351
    %v3353 = vlaneseq
    %v3354 = vshrl.u32 %v3353, 7
    %v3355 = vsub.s32 3, %v3354
    %v3356 = vrot.slane %v3114, %v3355
    %v3357 = vlaneseq
    %v3358 = vshrl.u32 %v3357, 7
    %v3359 = vsub.s32 0, %v3358
    %v3360 = vrot.slane %v3116, %v3359
    %v3361 = vlaneseq
    %v3362 = vshrl.u32 %v3361, 7
    %v3363 = vsub.s32 1, %v3362
    %v3364 = vrot.slane %v3116, %v3363
    %v3365 = vlaneseq
    %v3366 = vshrl.u32 %v3365, 7
    %v3367 = vsub.s32 2, %v3366
    %v3368 = vrot.slane %v3116, %v3367
    %v3369 = vlaneseq
    %v3370 = vshrl.u32 %v3369, 7
    %v3371 = vsub.s32 3, %v3370
    %v3372 = vrot.slane %v3116, %v3371
    %v3437 = vadd.f32 %v2142, %v3120
    %v3438 = vadd.f32 %v2144, %v3124
    %v3439 = vadd.f32 %v2591, %v3128
    %v3440 = vadd.f32 %v2593, %v3132
    %v3441 = vadd.f32 %v2148, %v3120
    %v3442 = vadd.f32 %v2150, %v3124
    %v3443 = vadd.f32 %v2597, %v3128
    %v3444 = vadd.f32 %v2599, %v3132
    %v3445 = vadd.f32 %v2154, %v3120
    %v3446 = vadd.f32 %v2156, %v3124
    %v3447 = vadd.f32 %v2603, %v3128
    %v3448 = vadd.f32 %v2605, %v3132
    %v3449 = vadd.f32 %v2160, %v3120
    %v3450 = vadd.f32 %v2162, %v3124
    %v3451 = vadd.f32 %v2609, %v3128
    %v3452 = vadd.f32 %v2611, %v3132
    %v3453 = vadd.f32 %v2166, %v3136
    %v3454 = vadd.f32 %v2168, %v3140
    %v3455 = vadd.f32 %v2615, %v3144
    %v3456 = vadd.f32 %v2617, %v3148
    %v3457 = vadd.f32 %v2172, %v3136
    %v3458 = vadd.f32 %v2174, %v3140
    %v3459 = vadd.f32 %v2621, %v3144
    %v3460 = vadd.f32 %v2623, %v3148
    %v3461 = vadd.f32 %v2178, %v3136
    %v3462 = vadd.f32 %v2180, %v3140
    %v3463 = vadd.f32 %v2627, %v3144
    %v3464 = vadd.f32 %v2629, %v3148
    %v3465 = vadd.f32 %v2184, %v3136
    %v3466 = vadd.f32 %v2186, %v3140
    %v3467 = vadd.f32 %v2633, %v3144
    %v3468 = vadd.f32 %v2635, %v3148
    %v3469 = vadd.f32 %v2190, %v3152
    %v3470 = vadd.f32 %v2192, %v3156
    %v3471 = vadd.f32 %v2639, %v3160
    %v3472 = vadd.f32 %v2641, %v3164
    %v3473 = vadd.f32 %v2196, %v3152
    %v3474 = vadd.f32 %v2198, %v3156
    %v3475 = vadd.f32 %v2645, %v3160
    %v3476 = vadd.f32 %v2647, %v3164
    %v3477 = vadd.f32 %v2202, %v3152
    %v3478 = vadd.f32 %v2204, %v3156
    %v3479 = vadd.f32 %v2651, %v3160
    %v3480 = vadd.f32 %v2653, %v3164
    %v3481 = vadd.f32 %v2208, %v3152
    %v3482 = vadd.f32 %v2210, %v3156
    %v3483 = vadd.f32 %v2657, %v3160
    %v3484 = vadd.f32 %v2659, %v3164
    %v3485 = vadd.f32 %v2214, %v3168
    %v3486 = vadd.f32 %v2216, %v3172
    %v3487 = vadd.f32 %v2663, %v3176
    %v3488 = vadd.f32 %v2665, %v3180
    %v3489 = vadd.f32 %v2220, %v3168
    %v3490 = vadd.f32 %v2222, %v3172
    %v3491 = vadd.f32 %v2669, %v3176
    %v3492 = vadd.f32 %v2671, %v3180
    %v3493 = vadd.f32 %v2226, %v3168
    %v3494 = vadd.f32 %v2228, %v3172
    %v3495 = vadd.f32 %v2675, %v3176
    %v3496 = vadd.f32 %v2677, %v3180
    %v3497 = vadd.f32 %v2232, %v3168
    %v3498 = vadd.f32 %v2234, %v3172
    %v3499 = vadd.f32 %v2681, %v3176
    %v3500 = vadd.f32 %v2683, %v3180
    %v3501 = vadd.f32 %v2238, %v3184
    %v3502 = vadd.f32 %v2240, %v3188
    %v3503 = vadd.f32 %v2687, %v3192
    %v3504 = vadd.f32 %v2689, %v3196
    %v3505 = vadd.f32 %v2244, %v3184
    %v3506 = vadd.f32 %v2246, %v3188
    %v3507 = vadd.f32 %v2693, %v3192
    %v3508 = vadd.f32 %v2695, %v3196
    %v3509 = vadd.f32 %v2250, %v3184
    %v3510 = vadd.f32 %v2252, %v3188
    %v3511 = vadd.f32 %v2699, %v3192
    %v3512 = vadd.f32 %v2701, %v3196
    %v3513 = vadd.f32 %v2256, %v3184
    %v3514 = vadd.f32 %v2258, %v3188
    %v3515 = vadd.f32 %v2705, %v3192
    %v3516 = vadd.f32 %v2707, %v3196
    %v3517 = vadd.f32 %v2262, %v3200
    %v3518 = vadd.f32 %v2264, %v3204
    %v3519 = vadd.f32 %v2711, %v3208
    %v3520 = vadd.f32 %v2713, %v3212
    %v3521 = vadd.f32 %v2268, %v3200
    %v3522 = vadd.f32 %v2270, %v3204
    %v3523 = vadd.f32 %v2717, %v3208
    %v3524 = vadd.f32 %v2719, %v3212
    %v3525 = vadd.f32 %v2274, %v3200
    %v3526 = vadd.f32 %v2276, %v3204
    %v3527 = vadd.f32 %v2723, %v3208
    %v3528 = vadd.f32 %v2725, %v3212
    %v3529 = vadd.f32 %v2280, %v3200
    %v3530 = vadd.f32 %v2282, %v3204
    %v3531 = vadd.f32 %v2729, %v3208
    %v3532 = vadd.f32 %v2731, %v3212
    %v3533 = vadd.f32 %v2286, %v3216
    %v3534 = vadd.f32 %v2288, %v3220
    %v3535 = vadd.f32 %v2735, %v3224
    %v3536 = vadd.f32 %v2737, %v3228
    %v3537 = vadd.f32 %v2292, %v3216
    %v3538 = vadd.f32 %v2294, %v3220
    %v3539 = vadd.f32 %v2741, %v3224
    %v3540 = vadd.f32 %v2743, %v3228
    %v3541 = vadd.f32 %v2298, %v3216
    %v3542 = vadd.f32 %v2300, %v3220
    %v3543 = vadd.f32 %v2747, %v3224
    %v3544 = vadd.f32 %v2749, %v3228
    %v3545 = vadd.f32 %v2304, %v3216
    %v3546 = vadd.f32 %v2306, %v3220
    %v3547 = vadd.f32 %v2753, %v3224
    %v3548 = vadd.f32 %v2755, %v3228
    %v3549 = vadd.f32 %v2310, %v3232
    %v3550 = vadd.f32 %v2312, %v3236
    %v3551 = vadd.f32 %v2759, %v3240
    %v3552 = vadd.f32 %v2761, %v3244
    %v3553 = vadd.f32 %v2316, %v3232
    %v3554 = vadd.f32 %v2318, %v3236
    %v3555 = vadd.f32 %v2765, %v3240
    %v3556 = vadd.f32 %v2767, %v3244
    %v3557 = vadd.f32 %v2322, %v3232
    %v3558 = vadd.f32 %v2324, %v3236
    %v3559 = vadd.f32 %v2771, %v3240
    %v3560 = vadd.f32 %v2773, %v3244
    %v3561 = vadd.f32 %v2328, %v3232
    %v3562 = vadd.f32 %v2330, %v3236
    %v3563 = vadd.f32 %v2777, %v3240
    %v3564 = vadd.f32 %v2779, %v3244
    %v3565 = vadd.f32 %v2334, %v3248
    %v3566 = vadd.f32 %v2336, %v3252
    %v3567 = vadd.f32 %v2783, %v3256
    %v3568 = vadd.f32 %v2785, %v3260
    %v3569 = vadd.f32 %v2340, %v3248
    %v3570 = vadd.f32 %v2342, %v3252
    %v3571 = vadd.f32 %v2789, %v3256
    %v3572 = vadd.f32 %v2791, %v3260
    %v3573 = vadd.f32 %v2346, %v3248
    %v3574 = vadd.f32 %v2348, %v3252
    %v3575 = vadd.f32 %v2795, %v3256
    %v3576 = vadd.f32 %v2797, %v3260
    %v3577 = vadd.f32 %v2352, %v3248
    %v3578 = vadd.f32 %v2354, %v3252
    %v3579 = vadd.f32 %v2801, %v3256
    %v3580 = vadd.f32 %v2803, %v3260
    %v3581 = vadd.f32 %v2358, %v3264
    %v3582 = vadd.f32 %v2360, %v3268
    %v3583 = vadd.f32 %v2807, %v3272
    %v3584 = vadd.f32 %v2809, %v3276
    %v3585 = vadd.f32 %v2364, %v3264
    %v3586 = vadd.f32 %v2366, %v3268
    %v3587 = vadd.f32 %v2813, %v3272
    %v3588 = vadd.f32 %v2815, %v3276
    %v3589 = vadd.f32 %v2370, %v3264
    %v3590 = vadd.f32 %v2372, %v3268
    %v3591 = vadd.f32 %v2819, %v3272
    %v3592 = vadd.f32 %v2821, %v3276
    %v3593 = vadd.f32 %v2376, %v3264
    %v3594 = vadd.f32 %v2378, %v3268
    %v3595 = vadd.f32 %v2825, %v3272
    %v3596 = vadd.f32 %v2827, %v3276
    %v3597 = vadd.f32 %v2382, %v3280
    %v3598 = vadd.f32 %v2384, %v3284
    %v3599 = vadd.f32 %v2831, %v3288
    %v3600 = vadd.f32 %v2833, %v3292
    %v3601 = vadd.f32 %v2388, %v3280
    %v3602 = vadd.f32 %v2390, %v3284
    %v3603 = vadd.f32 %v2837, %v3288
    %v3604 = vadd.f32 %v2839, %v3292
    %v3605 = vadd.f32 %v2394, %v3280
    %v3606 = vadd.f32 %v2396, %v3284
    %v3607 = vadd.f32 %v2843, %v3288
    %v3608 = vadd.f32 %v2845, %v3292
    %v3609 = vadd.f32 %v2400, %v3280
    %v3610 = vadd.f32 %v2402, %v3284
    %v3611 = vadd.f32 %v2849, %v3288
    %v3612 = vadd.f32 %v2851, %v3292
    %v3613 = vadd.f32 %v2406, %v3296
    %v3614 = vadd.f32 %v2408, %v3300
    %v3615 = vadd.f32 %v2855, %v3304
    %v3616 = vadd.f32 %v2857, %v3308
    %v3617 = vadd.f32 %v2412, %v3296
    %v3618 = vadd.f32 %v2414, %v3300
    %v3619 = vadd.f32 %v2861, %v3304
    %v3620 = vadd.f32 %v2863, %v3308
    %v3621 = vadd.f32 %v2418, %v3296
    %v3622 = vadd.f32 %v2420, %v3300
    %v3623 = vadd.f32 %v2867, %v3304
    %v3624 = vadd.f32 %v2869, %v3308
    %v3625 = vadd.f32 %v2424, %v3296
    %v3626 = vadd.f32 %v2426, %v3300
    %v3627 = vadd.f32 %v2873, %v3304
    %v3628 = vadd.f32 %v2875, %v3308
    %v3629 = vadd.f32 %v2430, %v3312
    %v3630 = vadd.f32 %v2432, %v3316
    %v3631 = vadd.f32 %v2879, %v3320
    %v3632 = vadd.f32 %v2881, %v3324
    %v3633 = vadd.f32 %v2436, %v3312
    %v3634 = vadd.f32 %v2438, %v3316
    %v3635 = vadd.f32 %v2885, %v3320
    %v3636 = vadd.f32 %v2887, %v3324
    %v3637 = vadd.f32 %v2442, %v3312
    %v3638 = vadd.f32 %v2444, %v3316
    %v3639 = vadd.f32 %v2891, %v3320
    %v3640 = vadd.f32 %v2893, %v3324
    %v3641 = vadd.f32 %v2448, %v3312
    %v3642 = vadd.f32 %v2450, %v3316
    %v3643 = vadd.f32 %v2897, %v3320
    %v3644 = vadd.f32 %v2899, %v3324
    %v3645 = vadd.f32 %v2454, %v3328
    %v3646 = vadd.f32 %v2456, %v3332
    %v3647 = vadd.f32 %v2903, %v3336
    %v3648 = vadd.f32 %v2905, %v3340
    %v3649 = vadd.f32 %v2460, %v3328
    %v3650 = vadd.f32 %v2462, %v3332
    %v3651 = vadd.f32 %v2909, %v3336
    %v3652 = vadd.f32 %v2911, %v3340
    %v3653 = vadd.f32 %v2466, %v3328
    %v3654 = vadd.f32 %v2468, %v3332
    %v3655 = vadd.f32 %v2915, %v3336
    %v3656 = vadd.f32 %v2917, %v3340
    %v3657 = vadd.f32 %v2472, %v3328
    %v3658 = vadd.f32 %v2474, %v3332
    %v3659 = vadd.f32 %v2921, %v3336
    %v3660 = vadd.f32 %v2923, %v3340
    %v3661 = vadd.f32 %v2478, %v3344
    %v3662 = vadd.f32 %v2480, %v3348
    %v3663 = vadd.f32 %v2927, %v3352
    %v3664 = vadd.f32 %v2929, %v3356
    %v3665 = vadd.f32 %v2484, %v3344
    %v3666 = vadd.f32 %v2486, %v3348
    %v3667 = vadd.f32 %v2933, %v3352
    %v3668 = vadd.f32 %v2935, %v3356
    %v3669 = vadd.f32 %v2490, %v3344
    %v3670 = vadd.f32 %v2492, %v3348
    %v3671 = vadd.f32 %v2939, %v3352
    %v3672 = vadd.f32 %v2941, %v3356
    %v3673 = vadd.f32 %v2496, %v3344
    %v3674 = vadd.f32 %v2498, %v3348
    %v3675 = vadd.f32 %v2945, %v3352
    %v3676 = vadd.f32 %v2947, %v3356
    %v3677 = vadd.f32 %v2502, %v3360
    %v3678 = vadd.f32 %v2504, %v3364
    %v3679 = vadd.f32 %v2951, %v3368
    %v3680 = vadd.f32 %v2953, %v3372
    %v3681 = vadd.f32 %v2508, %v3360
    %v3682 = vadd.f32 %v2510, %v3364
    %v3683 = vadd.f32 %v2957, %v3368
    %v3684 = vadd.f32 %v2959, %v3372
    %v3685 = vadd.f32 %v2514, %v3360
    %v3686 = vadd.f32 %v2516, %v3364
    %v3687 = vadd.f32 %v2963, %v3368
    %v3688 = vadd.f32 %v2965, %v3372
    %v3689 = vadd.f32 %v2520, %v3360
    %v3690 = vadd.f32 %v2522, %v3364
    %v3691 = vadd.f32 %v2969, %v3368
    %v3692 = vadd.f32 %v2971, %v3372
    %v3693 = vmax.f32 %v3437, 0.0
    %v3694 = vmax.f32 %v3438, 0.0
    %v3695 = vmax.f32 %v3439, 0.0
    %v3696 = vmax.f32 %v3440, 0.0
    %v3697 = vmax.f32 %v3441, 0.0
    %v3698 = vmax.f32 %v3442, 0.0
    %v3699 = vmax.f32 %v3443, 0.0
    %v3700 = vmax.f32 %v3444, 0.0
    %v3701 = vmax.f32 %v3445, 0.0
    %v3702 = vmax.f32 %v3446, 0.0
    %v3703 = vmax.f32 %v3447, 0.0
    %v3704 = vmax.f32 %v3448, 0.0
    %v3705 = vmax.f32 %v3449, 0.0
    %v3706 = vmax.f32 %v3450, 0.0
    %v3707 = vmax.f32 %v3451, 0.0
    %v3708 = vmax.f32 %v3452, 0.0
    %v3709 = vmax.f32 %v3453, 0.0
    %v3710 = vmax.f32 %v3454, 0.0
    %v3711 = vmax.f32 %v3455, 0.0
    %v3712 = vmax.f32 %v3456, 0.0
    %v3713 = vmax.f32 %v3457, 0.0
    %v3714 = vmax.f32 %v3458, 0.0
    %v3715 = vmax.f32 %v3459, 0.0
    %v3716 = vmax.f32 %v3460, 0.0
    %v3717 = vmax.f32 %v3461, 0.0
    %v3718 = vmax.f32 %v3462, 0.0
    %v3719 = vmax.f32 %v3463, 0.0
    %v3720 = vmax.f32 %v3464, 0.0
    %v3721 = vmax.f32 %v3465, 0.0
    %v3722 = vmax.f32 %v3466, 0.0
    %v3723 = vmax.f32 %v3467, 0.0
    %v3724 = vmax.f32 %v3468, 0.0
    %v3725 = vmax.f32 %v3469, 0.0
    %v3726 = vmax.f32 %v3470, 0.0
    %v3727 = vmax.f32 %v3471, 0.0
    %v3728 = vmax.f32 %v3472, 0.0
    %v3729 = vmax.f32 %v3473, 0.0
    %v3730 = vmax.f32 %v3474, 0.0
    %v3731 = vmax.f32 %v3475, 0.0
    %v3732 = vmax.f32 %v3476, 0.0
    %v3733 = vmax.f32 %v3477, 0.0
    %v3734 = vmax.f32 %v3478, 0.0
    %v3735 = vmax.f32 %v3479, 0.0
    %v3736 = vmax.f32 %v3480, 0.0
    %v3737 = vmax.f32 %v3481, 0.0
    %v3738 = vmax.f32 %v3482, 0.0
    %v3739 = vmax.f32 %v3483, 0.0
    %v3740 = vmax.f32 %v3484, 0.0
    %v3741 = vmax.f32 %v3485, 0.0
    %v3742 = vmax.f32 %v3486, 0.0
    %v3743 = vmax.f32 %v3487, 0.0
    %v3744 = vmax.f32 %v3488, 0.0
    %v3745 = vmax.f32 %v3489, 0.0
    %v3746 = vmax.f32 %v3490, 0.0
    %v3747 = vmax.f32 %v3491, 0.0
    %v3748 = vmax.f32 %v3492, 0.0
    %v3749 = vmax.f32 %v3493, 0.0
    %v3750 = vmax.f32 %v3494, 0.0
    %v3751 = vmax.f32 %v3495, 0.0
    %v3752 = vmax.f32 %v3496, 0.0
    %v3753 = vmax.f32 %v3497, 0.0
    %v3754 = vmax.f32 %v3498, 0.0
    %v3755 = vmax.f32 %v3499, 0.0
    %v3756 = vmax.f32 %v3500, 0.0
    %v3757 = vmax.f32 %v3501, 0.0
    %v3758 = vmax.f32 %v3502, 0.0
    %v3759 = vmax.f32 %v3503, 0.0
    %v3760 = vmax.f32 %v3504, 0.0
    %v3761 = vmax.f32 %v3505, 0.0
    %v3762 = vmax.f32 %v3506, 0.0
    %v3763 = vmax.f32 %v3507, 0.0
    %v3764 = vmax.f32 %v3508, 0.0
    %v3765 = vmax.f32 %v3509, 0.0
    %v3766 = vmax.f32 %v3510, 0.0
    %v3767 = vmax.f32 %v3511, 0.0
    %v3768 = vmax.f32 %v3512, 0.0
    %v3769 = vmax.f32 %v3513, 0.0
    %v3770 = vmax.f32 %v3514, 0.0
    %v3771 = vmax.f32 %v3515, 0.0
    %v3772 = vmax.f32 %v3516, 0.0
    %v3773 = vmax.f32 %v3517, 0.0
    %v3774 = vmax.f32 %v3518, 0.0
    %v3775 = vmax.f32 %v3519, 0.0
    %v3776 = vmax.f32 %v3520, 0.0
    %v3777 = vmax.f32 %v3521, 0.0
    %v3778 = vmax.f32 %v3522, 0.0
    %v3779 = vmax.f32 %v3523, 0.0
    %v3780 = vmax.f32 %v3524, 0.0
    %v3781 = vmax.f32 %v3525, 0.0
    %v3782 = vmax.f32 %v3526, 0.0
    %v3783 = vmax.f32 %v3527, 0.0
    %v3784 = vmax.f32 %v3528, 0.0
    %v3785 = vmax.f32 %v3529, 0.0
    %v3786 = vmax.f32 %v3530, 0.0
    %v3787 = vmax.f32 %v3531, 0.0
    %v3788 = vmax.f32 %v3532, 0.0
    %v3789 = vmax.f32 %v3533, 0.0
    %v3790 = vmax.f32 %v3534, 0.0
    %v3791 = vmax.f32 %v3535, 0.0
    %v3792 = vmax.f32 %v3536, 0.0
    %v3793 = vmax.f32 %v3537, 0.0
    %v3794 = vmax.f32 %v3538, 0.0
    %v3795 = vmax.f32 %v3539, 0.0
    %v3796 = vmax.f32 %v3540, 0.0
    %v3797 = vmax.f32 %v3541, 0.0
    %v3798 = vmax.f32 %v3542, 0.0
    %v3799 = vmax.f32 %v3543, 0.0
    %v3800 = vmax.f32 %v3544, 0.0
    %v3801 = vmax.f32 %v3545, 0.0
    %v3802 = vmax.f32 %v3546, 0.0
    %v3803 = vmax.f32 %v3547, 0.0
    %v3804 = vmax.f32 %v3548, 0.0
    %v3805 = vmax.f32 %v3549, 0.0
    %v3806 = vmax.f32 %v3550, 0.0
    %v3807 = vmax.f32 %v3551, 0.0
    %v3808 = vmax.f32 %v3552, 0.0
    %v3809 = vmax.f32 %v3553, 0.0
    %v3810 = vmax.f32 %v3554, 0.0
    %v3811 = vmax.f32 %v3555, 0.0
    %v3812 = vmax.f32 %v3556, 0.0
    %v3813 = vmax.f32 %v3557, 0.0
    %v3814 = vmax.f32 %v3558, 0.0
    %v3815 = vmax.f32 %v3559, 0.0
    %v3816 = vmax.f32 %v3560, 0.0
    %v3817 = vmax.f32 %v3561, 0.0
    %v3818 = vmax.f32 %v3562, 0.0
    %v3819 = vmax.f32 %v3563, 0.0
    %v3820 = vmax.f32 %v3564, 0.0
    %v3821 = vmax.f32 %v3565, 0.0
    %v3822 = vmax.f32 %v3566, 0.0
    %v3823 = vmax.f32 %v3567, 0.0
    %v3824 = vmax.f32 %v3568, 0.0
    %v3825 = vmax.f32 %v3569, 0.0
    %v3826 = vmax.f32 %v3570, 0.0
    %v3827 = vmax.f32 %v3571, 0.0
    %v3828 = vmax.f32 %v3572, 0.0
    %v3829 = vmax.f32 %v3573, 0.0
    %v3830 = vmax.f32 %v3574, 0.0
    %v3831 = vmax.f32 %v3575, 0.0
    %v3832 = vmax.f32 %v3576, 0.0
    %v3833 = vmax.f32 %v3577, 0.0
    %v3834 = vmax.f32 %v3578, 0.0
    %v3835 = vmax.f32 %v3579, 0.0
    %v3836 = vmax.f32 %v3580, 0.0
    %v3837 = vmax.f32 %v3581, 0.0
    %v3838 = vmax.f32 %v3582, 0.0
    %v3839 = vmax.f32 %v3583, 0.0
    %v3840 = vmax.f32 %v3584, 0.0
    %v3841 = vmax.f32 %v3585, 0.0
    %v3842 = vmax.f32 %v3586, 0.0
    %v3843 = vmax.f32 %v3587, 0.0
    %v3844 = vmax.f32 %v3588, 0.0
    %v3845 = vmax.f32 %v3589, 0.0
    %v3846 = vmax.f32 %v3590, 0.0
    %v3847 = vmax.f32 %v3591, 0.0
    %v3848 = vmax.f32 %v3592, 0.0
    %v3849 = vmax.f32 %v3593, 0.0
    %v3850 = vmax.f32 %v3594, 0.0
    %v3851 = vmax.f32 %v3595, 0.0
    %v3852 = vmax.f32 %v3596, 0.0
    %v3853 = vmax.f32 %v3597, 0.0
    %v3854 = vmax.f32 %v3598, 0.0
    %v3855 = vmax.f32 %v3599, 0.0
    %v3856 = vmax.f32 %v3600, 0.0
    %v3857 = vmax.f32 %v3601, 0.0
    %v3858 = vmax.f32 %v3602, 0.0
    %v3859 = vmax.f32 %v3603, 0.0
    %v3860 = vmax.f32 %v3604, 0.0
    %v3861 = vmax.f32 %v3605, 0.0
    %v3862 = vmax.f32 %v3606, 0.0
    %v3863 = vmax.f32 %v3607, 0.0
    %v3864 = vmax.f32 %v3608, 0.0
    %v3865 = vmax.f32 %v3609, 0.0
    %v3866 = vmax.f32 %v3610, 0.0
    %v3867 = vmax.f32 %v3611, 0.0
    %v3868 = vmax.f32 %v3612, 0.0
    %v3869 = vmax.f32 %v3613, 0.0
    %v3870 = vmax.f32 %v3614, 0.0
    %v3871 = vmax.f32 %v3615, 0.0
    %v3872 = vmax.f32 %v3616, 0.0
    %v3873 = vmax.f32 %v3617, 0.0
    %v3874 = vmax.f32 %v3618, 0.0
    %v3875 = vmax.f32 %v3619, 0.0
    %v3876 = vmax.f32 %v3620, 0.0
    %v3877 = vmax.f32 %v3621, 0.0
    %v3878 = vmax.f32 %v3622, 0.0
    %v3879 = vmax.f32 %v3623, 0.0
    %v3880 = vmax.f32 %v3624, 0.0
    %v3881 = vmax.f32 %v3625, 0.0
    %v3882 = vmax.f32 %v3626, 0.0
    %v3883 = vmax.f32 %v3627, 0.0
    %v3884 = vmax.f32 %v3628, 0.0
    %v3885 = vmax.f32 %v3629, 0.0
    %v3886 = vmax.f32 %v3630, 0.0
    %v3887 = vmax.f32 %v3631, 0.0
    %v3888 = vmax.f32 %v3632, 0.0
    %v3889 = vmax.f32 %v3633, 0.0
    %v3890 = vmax.f32 %v3634, 0.0
    %v3891 = vmax.f32 %v3635, 0.0
    %v3892 = vmax.f32 %v3636, 0.0
    %v3893 = vmax.f32 %v3637, 0.0
    %v3894 = vmax.f32 %v3638, 0.0
    %v3895 = vmax.f32 %v3639, 0.0
    %v3896 = vmax.f32 %v3640, 0.0
    %v3897 = vmax.f32 %v3641, 0.0
    %v3898 = vmax.f32 %v3642, 0.0
    %v3899 = vmax.f32 %v3643, 0.0
    %v3900 = vmax.f32 %v3644, 0.0
    %v3901 = vmax.f32 %v3645, 0.0
    %v3902 = vmax.f32 %v3646, 0.0
    %v3903 = vmax.f32 %v3647, 0.0
    %v3904 = vmax.f32 %v3648, 0.0
    %v3905 = vmax.f32 %v3649, 0.0
    %v3906 = vmax.f32 %v3650, 0.0
    %v3907 = vmax.f32 %v3651, 0.0
    %v3908 = vmax.f32 %v3652, 0.0
    %v3909 = vmax.f32 %v3653, 0.0
    %v3910 = vmax.f32 %v3654, 0.0
    %v3911 = vmax.f32 %v3655, 0.0
    %v3912 = vmax.f32 %v3656, 0.0
    %v3913 = vmax.f32 %v3657, 0.0
    %v3914 = vmax.f32 %v3658, 0.0
    %v3915 = vmax.f32 %v3659, 0.0
    %v3916 = vmax.f32 %v3660, 0.0
    %v3917 = vmax.f32 %v3661, 0.0
    %v3918 = vmax.f32 %v3662, 0.0
    %v3919 = vmax.f32 %v3663, 0.0
    %v3920 = vmax.f32 %v3664, 0.0
    %v3921 = vmax.f32 %v3665, 0.0
    %v3922 = vmax.f32 %v3666, 0.0
    %v3923 = vmax.f32 %v3667, 0.0
    %v3924 = vmax.f32 %v3668, 0.0
    %v3925 = vmax.f32 %v3669, 0.0
    %v3926 = vmax.f32 %v3670, 0.0
    %v3927 = vmax.f32 %v3671, 0.0
    %v3928 = vmax.f32 %v3672, 0.0
    %v3929 = vmax.f32 %v3673, 0.0
    %v3930 = vmax.f32 %v3674, 0.0
    %v3931 = vmax.f32 %v3675, 0.0
    %v3932 = vmax.f32 %v3676, 0.0
    %v3933 = vmax.f32 %v3677, 0.0
    %v3934 = vmax.f32 %v3678, 0.0
    %v3935 = vmax.f32 %v3679, 0.0
    %v3936 = vmax.f32 %v3680, 0.0
    %v3937 = vmax.f32 %v3681, 0.0
    %v3938 = vmax.f32 %v3682, 0.0
    %v3939 = vmax.f32 %v3683, 0.0
    %v3940 = vmax.f32 %v3684, 0.0
    %v3941 = vmax.f32 %v3685, 0.0
    %v3942 = vmax.f32 %v3686, 0.0
    %v3943 = vmax.f32 %v3687, 0.0
    %v3944 = vmax.f32 %v3688, 0.0
    %v3945 = vmax.f32 %v3689, 0.0
    %v3946 = vmax.f32 %v3690, 0.0
    %v3947 = vmax.f32 %v3691, 0.0
    %v3948 = vmax.f32 %v3692, 0.0
    %v3949 = vld [vmem:[#allocation7] sm:$0xff]
    %v3950 = vld [vmem:[#allocation7 + $0x8] sm:$0xff]
    %v3951 = vld [vmem:[#allocation7 + $0x10] sm:$0xff]
    %v3952 = vld [vmem:[#allocation7 + $0x18] sm:$0xff]
    %v3953 = vld [vmem:[#allocation7 + $0x20] sm:$0xff]
    %v3954 = vld [vmem:[#allocation7 + $0x28] sm:$0xff]
    %v3955 = vld [vmem:[#allocation7 + $0x30] sm:$0xff]
    %v3956 = vld [vmem:[#allocation7 + $0x38] sm:$0xff]
    %v3957 = vld [vmem:[#allocation7 + $0x40] sm:$0xff]
    %v3958 = vld [vmem:[#allocation7 + $0x48] sm:$0xff]
    %v3959 = vld [vmem:[#allocation7 + $0x50] sm:$0xff]
    %v3960 = vld [vmem:[#allocation7 + $0x58] sm:$0xff]
    %v3961 = vld [vmem:[#allocation7 + $0x60] sm:$0xff]
    %v3962 = vld [vmem:[#allocation7 + $0x68] sm:$0xff]
    %v3963 = vld [vmem:[#allocation7 + $0x70] sm:$0xff]
    %v3964 = vld [vmem:[#allocation7 + $0x78] sm:$0xff]
    %v3965 = vld [vmem:[#allocation7 + $0x80] sm:$0xff]
    %v3966 = vld [vmem:[#allocation7 + $0x88] sm:$0xff]
    %v3967 = vld [vmem:[#allocation7 + $0x90] sm:$0xff]
    %v3968 = vld [vmem:[#allocation7 + $0x98] sm:$0xff]
    %v3969 = vld [vmem:[#allocation7 + $0xa0] sm:$0xff]
    %v3970 = vld [vmem:[#allocation7 + $0xa8] sm:$0xff]
    %v3971 = vld [vmem:[#allocation7 + $0xb0] sm:$0xff]
    %v3972 = vld [vmem:[#allocation7 + $0xb8] sm:$0xff]
    %v3973 = vld [vmem:[#allocation7 + $0xc0] sm:$0xff]
    %v3974 = vld [vmem:[#allocation7 + $0xc8] sm:$0xff]
    %v3975 = vld [vmem:[#allocation7 + $0xd0] sm:$0xff]
    %v3976 = vld [vmem:[#allocation7 + $0xd8] sm:$0xff]
    %v3977 = vld [vmem:[#allocation7 + $0xe0] sm:$0xff]
    %v3978 = vld [vmem:[#allocation7 + $0xe8] sm:$0xff]
    %v3979 = vld [vmem:[#allocation7 + $0xf0] sm:$0xff]
    %v3980 = vld [vmem:[#allocation7 + $0xf8] sm:$0xff]
    %v3981 = vld [vmem:[#allocation7 + $0x100] sm:$0xff]
    %v3982 = vld [vmem:[#allocation7 + $0x108] sm:$0xff]
    %v3983 = vld [vmem:[#allocation7 + $0x110] sm:$0xff]
    %v3984 = vld [vmem:[#allocation7 + $0x118] sm:$0xff]
    %v3985 = vld [vmem:[#allocation7 + $0x120] sm:$0xff]
    %v3986 = vld [vmem:[#allocation7 + $0x128] sm:$0xff]
    %v3987 = vld [vmem:[#allocation7 + $0x130] sm:$0xff]
    %v3988 = vld [vmem:[#allocation7 + $0x138] sm:$0xff]
    %v3989 = vld [vmem:[#allocation7 + $0x140] sm:$0xff]
    %v3990 = vld [vmem:[#allocation7 + $0x148] sm:$0xff]
    %v3991 = vld [vmem:[#allocation7 + $0x150] sm:$0xff]
    %v3992 = vld [vmem:[#allocation7 + $0x158] sm:$0xff]
    %v3993 = vld [vmem:[#allocation7 + $0x160] sm:$0xff]
    %v3994 = vld [vmem:[#allocation7 + $0x168] sm:$0xff]
    %v3995 = vld [vmem:[#allocation7 + $0x170] sm:$0xff]
    %v3996 = vld [vmem:[#allocation7 + $0x178] sm:$0xff]
    %v3997 = vld [vmem:[#allocation7 + $0x180] sm:$0xff]
    %v3998 = vld [vmem:[#allocation7 + $0x188] sm:$0xff]
    %v3999 = vld [vmem:[#allocation7 + $0x190] sm:$0xff]
    %v4000 = vld [vmem:[#allocation7 + $0x198] sm:$0xff]
    %v4001 = vld [vmem:[#allocation7 + $0x1a0] sm:$0xff]
    %v4002 = vld [vmem:[#allocation7 + $0x1a8] sm:$0xff]
    %v4003 = vld [vmem:[#allocation7 + $0x1b0] sm:$0xff]
    %v4004 = vld [vmem:[#allocation7 + $0x1b8] sm:$0xff]
    %v4005 = vld [vmem:[#allocation7 + $0x1c0] sm:$0xff]
    %v4006 = vld [vmem:[#allocation7 + $0x1c8] sm:$0xff]
    %v4007 = vld [vmem:[#allocation7 + $0x1d0] sm:$0xff]
    %v4008 = vld [vmem:[#allocation7 + $0x1d8] sm:$0xff]
    %v4009 = vld [vmem:[#allocation7 + $0x1e0] sm:$0xff]
    %v4010 = vld [vmem:[#allocation7 + $0x1e8] sm:$0xff]
    %v4011 = vld [vmem:[#allocation7 + $0x1f0] sm:$0xff]
    %v4012 = vld [vmem:[#allocation7 + $0x1f8] sm:$0xff]
    %v4013 = vld [vmem:[#allocation7 + $0x200] sm:$0xff]
    %v4014 = vld [vmem:[#allocation7 + $0x208] sm:$0xff]
    %v4015 = vld [vmem:[#allocation7 + $0x210] sm:$0xff]
    %v4016 = vld [vmem:[#allocation7 + $0x218] sm:$0xff]
    %v4017 = vld [vmem:[#allocation7 + $0x220] sm:$0xff]
    %v4018 = vld [vmem:[#allocation7 + $0x228] sm:$0xff]
    %v4019 = vld [vmem:[#allocation7 + $0x230] sm:$0xff]
    %v4020 = vld [vmem:[#allocation7 + $0x238] sm:$0xff]
    %v4021 = vld [vmem:[#allocation7 + $0x240] sm:$0xff]
    %v4022 = vld [vmem:[#allocation7 + $0x248] sm:$0xff]
    %v4023 = vld [vmem:[#allocation7 + $0x250] sm:$0xff]
    %v4024 = vld [vmem:[#allocation7 + $0x258] sm:$0xff]
    %v4025 = vld [vmem:[#allocation7 + $0x260] sm:$0xff]
    %v4026 = vld [vmem:[#allocation7 + $0x268] sm:$0xff]
    %v4027 = vld [vmem:[#allocation7 + $0x270] sm:$0xff]
    %v4028 = vld [vmem:[#allocation7 + $0x278] sm:$0xff]
    %v4029 = vld [vmem:[#allocation7 + $0x280] sm:$0xff]
    %v4030 = vld [vmem:[#allocation7 + $0x288] sm:$0xff]
    %v4031 = vld [vmem:[#allocation7 + $0x290] sm:$0xff]
    %v4032 = vld [vmem:[#allocation7 + $0x298] sm:$0xff]
    %v4033 = vld [vmem:[#allocation7 + $0x2a0] sm:$0xff]
    %v4034 = vld [vmem:[#allocation7 + $0x2a8] sm:$0xff]
    %v4035 = vld [vmem:[#allocation7 + $0x2b0] sm:$0xff]
    %v4036 = vld [vmem:[#allocation7 + $0x2b8] sm:$0xff]
    %v4037 = vld [vmem:[#allocation7 + $0x2c0] sm:$0xff]
    %v4038 = vld [vmem:[#allocation7 + $0x2c8] sm:$0xff]
    %v4039 = vld [vmem:[#allocation7 + $0x2d0] sm:$0xff]
    %v4040 = vld [vmem:[#allocation7 + $0x2d8] sm:$0xff]
    %v4041 = vld [vmem:[#allocation7 + $0x2e0] sm:$0xff]
    %v4042 = vld [vmem:[#allocation7 + $0x2e8] sm:$0xff]
    %v4043 = vld [vmem:[#allocation7 + $0x2f0] sm:$0xff]
    %v4044 = vld [vmem:[#allocation7 + $0x2f8] sm:$0xff]
    %v4045 = vld [vmem:[#allocation7 + $0x300] sm:$0xff]
    %v4046 = vld [vmem:[#allocation7 + $0x308] sm:$0xff]
    %v4047 = vld [vmem:[#allocation7 + $0x310] sm:$0xff]
    %v4048 = vld [vmem:[#allocation7 + $0x318] sm:$0xff]
    %v4049 = vld [vmem:[#allocation7 + $0x320] sm:$0xff]
    %v4050 = vld [vmem:[#allocation7 + $0x328] sm:$0xff]
    %v4051 = vld [vmem:[#allocation7 + $0x330] sm:$0xff]
    %v4052 = vld [vmem:[#allocation7 + $0x338] sm:$0xff]
    %v4053 = vld [vmem:[#allocation7 + $0x340] sm:$0xff]
    %v4054 = vld [vmem:[#allocation7 + $0x348] sm:$0xff]
    %v4055 = vld [vmem:[#allocation7 + $0x350] sm:$0xff]
    %v4056 = vld [vmem:[#allocation7 + $0x358] sm:$0xff]
    %v4057 = vld [vmem:[#allocation7 + $0x360] sm:$0xff]
    %v4058 = vld [vmem:[#allocation7 + $0x368] sm:$0xff]
    %v4059 = vld [vmem:[#allocation7 + $0x370] sm:$0xff]
    %v4060 = vld [vmem:[#allocation7 + $0x378] sm:$0xff]
    %v4061 = vld [vmem:[#allocation7 + $0x380] sm:$0xff]
    %v4062 = vld [vmem:[#allocation7 + $0x388] sm:$0xff]
    %v4063 = vld [vmem:[#allocation7 + $0x390] sm:$0xff]
    %v4064 = vld [vmem:[#allocation7 + $0x398] sm:$0xff]
    %v4065 = vld [vmem:[#allocation7 + $0x3a0] sm:$0xff]
    %v4066 = vld [vmem:[#allocation7 + $0x3a8] sm:$0xff]
    %v4067 = vld [vmem:[#allocation7 + $0x3b0] sm:$0xff]
    %v4068 = vld [vmem:[#allocation7 + $0x3b8] sm:$0xff]
    %v4069 = vld [vmem:[#allocation7 + $0x3c0] sm:$0xff]
    %v4070 = vld [vmem:[#allocation7 + $0x3c8] sm:$0xff]
    %v4071 = vld [vmem:[#allocation7 + $0x3d0] sm:$0xff]
    %v4072 = vld [vmem:[#allocation7 + $0x3d8] sm:$0xff]
    %v4073 = vld [vmem:[#allocation7 + $0x3e0] sm:$0xff]
    %v4074 = vld [vmem:[#allocation7 + $0x3e8] sm:$0xff]
    %v4075 = vld [vmem:[#allocation7 + $0x3f0] sm:$0xff]
    %v4076 = vld [vmem:[#allocation7 + $0x3f8] sm:$0xff]
    %v4077 = vld [vmem:[%s9] sm:$0x3]
    %v4079 = vlaneseq
    %v4080 = vshrl.u32 %v4079, 7
    %v4081 = vsub.s32 0, %v4080
    %v4082 = vrot.slane %v4077, %v4081
    %v4083 = vlaneseq
    %v4084 = vshrl.u32 %v4083, 7
    %v4085 = vsub.s32 1, %v4084
    %v4086 = vrot.slane %v4077, %v4085
    %4089 = vmatprep.subr.mxu0 %v3980
    %4090 = vmatpush1.msra.mxu0 %v3979
    %4091 = vmatprep.subr.mxu0 %v3978
    %4092 = vmatpush1.msra.mxu0 %v3977
    %4093 = vmatprep.subr.mxu0 %v3976
    %4094 = vmatpush1.msra.mxu0 %v3975
    %4095 = vmatprep.subr.mxu0 %v3974
    %4096 = vmatpush1.msra.mxu0 %v3973
    %4097 = vmatprep.subr.mxu0 %v3972
    %4098 = vmatpush1.msra.mxu0 %v3971
    %4099 = vmatprep.subr.mxu0 %v3970
    %4100 = vmatpush1.msra.mxu0 %v3969
    %4101 = vmatprep.subr.mxu0 %v3968
    %4102 = vmatpush1.msra.mxu0 %v3967
    %4103 = vmatprep.subr.mxu0 %v3966
    %4104 = vmatpush1.msra.mxu0 %v3965
    %4105 = vmatprep.subr.mxu0 %v3964
    %4106 = vmatpush1.msra.mxu0 %v3963
    %4107 = vmatprep.subr.mxu0 %v3962
    %4108 = vmatpush1.msra.mxu0 %v3961
    %4109 = vmatprep.subr.mxu0 %v3960
    %4110 = vmatpush1.msra.mxu0 %v3959
    %4111 = vmatprep.subr.mxu0 %v3958
    %4112 = vmatpush1.msra.mxu0 %v3957
    %4113 = vmatprep.subr.mxu0 %v3956
    %4114 = vmatpush1.msra.mxu0 %v3955
    %4115 = vmatprep.subr.mxu0 %v3954
    %4116 = vmatpush1.msra.mxu0 %v3953
    %4117 = vmatprep.subr.mxu0 %v3952
    %4118 = vmatpush1.msra.mxu0 %v3951
    %4119 = vmatprep.subr.mxu0 %v3950
    %4120 = vmatpush1.msra.mxu0 %v3949
    %4121 = vmatprep.subr.mxu0 %v4012
    %4122 = vmatpush2.msra.mxu0 %v4011
    %4123 = vmatprep.subr.mxu0 %v4010
    %4124 = vmatpush2.msra.mxu0 %v4009
    %4125 = vmatprep.subr.mxu0 %v4008
    %4126 = vmatpush2.msra.mxu0 %v4007
    %4127 = vmatprep.subr.mxu0 %v4006
    %4128 = vmatpush2.msra.mxu0 %v4005
    %4129 = vmatprep.subr.mxu0 %v4004
    %4130 = vmatpush2.msra.mxu0 %v4003
    %4131 = vmatprep.subr.mxu0 %v4002
    %4132 = vmatpush2.msra.mxu0 %v4001
    %4133 = vmatprep.subr.mxu0 %v4000
    %4134 = vmatpush2.msra.mxu0 %v3999
    %4135 = vmatprep.subr.mxu0 %v3998
    %4136 = vmatpush2.msra.mxu0 %v3997
    %4137 = vmatprep.subr.mxu0 %v3996
    %4138 = vmatpush2.msra.mxu0 %v3995
    %4139 = vmatprep.subr.mxu0 %v3994
    %4140 = vmatpush2.msra.mxu0 %v3993
    %4141 = vmatprep.subr.mxu0 %v3992
    %4142 = vmatpush2.msra.mxu0 %v3991
    %4143 = vmatprep.subr.mxu0 %v3990
    %4144 = vmatpush2.msra.mxu0 %v3989
    %4145 = vmatprep.subr.mxu0 %v3988
    %4146 = vmatpush2.msra.mxu0 %v3987
    %4147 = vmatprep.subr.mxu0 %v3986
    %4148 = vmatpush2.msra.mxu0 %v3985
    %4149 = vmatprep.subr.mxu0 %v3984
    %4150 = vmatpush2.msra.mxu0 %v3983
    %4151 = vmatprep.subr.mxu0 %v3982
    %4152 = vmatpush2.msra.mxu0 %v3981
    %4153 = vmatprep.mubr.f32.mxu0 %v3694
    %4154 = vmatmul.mubr.f32.gmra.mxu0 %v3693
    %v4155 = vpop.f32.mrf.mxu0
    %v4156 = vadd.f32 %v4082, %v4155
    %v4157 = vpop.f32.mrf.mxu0
    %v4158 = vadd.f32 %v4086, %v4157
    %4159 = vmatprep.mubr.f32.mxu0 %v3698
    %4160 = vmatmul.mubr.f32.gmra.mxu0 %v3697
    %v4161 = vpop.f32.mrf.mxu0
    %v4162 = vadd.f32 %v4082, %v4161
    %v4163 = vpop.f32.mrf.mxu0
    %v4164 = vadd.f32 %v4086, %v4163
    %4165 = vmatprep.mubr.f32.mxu0 %v3702
    %4166 = vmatmul.mubr.f32.gmra.mxu0 %v3701
    %v4167 = vpop.f32.mrf.mxu0
    %v4168 = vadd.f32 %v4082, %v4167
    %v4169 = vpop.f32.mrf.mxu0
    %v4170 = vadd.f32 %v4086, %v4169
    %4171 = vmatprep.mubr.f32.mxu0 %v3706
    %4172 = vmatmul.mubr.f32.gmra.mxu0 %v3705
    %v4173 = vpop.f32.mrf.mxu0
    %v4174 = vadd.f32 %v4082, %v4173
    %v4175 = vpop.f32.mrf.mxu0
    %v4176 = vadd.f32 %v4086, %v4175
    %4177 = vmatprep.mubr.f32.mxu0 %v3710
    %4178 = vmatmul.mubr.f32.gmra.mxu0 %v3709
    %v4179 = vpop.f32.mrf.mxu0
    %v4180 = vadd.f32 %v4082, %v4179
    %v4181 = vpop.f32.mrf.mxu0
    %v4182 = vadd.f32 %v4086, %v4181
    %4183 = vmatprep.mubr.f32.mxu0 %v3714
    %4184 = vmatmul.mubr.f32.gmra.mxu0 %v3713
    %v4185 = vpop.f32.mrf.mxu0
    %v4186 = vadd.f32 %v4082, %v4185
    %v4187 = vpop.f32.mrf.mxu0
    %v4188 = vadd.f32 %v4086, %v4187
    %4189 = vmatprep.mubr.f32.mxu0 %v3718
    %4190 = vmatmul.mubr.f32.gmra.mxu0 %v3717
    %v4191 = vpop.f32.mrf.mxu0
    %v4192 = vadd.f32 %v4082, %v4191
    %v4193 = vpop.f32.mrf.mxu0
    %v4194 = vadd.f32 %v4086, %v4193
    %4195 = vmatprep.mubr.f32.mxu0 %v3722
    %4196 = vmatmul.mubr.f32.gmra.mxu0 %v3721
    %v4197 = vpop.f32.mrf.mxu0
    %v4198 = vadd.f32 %v4082, %v4197
    %v4199 = vpop.f32.mrf.mxu0
    %v4200 = vadd.f32 %v4086, %v4199
    %4201 = vmatprep.mubr.f32.mxu0 %v3726
    %4202 = vmatmul.mubr.f32.gmra.mxu0 %v3725
    %v4203 = vpop.f32.mrf.mxu0
    %v4204 = vadd.f32 %v4082, %v4203
    %v4205 = vpop.f32.mrf.mxu0
    %v4206 = vadd.f32 %v4086, %v4205
    %4207 = vmatprep.mubr.f32.mxu0 %v3730
    %4208 = vmatmul.mubr.f32.gmra.mxu0 %v3729
    %v4209 = vpop.f32.mrf.mxu0
    %v4210 = vadd.f32 %v4082, %v4209
    %v4211 = vpop.f32.mrf.mxu0
    %v4212 = vadd.f32 %v4086, %v4211
    %4213 = vmatprep.mubr.f32.mxu0 %v3734
    %4214 = vmatmul.mubr.f32.gmra.mxu0 %v3733
    %v4215 = vpop.f32.mrf.mxu0
    %v4216 = vadd.f32 %v4082, %v4215
    %v4217 = vpop.f32.mrf.mxu0
    %v4218 = vadd.f32 %v4086, %v4217
    %4219 = vmatprep.mubr.f32.mxu0 %v3738
    %4220 = vmatmul.mubr.f32.gmra.mxu0 %v3737
    %v4221 = vpop.f32.mrf.mxu0
    %v4222 = vadd.f32 %v4082, %v4221
    %v4223 = vpop.f32.mrf.mxu0
    %v4224 = vadd.f32 %v4086, %v4223
    %4225 = vmatprep.mubr.f32.mxu0 %v3742
    %4226 = vmatmul.mubr.f32.gmra.mxu0 %v3741
    %v4227 = vpop.f32.mrf.mxu0
    %v4228 = vadd.f32 %v4082, %v4227
    %v4229 = vpop.f32.mrf.mxu0
    %v4230 = vadd.f32 %v4086, %v4229
    %4231 = vmatprep.mubr.f32.mxu0 %v3746
    %4232 = vmatmul.mubr.f32.gmra.mxu0 %v3745
    %v4233 = vpop.f32.mrf.mxu0
    %v4234 = vadd.f32 %v4082, %v4233
    %v4235 = vpop.f32.mrf.mxu0
    %v4236 = vadd.f32 %v4086, %v4235
    %4237 = vmatprep.mubr.f32.mxu0 %v3750
    %4238 = vmatmul.mubr.f32.gmra.mxu0 %v3749
    %v4239 = vpop.f32.mrf.mxu0
    %v4240 = vadd.f32 %v4082, %v4239
    %v4241 = vpop.f32.mrf.mxu0
    %v4242 = vadd.f32 %v4086, %v4241
    %4243 = vmatprep.mubr.f32.mxu0 %v3754
    %4244 = vmatmul.mubr.f32.gmra.mxu0 %v3753
    %v4245 = vpop.f32.mrf.mxu0
    %v4246 = vadd.f32 %v4082, %v4245
    %v4247 = vpop.f32.mrf.mxu0
    %v4248 = vadd.f32 %v4086, %v4247
    %4249 = vmatprep.mubr.f32.mxu0 %v3758
    %4250 = vmatmul.mubr.f32.gmra.mxu0 %v3757
    %v4251 = vpop.f32.mrf.mxu0
    %v4252 = vadd.f32 %v4082, %v4251
    %v4253 = vpop.f32.mrf.mxu0
    %v4254 = vadd.f32 %v4086, %v4253
    %4255 = vmatprep.mubr.f32.mxu0 %v3762
    %4256 = vmatmul.mubr.f32.gmra.mxu0 %v3761
    %v4257 = vpop.f32.mrf.mxu0
    %v4258 = vadd.f32 %v4082, %v4257
    %v4259 = vpop.f32.mrf.mxu0
    %v4260 = vadd.f32 %v4086, %v4259
    %4261 = vmatprep.mubr.f32.mxu0 %v3766
    %4262 = vmatmul.mubr.f32.gmra.mxu0 %v3765
    %v4263 = vpop.f32.mrf.mxu0
    %v4264 = vadd.f32 %v4082, %v4263
    %v4265 = vpop.f32.mrf.mxu0
    %v4266 = vadd.f32 %v4086, %v4265
    %4267 = vmatprep.mubr.f32.mxu0 %v3770
    %4268 = vmatmul.mubr.f32.gmra.mxu0 %v3769
    %v4269 = vpop.f32.mrf.mxu0
    %v4270 = vadd.f32 %v4082, %v4269
    %v4271 = vpop.f32.mrf.mxu0
    %v4272 = vadd.f32 %v4086, %v4271
    %4273 = vmatprep.mubr.f32.mxu0 %v3774
    %4274 = vmatmul.mubr.f32.gmra.mxu0 %v3773
    %v4275 = vpop.f32.mrf.mxu0
    %v4276 = vadd.f32 %v4082, %v4275
    %v4277 = vpop.f32.mrf.mxu0
    %v4278 = vadd.f32 %v4086, %v4277
    %4279 = vmatprep.mubr.f32.mxu0 %v3778
    %4280 = vmatmul.mubr.f32.gmra.mxu0 %v3777
    %v4281 = vpop.f32.mrf.mxu0
    %v4282 = vadd.f32 %v4082, %v4281
    %v4283 = vpop.f32.mrf.mxu0
    %v4284 = vadd.f32 %v4086, %v4283
    %4285 = vmatprep.mubr.f32.mxu0 %v3782
    %4286 = vmatmul.mubr.f32.gmra.mxu0 %v3781
    %v4287 = vpop.f32.mrf.mxu0
    %v4288 = vadd.f32 %v4082, %v4287
    %v4289 = vpop.f32.mrf.mxu0
    %v4290 = vadd.f32 %v4086, %v4289
    %4291 = vmatprep.mubr.f32.mxu0 %v3786
    %4292 = vmatmul.mubr.f32.gmra.mxu0 %v3785
    %v4293 = vpop.f32.mrf.mxu0
    %v4294 = vadd.f32 %v4082, %v4293
    %v4295 = vpop.f32.mrf.mxu0
    %v4296 = vadd.f32 %v4086, %v4295
    %4297 = vmatprep.mubr.f32.mxu0 %v3790
    %4298 = vmatmul.mubr.f32.gmra.mxu0 %v3789
    %v4299 = vpop.f32.mrf.mxu0
    %v4300 = vadd.f32 %v4082, %v4299
    %v4301 = vpop.f32.mrf.mxu0
    %v4302 = vadd.f32 %v4086, %v4301
    %4303 = vmatprep.mubr.f32.mxu0 %v3794
    %4304 = vmatmul.mubr.f32.gmra.mxu0 %v3793
    %v4305 = vpop.f32.mrf.mxu0
    %v4306 = vadd.f32 %v4082, %v4305
    %v4307 = vpop.f32.mrf.mxu0
    %v4308 = vadd.f32 %v4086, %v4307
    %4309 = vmatprep.mubr.f32.mxu0 %v3798
    %4310 = vmatmul.mubr.f32.gmra.mxu0 %v3797
    %v4311 = vpop.f32.mrf.mxu0
    %v4312 = vadd.f32 %v4082, %v4311
    %v4313 = vpop.f32.mrf.mxu0
    %v4314 = vadd.f32 %v4086, %v4313
    %4315 = vmatprep.mubr.f32.mxu0 %v3802
    %4316 = vmatmul.mubr.f32.gmra.mxu0 %v3801
    %v4317 = vpop.f32.mrf.mxu0
    %v4318 = vadd.f32 %v4082, %v4317
    %v4319 = vpop.f32.mrf.mxu0
    %v4320 = vadd.f32 %v4086, %v4319
    %4321 = vmatprep.mubr.f32.mxu0 %v3806
    %4322 = vmatmul.mubr.f32.gmra.mxu0 %v3805
    %v4323 = vpop.f32.mrf.mxu0
    %v4324 = vadd.f32 %v4082, %v4323
    %v4325 = vpop.f32.mrf.mxu0
    %v4326 = vadd.f32 %v4086, %v4325
    %4327 = vmatprep.mubr.f32.mxu0 %v3810
    %4328 = vmatmul.mubr.f32.gmra.mxu0 %v3809
    %v4329 = vpop.f32.mrf.mxu0
    %v4330 = vadd.f32 %v4082, %v4329
    %v4331 = vpop.f32.mrf.mxu0
    %v4332 = vadd.f32 %v4086, %v4331
    %4333 = vmatprep.mubr.f32.mxu0 %v3814
    %4334 = vmatmul.mubr.f32.gmra.mxu0 %v3813
    %v4335 = vpop.f32.mrf.mxu0
    %v4336 = vadd.f32 %v4082, %v4335
    %v4337 = vpop.f32.mrf.mxu0
    %v4338 = vadd.f32 %v4086, %v4337
    %4339 = vmatprep.mubr.f32.mxu0 %v3818
    %4340 = vmatmul.mubr.f32.gmra.mxu0 %v3817
    %v4341 = vpop.f32.mrf.mxu0
    %v4342 = vadd.f32 %v4082, %v4341
    %v4343 = vpop.f32.mrf.mxu0
    %v4344 = vadd.f32 %v4086, %v4343
    %4345 = vmatprep.mubr.f32.mxu0 %v3822
    %4346 = vmatmul.mubr.f32.gmra.mxu0 %v3821
    %v4347 = vpop.f32.mrf.mxu0
    %v4348 = vadd.f32 %v4082, %v4347
    %v4349 = vpop.f32.mrf.mxu0
    %v4350 = vadd.f32 %v4086, %v4349
    %4351 = vmatprep.mubr.f32.mxu0 %v3826
    %4352 = vmatmul.mubr.f32.gmra.mxu0 %v3825
    %v4353 = vpop.f32.mrf.mxu0
    %v4354 = vadd.f32 %v4082, %v4353
    %v4355 = vpop.f32.mrf.mxu0
    %v4356 = vadd.f32 %v4086, %v4355
    %4357 = vmatprep.mubr.f32.mxu0 %v3830
    %4358 = vmatmul.mubr.f32.gmra.mxu0 %v3829
    %v4359 = vpop.f32.mrf.mxu0
    %v4360 = vadd.f32 %v4082, %v4359
    %v4361 = vpop.f32.mrf.mxu0
    %v4362 = vadd.f32 %v4086, %v4361
    %4363 = vmatprep.mubr.f32.mxu0 %v3834
    %4364 = vmatmul.mubr.f32.gmra.mxu0 %v3833
    %v4365 = vpop.f32.mrf.mxu0
    %v4366 = vadd.f32 %v4082, %v4365
    %v4367 = vpop.f32.mrf.mxu0
    %v4368 = vadd.f32 %v4086, %v4367
    %4369 = vmatprep.mubr.f32.mxu0 %v3838
    %4370 = vmatmul.mubr.f32.gmra.mxu0 %v3837
    %v4371 = vpop.f32.mrf.mxu0
    %v4372 = vadd.f32 %v4082, %v4371
    %v4373 = vpop.f32.mrf.mxu0
    %v4374 = vadd.f32 %v4086, %v4373
    %4375 = vmatprep.mubr.f32.mxu0 %v3842
    %4376 = vmatmul.mubr.f32.gmra.mxu0 %v3841
    %v4377 = vpop.f32.mrf.mxu0
    %v4378 = vadd.f32 %v4082, %v4377
    %v4379 = vpop.f32.mrf.mxu0
    %v4380 = vadd.f32 %v4086, %v4379
    %4381 = vmatprep.mubr.f32.mxu0 %v3846
    %4382 = vmatmul.mubr.f32.gmra.mxu0 %v3845
    %v4383 = vpop.f32.mrf.mxu0
    %v4384 = vadd.f32 %v4082, %v4383
    %v4385 = vpop.f32.mrf.mxu0
    %v4386 = vadd.f32 %v4086, %v4385
    %4387 = vmatprep.mubr.f32.mxu0 %v3850
    %4388 = vmatmul.mubr.f32.gmra.mxu0 %v3849
    %v4389 = vpop.f32.mrf.mxu0
    %v4390 = vadd.f32 %v4082, %v4389
    %v4391 = vpop.f32.mrf.mxu0
    %v4392 = vadd.f32 %v4086, %v4391
    %4393 = vmatprep.mubr.f32.mxu0 %v3854
    %4394 = vmatmul.mubr.f32.gmra.mxu0 %v3853
    %v4395 = vpop.f32.mrf.mxu0
    %v4396 = vadd.f32 %v4082, %v4395
    %v4397 = vpop.f32.mrf.mxu0
    %v4398 = vadd.f32 %v4086, %v4397
    %4399 = vmatprep.mubr.f32.mxu0 %v3858
    %4400 = vmatmul.mubr.f32.gmra.mxu0 %v3857
    %v4401 = vpop.f32.mrf.mxu0
    %v4402 = vadd.f32 %v4082, %v4401
    %v4403 = vpop.f32.mrf.mxu0
    %v4404 = vadd.f32 %v4086, %v4403
    %4405 = vmatprep.mubr.f32.mxu0 %v3862
    %4406 = vmatmul.mubr.f32.gmra.mxu0 %v3861
    %v4407 = vpop.f32.mrf.mxu0
    %v4408 = vadd.f32 %v4082, %v4407
    %v4409 = vpop.f32.mrf.mxu0
    %v4410 = vadd.f32 %v4086, %v4409
    %4411 = vmatprep.mubr.f32.mxu0 %v3866
    %4412 = vmatmul.mubr.f32.gmra.mxu0 %v3865
    %v4413 = vpop.f32.mrf.mxu0
    %v4414 = vadd.f32 %v4082, %v4413
    %v4415 = vpop.f32.mrf.mxu0
    %v4416 = vadd.f32 %v4086, %v4415
    %4417 = vmatprep.mubr.f32.mxu0 %v3870
    %4418 = vmatmul.mubr.f32.gmra.mxu0 %v3869
    %v4419 = vpop.f32.mrf.mxu0
    %v4420 = vadd.f32 %v4082, %v4419
    %v4421 = vpop.f32.mrf.mxu0
    %v4422 = vadd.f32 %v4086, %v4421
    %4423 = vmatprep.mubr.f32.mxu0 %v3874
    %4424 = vmatmul.mubr.f32.gmra.mxu0 %v3873
    %v4425 = vpop.f32.mrf.mxu0
    %v4426 = vadd.f32 %v4082, %v4425
    %v4427 = vpop.f32.mrf.mxu0
    %v4428 = vadd.f32 %v4086, %v4427
    %4429 = vmatprep.mubr.f32.mxu0 %v3878
    %4430 = vmatmul.mubr.f32.gmra.mxu0 %v3877
    %v4431 = vpop.f32.mrf.mxu0
    %v4432 = vadd.f32 %v4082, %v4431
    %v4433 = vpop.f32.mrf.mxu0
    %v4434 = vadd.f32 %v4086, %v4433
    %4435 = vmatprep.mubr.f32.mxu0 %v3882
    %4436 = vmatmul.mubr.f32.gmra.mxu0 %v3881
    %v4437 = vpop.f32.mrf.mxu0
    %v4438 = vadd.f32 %v4082, %v4437
    %v4439 = vpop.f32.mrf.mxu0
    %v4440 = vadd.f32 %v4086, %v4439
    %4441 = vmatprep.mubr.f32.mxu0 %v3886
    %4442 = vmatmul.mubr.f32.gmra.mxu0 %v3885
    %v4443 = vpop.f32.mrf.mxu0
    %v4444 = vadd.f32 %v4082, %v4443
    %v4445 = vpop.f32.mrf.mxu0
    %v4446 = vadd.f32 %v4086, %v4445
    %4447 = vmatprep.mubr.f32.mxu0 %v3890
    %4448 = vmatmul.mubr.f32.gmra.mxu0 %v3889
    %v4449 = vpop.f32.mrf.mxu0
    %v4450 = vadd.f32 %v4082, %v4449
    %v4451 = vpop.f32.mrf.mxu0
    %v4452 = vadd.f32 %v4086, %v4451
    %4453 = vmatprep.mubr.f32.mxu0 %v3894
    %4454 = vmatmul.mubr.f32.gmra.mxu0 %v3893
    %v4455 = vpop.f32.mrf.mxu0
    %v4456 = vadd.f32 %v4082, %v4455
    %v4457 = vpop.f32.mrf.mxu0
    %v4458 = vadd.f32 %v4086, %v4457
    %4459 = vmatprep.mubr.f32.mxu0 %v3898
    %4460 = vmatmul.mubr.f32.gmra.mxu0 %v3897
    %v4461 = vpop.f32.mrf.mxu0
    %v4462 = vadd.f32 %v4082, %v4461
    %v4463 = vpop.f32.mrf.mxu0
    %v4464 = vadd.f32 %v4086, %v4463
    %4465 = vmatprep.mubr.f32.mxu0 %v3902
    %4466 = vmatmul.mubr.f32.gmra.mxu0 %v3901
    %v4467 = vpop.f32.mrf.mxu0
    %v4468 = vadd.f32 %v4082, %v4467
    %v4469 = vpop.f32.mrf.mxu0
    %v4470 = vadd.f32 %v4086, %v4469
    %4471 = vmatprep.mubr.f32.mxu0 %v3906
    %4472 = vmatmul.mubr.f32.gmra.mxu0 %v3905
    %v4473 = vpop.f32.mrf.mxu0
    %v4474 = vadd.f32 %v4082, %v4473
    %v4475 = vpop.f32.mrf.mxu0
    %v4476 = vadd.f32 %v4086, %v4475
    %4477 = vmatprep.mubr.f32.mxu0 %v3910
    %4478 = vmatmul.mubr.f32.gmra.mxu0 %v3909
    %v4479 = vpop.f32.mrf.mxu0
    %v4480 = vadd.f32 %v4082, %v4479
    %v4481 = vpop.f32.mrf.mxu0
    %v4482 = vadd.f32 %v4086, %v4481
    %4483 = vmatprep.mubr.f32.mxu0 %v3914
    %4484 = vmatmul.mubr.f32.gmra.mxu0 %v3913
    %v4485 = vpop.f32.mrf.mxu0
    %v4486 = vadd.f32 %v4082, %v4485
    %v4487 = vpop.f32.mrf.mxu0
    %v4488 = vadd.f32 %v4086, %v4487
    %4489 = vmatprep.mubr.f32.mxu0 %v3918
    %4490 = vmatmul.mubr.f32.gmra.mxu0 %v3917
    %v4491 = vpop.f32.mrf.mxu0
    %v4492 = vadd.f32 %v4082, %v4491
    %v4493 = vpop.f32.mrf.mxu0
    %v4494 = vadd.f32 %v4086, %v4493
    %4495 = vmatprep.mubr.f32.mxu0 %v3922
    %4496 = vmatmul.mubr.f32.gmra.mxu0 %v3921
    %v4497 = vpop.f32.mrf.mxu0
    %v4498 = vadd.f32 %v4082, %v4497
    %v4499 = vpop.f32.mrf.mxu0
    %v4500 = vadd.f32 %v4086, %v4499
    %4501 = vmatprep.mubr.f32.mxu0 %v3926
    %4502 = vmatmul.mubr.f32.gmra.mxu0 %v3925
    %v4503 = vpop.f32.mrf.mxu0
    %v4504 = vadd.f32 %v4082, %v4503
    %v4505 = vpop.f32.mrf.mxu0
    %v4506 = vadd.f32 %v4086, %v4505
    %4507 = vmatprep.mubr.f32.mxu0 %v3930
    %4508 = vmatmul.mubr.f32.gmra.mxu0 %v3929
    %v4509 = vpop.f32.mrf.mxu0
    %v4510 = vadd.f32 %v4082, %v4509
    %v4511 = vpop.f32.mrf.mxu0
    %v4512 = vadd.f32 %v4086, %v4511
    %4513 = vmatprep.mubr.f32.mxu0 %v3934
    %4514 = vmatmul.mubr.f32.gmra.mxu0 %v3933
    %v4515 = vpop.f32.mrf.mxu0
    %v4516 = vadd.f32 %v4082, %v4515
    %v4517 = vpop.f32.mrf.mxu0
    %v4518 = vadd.f32 %v4086, %v4517
    %4519 = vmatprep.mubr.f32.mxu0 %v3938
    %4520 = vmatmul.mubr.f32.gmra.mxu0 %v3937
    %v4521 = vpop.f32.mrf.mxu0
    %v4522 = vadd.f32 %v4082, %v4521
    %v4523 = vpop.f32.mrf.mxu0
    %v4524 = vadd.f32 %v4086, %v4523
    %4525 = vmatprep.mubr.f32.mxu0 %v3942
    %4526 = vmatmul.mubr.f32.gmra.mxu0 %v3941
    %v4527 = vpop.f32.mrf.mxu0
    %v4528 = vadd.f32 %v4082, %v4527
    %v4529 = vpop.f32.mrf.mxu0
    %v4530 = vadd.f32 %v4086, %v4529
    %4531 = vmatprep.mubr.f32.mxu0 %v3946
    %4532 = vmatmul.mubr.f32.gmra.mxu0 %v3945
    %v4533 = vpop.f32.mrf.mxu0
    %v4534 = vadd.f32 %v4082, %v4533
    %v4535 = vpop.f32.mrf.mxu0
    %v4536 = vadd.f32 %v4086, %v4535
    %4537 = vdwg.mxu0
    %4538 = vmatprep.subr.mxu0 %v4044
    %4539 = vmatpush1.msra.mxu0 %v4043
    %4540 = vmatprep.subr.mxu0 %v4042
    %4541 = vmatpush1.msra.mxu0 %v4041
    %4542 = vmatprep.subr.mxu0 %v4040
    %4543 = vmatpush1.msra.mxu0 %v4039
    %4544 = vmatprep.subr.mxu0 %v4038
    %4545 = vmatpush1.msra.mxu0 %v4037
    %4546 = vmatprep.subr.mxu0 %v4036
    %4547 = vmatpush1.msra.mxu0 %v4035
    %4548 = vmatprep.subr.mxu0 %v4034
    %4549 = vmatpush1.msra.mxu0 %v4033
    %4550 = vmatprep.subr.mxu0 %v4032
    %4551 = vmatpush1.msra.mxu0 %v4031
    %4552 = vmatprep.subr.mxu0 %v4030
    %4553 = vmatpush1.msra.mxu0 %v4029
    %4554 = vmatprep.subr.mxu0 %v4028
    %4555 = vmatpush1.msra.mxu0 %v4027
    %4556 = vmatprep.subr.mxu0 %v4026
    %4557 = vmatpush1.msra.mxu0 %v4025
    %4558 = vmatprep.subr.mxu0 %v4024
    %4559 = vmatpush1.msra.mxu0 %v4023
    %4560 = vmatprep.subr.mxu0 %v4022
    %4561 = vmatpush1.msra.mxu0 %v4021
    %4562 = vmatprep.subr.mxu0 %v4020
    %4563 = vmatpush1.msra.mxu0 %v4019
    %4564 = vmatprep.subr.mxu0 %v4018
    %4565 = vmatpush1.msra.mxu0 %v4017
    %4566 = vmatprep.subr.mxu0 %v4016
    %4567 = vmatpush1.msra.mxu0 %v4015
    %4568 = vmatprep.subr.mxu0 %v4014
    %4569 = vmatpush1.msra.mxu0 %v4013
    %4570 = vmatprep.subr.mxu0 %v4076
    %4571 = vmatpush2.msra.mxu0 %v4075
    %4572 = vmatprep.subr.mxu0 %v4074
    %4573 = vmatpush2.msra.mxu0 %v4073
    %4574 = vmatprep.subr.mxu0 %v4072
    %4575 = vmatpush2.msra.mxu0 %v4071
    %4576 = vmatprep.subr.mxu0 %v4070
    %4577 = vmatpush2.msra.mxu0 %v4069
    %4578 = vmatprep.subr.mxu0 %v4068
    %4579 = vmatpush2.msra.mxu0 %v4067
    %4580 = vmatprep.subr.mxu0 %v4066
    %4581 = vmatpush2.msra.mxu0 %v4065
    %4582 = vmatprep.subr.mxu0 %v4064
    %4583 = vmatpush2.msra.mxu0 %v4063
    %4584 = vmatprep.subr.mxu0 %v4062
    %4585 = vmatpush2.msra.mxu0 %v4061
    %4586 = vmatprep.subr.mxu0 %v4060
    %4587 = vmatpush2.msra.mxu0 %v4059
    %4588 = vmatprep.subr.mxu0 %v4058
    %4589 = vmatpush2.msra.mxu0 %v4057
    %4590 = vmatprep.subr.mxu0 %v4056
    %4591 = vmatpush2.msra.mxu0 %v4055
    %4592 = vmatprep.subr.mxu0 %v4054
    %4593 = vmatpush2.msra.mxu0 %v4053
    %4594 = vmatprep.subr.mxu0 %v4052
    %4595 = vmatpush2.msra.mxu0 %v4051
    %4596 = vmatprep.subr.mxu0 %v4050
    %4597 = vmatpush2.msra.mxu0 %v4049
    %4598 = vmatprep.subr.mxu0 %v4048
    %4599 = vmatpush2.msra.mxu0 %v4047
    %4600 = vmatprep.subr.mxu0 %v4046
    %4601 = vmatpush2.msra.mxu0 %v4045
    %4602 = vmatprep.mubr.f32.mxu0 %v3696
    %4603 = vmatmul.mubr.f32.gmra.mxu0 %v3695
    %v4604 = vpop.f32.mrf.mxu0
    %v4605 = vadd.f32 %v4156, %v4604
    %v4606 = vpop.f32.mrf.mxu0
    %v4607 = vadd.f32 %v4158, %v4606
    %4608 = vmatprep.mubr.f32.mxu0 %v3700
    %4609 = vmatmul.mubr.f32.gmra.mxu0 %v3699
    %v4610 = vpop.f32.mrf.mxu0
    %v4611 = vadd.f32 %v4162, %v4610
    %v4612 = vpop.f32.mrf.mxu0
    %v4613 = vadd.f32 %v4164, %v4612
    %4614 = vmatprep.mubr.f32.mxu0 %v3704
    %4615 = vmatmul.mubr.f32.gmra.mxu0 %v3703
    %v4616 = vpop.f32.mrf.mxu0
    %v4617 = vadd.f32 %v4168, %v4616
    %v4618 = vpop.f32.mrf.mxu0
    %v4619 = vadd.f32 %v4170, %v4618
    %4620 = vmatprep.mubr.f32.mxu0 %v3708
    %4621 = vmatmul.mubr.f32.gmra.mxu0 %v3707
    %v4622 = vpop.f32.mrf.mxu0
    %v4623 = vadd.f32 %v4174, %v4622
    %v4624 = vpop.f32.mrf.mxu0
    %v4625 = vadd.f32 %v4176, %v4624
    %4626 = vmatprep.mubr.f32.mxu0 %v3712
    %4627 = vmatmul.mubr.f32.gmra.mxu0 %v3711
    %v4628 = vpop.f32.mrf.mxu0
    %v4629 = vadd.f32 %v4180, %v4628
    %v4630 = vpop.f32.mrf.mxu0
    %v4631 = vadd.f32 %v4182, %v4630
    %4632 = vmatprep.mubr.f32.mxu0 %v3716
    %4633 = vmatmul.mubr.f32.gmra.mxu0 %v3715
    %v4634 = vpop.f32.mrf.mxu0
    %v4635 = vadd.f32 %v4186, %v4634
    %v4636 = vpop.f32.mrf.mxu0
    %v4637 = vadd.f32 %v4188, %v4636
    %4638 = vmatprep.mubr.f32.mxu0 %v3720
    %4639 = vmatmul.mubr.f32.gmra.mxu0 %v3719
    %v4640 = vpop.f32.mrf.mxu0
    %v4641 = vadd.f32 %v4192, %v4640
    %v4642 = vpop.f32.mrf.mxu0
    %v4643 = vadd.f32 %v4194, %v4642
    %4644 = vmatprep.mubr.f32.mxu0 %v3724
    %4645 = vmatmul.mubr.f32.gmra.mxu0 %v3723
    %v4646 = vpop.f32.mrf.mxu0
    %v4647 = vadd.f32 %v4198, %v4646
    %v4648 = vpop.f32.mrf.mxu0
    %v4649 = vadd.f32 %v4200, %v4648
    %4650 = vmatprep.mubr.f32.mxu0 %v3728
    %4651 = vmatmul.mubr.f32.gmra.mxu0 %v3727
    %v4652 = vpop.f32.mrf.mxu0
    %v4653 = vadd.f32 %v4204, %v4652
    %v4654 = vpop.f32.mrf.mxu0
    %v4655 = vadd.f32 %v4206, %v4654
    %4656 = vmatprep.mubr.f32.mxu0 %v3732
    %4657 = vmatmul.mubr.f32.gmra.mxu0 %v3731
    %v4658 = vpop.f32.mrf.mxu0
    %v4659 = vadd.f32 %v4210, %v4658
    %v4660 = vpop.f32.mrf.mxu0
    %v4661 = vadd.f32 %v4212, %v4660
    %4662 = vmatprep.mubr.f32.mxu0 %v3736
    %4663 = vmatmul.mubr.f32.gmra.mxu0 %v3735
    %v4664 = vpop.f32.mrf.mxu0
    %v4665 = vadd.f32 %v4216, %v4664
    %v4666 = vpop.f32.mrf.mxu0
    %v4667 = vadd.f32 %v4218, %v4666
    %4668 = vmatprep.mubr.f32.mxu0 %v3740
    %4669 = vmatmul.mubr.f32.gmra.mxu0 %v3739
    %v4670 = vpop.f32.mrf.mxu0
    %v4671 = vadd.f32 %v4222, %v4670
    %v4672 = vpop.f32.mrf.mxu0
    %v4673 = vadd.f32 %v4224, %v4672
    %4674 = vmatprep.mubr.f32.mxu0 %v3744
    %4675 = vmatmul.mubr.f32.gmra.mxu0 %v3743
    %v4676 = vpop.f32.mrf.mxu0
    %v4677 = vadd.f32 %v4228, %v4676
    %v4678 = vpop.f32.mrf.mxu0
    %v4679 = vadd.f32 %v4230, %v4678
    %4680 = vmatprep.mubr.f32.mxu0 %v3748
    %4681 = vmatmul.mubr.f32.gmra.mxu0 %v3747
    %v4682 = vpop.f32.mrf.mxu0
    %v4683 = vadd.f32 %v4234, %v4682
    %v4684 = vpop.f32.mrf.mxu0
    %v4685 = vadd.f32 %v4236, %v4684
    %4686 = vmatprep.mubr.f32.mxu0 %v3752
    %4687 = vmatmul.mubr.f32.gmra.mxu0 %v3751
    %v4688 = vpop.f32.mrf.mxu0
    %v4689 = vadd.f32 %v4240, %v4688
    %v4690 = vpop.f32.mrf.mxu0
    %v4691 = vadd.f32 %v4242, %v4690
    %4692 = vmatprep.mubr.f32.mxu0 %v3756
    %4693 = vmatmul.mubr.f32.gmra.mxu0 %v3755
    %v4694 = vpop.f32.mrf.mxu0
    %v4695 = vadd.f32 %v4246, %v4694
    %v4696 = vpop.f32.mrf.mxu0
    %v4697 = vadd.f32 %v4248, %v4696
    %4698 = vmatprep.mubr.f32.mxu0 %v3760
    %4699 = vmatmul.mubr.f32.gmra.mxu0 %v3759
    %v4700 = vpop.f32.mrf.mxu0
    %v4701 = vadd.f32 %v4252, %v4700
    %v4702 = vpop.f32.mrf.mxu0
    %v4703 = vadd.f32 %v4254, %v4702
    %4704 = vmatprep.mubr.f32.mxu0 %v3764
    %4705 = vmatmul.mubr.f32.gmra.mxu0 %v3763
    %v4706 = vpop.f32.mrf.mxu0
    %v4707 = vadd.f32 %v4258, %v4706
    %v4708 = vpop.f32.mrf.mxu0
    %v4709 = vadd.f32 %v4260, %v4708
    %4710 = vmatprep.mubr.f32.mxu0 %v3768
    %4711 = vmatmul.mubr.f32.gmra.mxu0 %v3767
    %v4712 = vpop.f32.mrf.mxu0
    %v4713 = vadd.f32 %v4264, %v4712
    %v4714 = vpop.f32.mrf.mxu0
    %v4715 = vadd.f32 %v4266, %v4714
    %4716 = vmatprep.mubr.f32.mxu0 %v3772
    %4717 = vmatmul.mubr.f32.gmra.mxu0 %v3771
    %v4718 = vpop.f32.mrf.mxu0
    %v4719 = vadd.f32 %v4270, %v4718
    %v4720 = vpop.f32.mrf.mxu0
    %v4721 = vadd.f32 %v4272, %v4720
    %4722 = vmatprep.mubr.f32.mxu0 %v3776
    %4723 = vmatmul.mubr.f32.gmra.mxu0 %v3775
    %v4724 = vpop.f32.mrf.mxu0
    %v4725 = vadd.f32 %v4276, %v4724
    %v4726 = vpop.f32.mrf.mxu0
    %v4727 = vadd.f32 %v4278, %v4726
    %4728 = vmatprep.mubr.f32.mxu0 %v3780
    %4729 = vmatmul.mubr.f32.gmra.mxu0 %v3779
    %v4730 = vpop.f32.mrf.mxu0
    %v4731 = vadd.f32 %v4282, %v4730
    %v4732 = vpop.f32.mrf.mxu0
    %v4733 = vadd.f32 %v4284, %v4732
    %4734 = vmatprep.mubr.f32.mxu0 %v3784
    %4735 = vmatmul.mubr.f32.gmra.mxu0 %v3783
    %v4736 = vpop.f32.mrf.mxu0
    %v4737 = vadd.f32 %v4288, %v4736
    %v4738 = vpop.f32.mrf.mxu0
    %v4739 = vadd.f32 %v4290, %v4738
    %4740 = vmatprep.mubr.f32.mxu0 %v3788
    %4741 = vmatmul.mubr.f32.gmra.mxu0 %v3787
    %v4742 = vpop.f32.mrf.mxu0
    %v4743 = vadd.f32 %v4294, %v4742
    %v4744 = vpop.f32.mrf.mxu0
    %v4745 = vadd.f32 %v4296, %v4744
    %4746 = vmatprep.mubr.f32.mxu0 %v3792
    %4747 = vmatmul.mubr.f32.gmra.mxu0 %v3791
    %v4748 = vpop.f32.mrf.mxu0
    %v4749 = vadd.f32 %v4300, %v4748
    %v4750 = vpop.f32.mrf.mxu0
    %v4751 = vadd.f32 %v4302, %v4750
    %4752 = vmatprep.mubr.f32.mxu0 %v3796
    %4753 = vmatmul.mubr.f32.gmra.mxu0 %v3795
    %v4754 = vpop.f32.mrf.mxu0
    %v4755 = vadd.f32 %v4306, %v4754
    %v4756 = vpop.f32.mrf.mxu0
    %v4757 = vadd.f32 %v4308, %v4756
    %4758 = vmatprep.mubr.f32.mxu0 %v3800
    %4759 = vmatmul.mubr.f32.gmra.mxu0 %v3799
    %v4760 = vpop.f32.mrf.mxu0
    %v4761 = vadd.f32 %v4312, %v4760
    %v4762 = vpop.f32.mrf.mxu0
    %v4763 = vadd.f32 %v4314, %v4762
    %4764 = vmatprep.mubr.f32.mxu0 %v3804
    %4765 = vmatmul.mubr.f32.gmra.mxu0 %v3803
    %v4766 = vpop.f32.mrf.mxu0
    %v4767 = vadd.f32 %v4318, %v4766
    %v4768 = vpop.f32.mrf.mxu0
    %v4769 = vadd.f32 %v4320, %v4768
    %4770 = vmatprep.mubr.f32.mxu0 %v3808
    %4771 = vmatmul.mubr.f32.gmra.mxu0 %v3807
    %v4772 = vpop.f32.mrf.mxu0
    %v4773 = vadd.f32 %v4324, %v4772
    %v4774 = vpop.f32.mrf.mxu0
    %v4775 = vadd.f32 %v4326, %v4774
    %4776 = vmatprep.mubr.f32.mxu0 %v3812
    %4777 = vmatmul.mubr.f32.gmra.mxu0 %v3811
    %v4778 = vpop.f32.mrf.mxu0
    %v4779 = vadd.f32 %v4330, %v4778
    %v4780 = vpop.f32.mrf.mxu0
    %v4781 = vadd.f32 %v4332, %v4780
    %4782 = vmatprep.mubr.f32.mxu0 %v3816
    %4783 = vmatmul.mubr.f32.gmra.mxu0 %v3815
    %v4784 = vpop.f32.mrf.mxu0
    %v4785 = vadd.f32 %v4336, %v4784
    %v4786 = vpop.f32.mrf.mxu0
    %v4787 = vadd.f32 %v4338, %v4786
    %4788 = vmatprep.mubr.f32.mxu0 %v3820
    %4789 = vmatmul.mubr.f32.gmra.mxu0 %v3819
    %v4790 = vpop.f32.mrf.mxu0
    %v4791 = vadd.f32 %v4342, %v4790
    %v4792 = vpop.f32.mrf.mxu0
    %v4793 = vadd.f32 %v4344, %v4792
    %4794 = vmatprep.mubr.f32.mxu0 %v3824
    %4795 = vmatmul.mubr.f32.gmra.mxu0 %v3823
    %v4796 = vpop.f32.mrf.mxu0
    %v4797 = vadd.f32 %v4348, %v4796
    %v4798 = vpop.f32.mrf.mxu0
    %v4799 = vadd.f32 %v4350, %v4798
    %4800 = vmatprep.mubr.f32.mxu0 %v3828
    %4801 = vmatmul.mubr.f32.gmra.mxu0 %v3827
    %v4802 = vpop.f32.mrf.mxu0
    %v4803 = vadd.f32 %v4354, %v4802
    %v4804 = vpop.f32.mrf.mxu0
    %v4805 = vadd.f32 %v4356, %v4804
    %4806 = vmatprep.mubr.f32.mxu0 %v3832
    %4807 = vmatmul.mubr.f32.gmra.mxu0 %v3831
    %v4808 = vpop.f32.mrf.mxu0
    %v4809 = vadd.f32 %v4360, %v4808
    %v4810 = vpop.f32.mrf.mxu0
    %v4811 = vadd.f32 %v4362, %v4810
    %4812 = vmatprep.mubr.f32.mxu0 %v3836
    %4813 = vmatmul.mubr.f32.gmra.mxu0 %v3835
    %v4814 = vpop.f32.mrf.mxu0
    %v4815 = vadd.f32 %v4366, %v4814
    %v4816 = vpop.f32.mrf.mxu0
    %v4817 = vadd.f32 %v4368, %v4816
    %4818 = vmatprep.mubr.f32.mxu0 %v3840
    %4819 = vmatmul.mubr.f32.gmra.mxu0 %v3839
    %v4820 = vpop.f32.mrf.mxu0
    %v4821 = vadd.f32 %v4372, %v4820
    %v4822 = vpop.f32.mrf.mxu0
    %v4823 = vadd.f32 %v4374, %v4822
    %4824 = vmatprep.mubr.f32.mxu0 %v3844
    %4825 = vmatmul.mubr.f32.gmra.mxu0 %v3843
    %v4826 = vpop.f32.mrf.mxu0
    %v4827 = vadd.f32 %v4378, %v4826
    %v4828 = vpop.f32.mrf.mxu0
    %v4829 = vadd.f32 %v4380, %v4828
    %4830 = vmatprep.mubr.f32.mxu0 %v3848
    %4831 = vmatmul.mubr.f32.gmra.mxu0 %v3847
    %v4832 = vpop.f32.mrf.mxu0
    %v4833 = vadd.f32 %v4384, %v4832
    %v4834 = vpop.f32.mrf.mxu0
    %v4835 = vadd.f32 %v4386, %v4834
    %4836 = vmatprep.mubr.f32.mxu0 %v3852
    %4837 = vmatmul.mubr.f32.gmra.mxu0 %v3851
    %v4838 = vpop.f32.mrf.mxu0
    %v4839 = vadd.f32 %v4390, %v4838
    %v4840 = vpop.f32.mrf.mxu0
    %v4841 = vadd.f32 %v4392, %v4840
    %4842 = vmatprep.mubr.f32.mxu0 %v3856
    %4843 = vmatmul.mubr.f32.gmra.mxu0 %v3855
    %v4844 = vpop.f32.mrf.mxu0
    %v4845 = vadd.f32 %v4396, %v4844
    %v4846 = vpop.f32.mrf.mxu0
    %v4847 = vadd.f32 %v4398, %v4846
    %4848 = vmatprep.mubr.f32.mxu0 %v3860
    %4849 = vmatmul.mubr.f32.gmra.mxu0 %v3859
    %v4850 = vpop.f32.mrf.mxu0
    %v4851 = vadd.f32 %v4402, %v4850
    %v4852 = vpop.f32.mrf.mxu0
    %v4853 = vadd.f32 %v4404, %v4852
    %4854 = vmatprep.mubr.f32.mxu0 %v3864
    %4855 = vmatmul.mubr.f32.gmra.mxu0 %v3863
    %v4856 = vpop.f32.mrf.mxu0
    %v4857 = vadd.f32 %v4408, %v4856
    %v4858 = vpop.f32.mrf.mxu0
    %v4859 = vadd.f32 %v4410, %v4858
    %4860 = vmatprep.mubr.f32.mxu0 %v3868
    %4861 = vmatmul.mubr.f32.gmra.mxu0 %v3867
    %v4862 = vpop.f32.mrf.mxu0
    %v4863 = vadd.f32 %v4414, %v4862
    %v4864 = vpop.f32.mrf.mxu0
    %v4865 = vadd.f32 %v4416, %v4864
    %4866 = vmatprep.mubr.f32.mxu0 %v3872
    %4867 = vmatmul.mubr.f32.gmra.mxu0 %v3871
    %v4868 = vpop.f32.mrf.mxu0
    %v4869 = vadd.f32 %v4420, %v4868
    %v4870 = vpop.f32.mrf.mxu0
    %v4871 = vadd.f32 %v4422, %v4870
    %4872 = vmatprep.mubr.f32.mxu0 %v3876
    %4873 = vmatmul.mubr.f32.gmra.mxu0 %v3875
    %v4874 = vpop.f32.mrf.mxu0
    %v4875 = vadd.f32 %v4426, %v4874
    %v4876 = vpop.f32.mrf.mxu0
    %v4877 = vadd.f32 %v4428, %v4876
    %4878 = vmatprep.mubr.f32.mxu0 %v3880
    %4879 = vmatmul.mubr.f32.gmra.mxu0 %v3879
    %v4880 = vpop.f32.mrf.mxu0
    %v4881 = vadd.f32 %v4432, %v4880
    %v4882 = vpop.f32.mrf.mxu0
    %v4883 = vadd.f32 %v4434, %v4882
    %4884 = vmatprep.mubr.f32.mxu0 %v3884
    %4885 = vmatmul.mubr.f32.gmra.mxu0 %v3883
    %v4886 = vpop.f32.mrf.mxu0
    %v4887 = vadd.f32 %v4438, %v4886
    %v4888 = vpop.f32.mrf.mxu0
    %v4889 = vadd.f32 %v4440, %v4888
    %4890 = vmatprep.mubr.f32.mxu0 %v3888
    %4891 = vmatmul.mubr.f32.gmra.mxu0 %v3887
    %v4892 = vpop.f32.mrf.mxu0
    %v4893 = vadd.f32 %v4444, %v4892
    %v4894 = vpop.f32.mrf.mxu0
    %v4895 = vadd.f32 %v4446, %v4894
    %4896 = vmatprep.mubr.f32.mxu0 %v3892
    %4897 = vmatmul.mubr.f32.gmra.mxu0 %v3891
    %v4898 = vpop.f32.mrf.mxu0
    %v4899 = vadd.f32 %v4450, %v4898
    %v4900 = vpop.f32.mrf.mxu0
    %v4901 = vadd.f32 %v4452, %v4900
    %4902 = vmatprep.mubr.f32.mxu0 %v3896
    %4903 = vmatmul.mubr.f32.gmra.mxu0 %v3895
    %v4904 = vpop.f32.mrf.mxu0
    %v4905 = vadd.f32 %v4456, %v4904
    %v4906 = vpop.f32.mrf.mxu0
    %v4907 = vadd.f32 %v4458, %v4906
    %4908 = vmatprep.mubr.f32.mxu0 %v3900
    %4909 = vmatmul.mubr.f32.gmra.mxu0 %v3899
    %v4910 = vpop.f32.mrf.mxu0
    %v4911 = vadd.f32 %v4462, %v4910
    %v4912 = vpop.f32.mrf.mxu0
    %v4913 = vadd.f32 %v4464, %v4912
    %4914 = vmatprep.mubr.f32.mxu0 %v3904
    %4915 = vmatmul.mubr.f32.gmra.mxu0 %v3903
    %v4916 = vpop.f32.mrf.mxu0
    %v4917 = vadd.f32 %v4468, %v4916
    %v4918 = vpop.f32.mrf.mxu0
    %v4919 = vadd.f32 %v4470, %v4918
    %4920 = vmatprep.mubr.f32.mxu0 %v3908
    %4921 = vmatmul.mubr.f32.gmra.mxu0 %v3907
    %v4922 = vpop.f32.mrf.mxu0
    %v4923 = vadd.f32 %v4474, %v4922
    %v4924 = vpop.f32.mrf.mxu0
    %v4925 = vadd.f32 %v4476, %v4924
    %4926 = vmatprep.mubr.f32.mxu0 %v3912
    %4927 = vmatmul.mubr.f32.gmra.mxu0 %v3911
    %v4928 = vpop.f32.mrf.mxu0
    %v4929 = vadd.f32 %v4480, %v4928
    %v4930 = vpop.f32.mrf.mxu0
    %v4931 = vadd.f32 %v4482, %v4930
    %4932 = vmatprep.mubr.f32.mxu0 %v3916
    %4933 = vmatmul.mubr.f32.gmra.mxu0 %v3915
    %v4934 = vpop.f32.mrf.mxu0
    %v4935 = vadd.f32 %v4486, %v4934
    %v4936 = vpop.f32.mrf.mxu0
    %v4937 = vadd.f32 %v4488, %v4936
    %4938 = vmatprep.mubr.f32.mxu0 %v3920
    %4939 = vmatmul.mubr.f32.gmra.mxu0 %v3919
    %v4940 = vpop.f32.mrf.mxu0
    %v4941 = vadd.f32 %v4492, %v4940
    %v4942 = vpop.f32.mrf.mxu0
    %v4943 = vadd.f32 %v4494, %v4942
    %4944 = vmatprep.mubr.f32.mxu0 %v3924
    %4945 = vmatmul.mubr.f32.gmra.mxu0 %v3923
    %v4946 = vpop.f32.mrf.mxu0
    %v4947 = vadd.f32 %v4498, %v4946
    %v4948 = vpop.f32.mrf.mxu0
    %v4949 = vadd.f32 %v4500, %v4948
    %4950 = vmatprep.mubr.f32.mxu0 %v3928
    %4951 = vmatmul.mubr.f32.gmra.mxu0 %v3927
    %v4952 = vpop.f32.mrf.mxu0
    %v4953 = vadd.f32 %v4504, %v4952
    %v4954 = vpop.f32.mrf.mxu0
    %v4955 = vadd.f32 %v4506, %v4954
    %4956 = vmatprep.mubr.f32.mxu0 %v3932
    %4957 = vmatmul.mubr.f32.gmra.mxu0 %v3931
    %v4958 = vpop.f32.mrf.mxu0
    %v4959 = vadd.f32 %v4510, %v4958
    %v4960 = vpop.f32.mrf.mxu0
    %v4961 = vadd.f32 %v4512, %v4960
    %4962 = vmatprep.mubr.f32.mxu0 %v3936
    %4963 = vmatmul.mubr.f32.gmra.mxu0 %v3935
    %v4964 = vpop.f32.mrf.mxu0
    %v4965 = vadd.f32 %v4516, %v4964
    %v4966 = vpop.f32.mrf.mxu0
    %v4967 = vadd.f32 %v4518, %v4966
    %4968 = vmatprep.mubr.f32.mxu0 %v3940
    %4969 = vmatmul.mubr.f32.gmra.mxu0 %v3939
    %v4970 = vpop.f32.mrf.mxu0
    %v4971 = vadd.f32 %v4522, %v4970
    %v4972 = vpop.f32.mrf.mxu0
    %v4973 = vadd.f32 %v4524, %v4972
    %4974 = vmatprep.mubr.f32.mxu0 %v3944
    %4975 = vmatmul.mubr.f32.gmra.mxu0 %v3943
    %v4976 = vpop.f32.mrf.mxu0
    %v4977 = vadd.f32 %v4528, %v4976
    %v4978 = vpop.f32.mrf.mxu0
    %v4979 = vadd.f32 %v4530, %v4978
    %4980 = vmatprep.mubr.f32.mxu0 %v3948
    %4981 = vmatmul.mubr.f32.gmra.mxu0 %v3947
    %v4982 = vpop.f32.mrf.mxu0
    %v4983 = vadd.f32 %v4534, %v4982
    %v4984 = vpop.f32.mrf.mxu0
    %v4985 = vadd.f32 %v4536, %v4984
    %4986 = vdwg.mxu0
    %v4987 = vmax.f32 %v4605, %v4611
    %v4988 = vmax.f32 %v4987, %v4617
    %v4989 = vmax.f32 %v4988, %v4623
    %v4990 = vrot.slane %v4989, 4
    %v4991 = vmax.f32 %v4989, %v4990
    %v4992 = vrot.slane %v4991, 2
    %v4993 = vmax.f32 %v4991, %v4992
    %v4994 = vrot.slane %v4993, 1
    %v4995 = vmax.f32 %v4993, %v4994
    %v4996 = vmax.f32 %v4607, %v4613
    %v4997 = vmax.f32 %v4996, %v4619
    %v4998 = vmax.f32 %v4997, %v4625
    %v4999 = vrot.slane %v4998, 4
    %v5000 = vmax.f32 %v4998, %v4999
    %v5001 = vrot.slane %v5000, 2
    %v5002 = vmax.f32 %v5000, %v5001
    %v5003 = vrot.slane %v5002, 1
    %v5004 = vmax.f32 %v5002, %v5003
    %v5005 = vmax.f32 %v4629, %v4635
    %v5006 = vmax.f32 %v5005, %v4641
    %v5007 = vmax.f32 %v5006, %v4647
    %v5008 = vrot.slane %v5007, 4
    %v5009 = vmax.f32 %v5007, %v5008
    %v5010 = vrot.slane %v5009, 2
    %v5011 = vmax.f32 %v5009, %v5010
    %v5012 = vrot.slane %v5011, 1
    %v5013 = vmax.f32 %v5011, %v5012
    %v5014 = vmax.f32 %v4631, %v4637
    %v5015 = vmax.f32 %v5014, %v4643
    %v5016 = vmax.f32 %v5015, %v4649
    %v5017 = vrot.slane %v5016, 4
    %v5018 = vmax.f32 %v5016, %v5017
    %v5019 = vrot.slane %v5018, 2
    %v5020 = vmax.f32 %v5018, %v5019
    %v5021 = vrot.slane %v5020, 1
    %v5022 = vmax.f32 %v5020, %v5021
    %v5023 = vmax.f32 %v4653, %v4659
    %v5024 = vmax.f32 %v5023, %v4665
    %v5025 = vmax.f32 %v5024, %v4671
    %v5026 = vrot.slane %v5025, 4
    %v5027 = vmax.f32 %v5025, %v5026
    %v5028 = vrot.slane %v5027, 2
    %v5029 = vmax.f32 %v5027, %v5028
    %v5030 = vrot.slane %v5029, 1
    %v5031 = vmax.f32 %v5029, %v5030
    %v5032 = vmax.f32 %v4655, %v4661
    %v5033 = vmax.f32 %v5032, %v4667
    %v5034 = vmax.f32 %v5033, %v4673
    %v5035 = vrot.slane %v5034, 4
    %v5036 = vmax.f32 %v5034, %v5035
    %v5037 = vrot.slane %v5036, 2
    %v5038 = vmax.f32 %v5036, %v5037
    %v5039 = vrot.slane %v5038, 1
    %v5040 = vmax.f32 %v5038, %v5039
    %v5041 = vmax.f32 %v4677, %v4683
    %v5042 = vmax.f32 %v5041, %v4689
    %v5043 = vmax.f32 %v5042, %v4695
    %v5044 = vrot.slane %v5043, 4
    %v5045 = vmax.f32 %v5043, %v5044
    %v5046 = vrot.slane %v5045, 2
    %v5047 = vmax.f32 %v5045, %v5046
    %v5048 = vrot.slane %v5047, 1
    %v5049 = vmax.f32 %v5047, %v5048
    %v5050 = vmax.f32 %v4679, %v4685
    %v5051 = vmax.f32 %v5050, %v4691
    %v5052 = vmax.f32 %v5051, %v4697
    %v5053 = vrot.slane %v5052, 4
    %v5054 = vmax.f32 %v5052, %v5053
    %v5055 = vrot.slane %v5054, 2
    %v5056 = vmax.f32 %v5054, %v5055
    %v5057 = vrot.slane %v5056, 1
    %v5058 = vmax.f32 %v5056, %v5057
    %v5059 = vmax.f32 %v4701, %v4707
    %v5060 = vmax.f32 %v5059, %v4713
    %v5061 = vmax.f32 %v5060, %v4719
    %v5062 = vrot.slane %v5061, 4
    %v5063 = vmax.f32 %v5061, %v5062
    %v5064 = vrot.slane %v5063, 2
    %v5065 = vmax.f32 %v5063, %v5064
    %v5066 = vrot.slane %v5065, 1
    %v5067 = vmax.f32 %v5065, %v5066
    %v5068 = vmax.f32 %v4703, %v4709
    %v5069 = vmax.f32 %v5068, %v4715
    %v5070 = vmax.f32 %v5069, %v4721
    %v5071 = vrot.slane %v5070, 4
    %v5072 = vmax.f32 %v5070, %v5071
    %v5073 = vrot.slane %v5072, 2
    %v5074 = vmax.f32 %v5072, %v5073
    %v5075 = vrot.slane %v5074, 1
    %v5076 = vmax.f32 %v5074, %v5075
    %v5077 = vmax.f32 %v4725, %v4731
    %v5078 = vmax.f32 %v5077, %v4737
    %v5079 = vmax.f32 %v5078, %v4743
    %v5080 = vrot.slane %v5079, 4
    %v5081 = vmax.f32 %v5079, %v5080
    %v5082 = vrot.slane %v5081, 2
    %v5083 = vmax.f32 %v5081, %v5082
    %v5084 = vrot.slane %v5083, 1
    %v5085 = vmax.f32 %v5083, %v5084
    %v5086 = vmax.f32 %v4727, %v4733
    %v5087 = vmax.f32 %v5086, %v4739
    %v5088 = vmax.f32 %v5087, %v4745
    %v5089 = vrot.slane %v5088, 4
    %v5090 = vmax.f32 %v5088, %v5089
    %v5091 = vrot.slane %v5090, 2
    %v5092 = vmax.f32 %v5090, %v5091
    %v5093 = vrot.slane %v5092, 1
    %v5094 = vmax.f32 %v5092, %v5093
    %v5095 = vmax.f32 %v4749, %v4755
    %v5096 = vmax.f32 %v5095, %v4761
    %v5097 = vmax.f32 %v5096, %v4767
    %v5098 = vrot.slane %v5097, 4
    %v5099 = vmax.f32 %v5097, %v5098
    %v5100 = vrot.slane %v5099, 2
    %v5101 = vmax.f32 %v5099, %v5100
    %v5102 = vrot.slane %v5101, 1
    %v5103 = vmax.f32 %v5101, %v5102
    %v5104 = vmax.f32 %v4751, %v4757
    %v5105 = vmax.f32 %v5104, %v4763
    %v5106 = vmax.f32 %v5105, %v4769
    %v5107 = vrot.slane %v5106, 4
    %v5108 = vmax.f32 %v5106, %v5107
    %v5109 = vrot.slane %v5108, 2
    %v5110 = vmax.f32 %v5108, %v5109
    %v5111 = vrot.slane %v5110, 1
    %v5112 = vmax.f32 %v5110, %v5111
    %v5113 = vmax.f32 %v4773, %v4779
    %v5114 = vmax.f32 %v5113, %v4785
    %v5115 = vmax.f32 %v5114, %v4791
    %v5116 = vrot.slane %v5115, 4
    %v5117 = vmax.f32 %v5115, %v5116
    %v5118 = vrot.slane %v5117, 2
    %v5119 = vmax.f32 %v5117, %v5118
    %v5120 = vrot.slane %v5119, 1
    %v5121 = vmax.f32 %v5119, %v5120
    %v5122 = vmax.f32 %v4775, %v4781
    %v5123 = vmax.f32 %v5122, %v4787
    %v5124 = vmax.f32 %v5123, %v4793
    %v5125 = vrot.slane %v5124, 4
    %v5126 = vmax.f32 %v5124, %v5125
    %v5127 = vrot.slane %v5126, 2
    %v5128 = vmax.f32 %v5126, %v5127
    %v5129 = vrot.slane %v5128, 1
    %v5130 = vmax.f32 %v5128, %v5129
    %v5131 = vmax.f32 %v4797, %v4803
    %v5132 = vmax.f32 %v5131, %v4809
    %v5133 = vmax.f32 %v5132, %v4815
    %v5134 = vrot.slane %v5133, 4
    %v5135 = vmax.f32 %v5133, %v5134
    %v5136 = vrot.slane %v5135, 2
    %v5137 = vmax.f32 %v5135, %v5136
    %v5138 = vrot.slane %v5137, 1
    %v5139 = vmax.f32 %v5137, %v5138
    %v5140 = vmax.f32 %v4799, %v4805
    %v5141 = vmax.f32 %v5140, %v4811
    %v5142 = vmax.f32 %v5141, %v4817
    %v5143 = vrot.slane %v5142, 4
    %v5144 = vmax.f32 %v5142, %v5143
    %v5145 = vrot.slane %v5144, 2
    %v5146 = vmax.f32 %v5144, %v5145
    %v5147 = vrot.slane %v5146, 1
    %v5148 = vmax.f32 %v5146, %v5147
    %v5149 = vmax.f32 %v4821, %v4827
    %v5150 = vmax.f32 %v5149, %v4833
    %v5151 = vmax.f32 %v5150, %v4839
    %v5152 = vrot.slane %v5151, 4
    %v5153 = vmax.f32 %v5151, %v5152
    %v5154 = vrot.slane %v5153, 2
    %v5155 = vmax.f32 %v5153, %v5154
    %v5156 = vrot.slane %v5155, 1
    %v5157 = vmax.f32 %v5155, %v5156
    %v5158 = vmax.f32 %v4823, %v4829
    %v5159 = vmax.f32 %v5158, %v4835
    %v5160 = vmax.f32 %v5159, %v4841
    %v5161 = vrot.slane %v5160, 4
    %v5162 = vmax.f32 %v5160, %v5161
    %v5163 = vrot.slane %v5162, 2
    %v5164 = vmax.f32 %v5162, %v5163
    %v5165 = vrot.slane %v5164, 1
    %v5166 = vmax.f32 %v5164, %v5165
    %v5167 = vmax.f32 %v4845, %v4851
    %v5168 = vmax.f32 %v5167, %v4857
    %v5169 = vmax.f32 %v5168, %v4863
    %v5170 = vrot.slane %v5169, 4
    %v5171 = vmax.f32 %v5169, %v5170
    %v5172 = vrot.slane %v5171, 2
    %v5173 = vmax.f32 %v5171, %v5172
    %v5174 = vrot.slane %v5173, 1
    %v5175 = vmax.f32 %v5173, %v5174
    %v5176 = vmax.f32 %v4847, %v4853
    %v5177 = vmax.f32 %v5176, %v4859
    %v5178 = vmax.f32 %v5177, %v4865
    %v5179 = vrot.slane %v5178, 4
    %v5180 = vmax.f32 %v5178, %v5179
    %v5181 = vrot.slane %v5180, 2
    %v5182 = vmax.f32 %v5180, %v5181
    %v5183 = vrot.slane %v5182, 1
    %v5184 = vmax.f32 %v5182, %v5183
    %v5185 = vmax.f32 %v4869, %v4875
    %v5186 = vmax.f32 %v5185, %v4881
    %v5187 = vmax.f32 %v5186, %v4887
    %v5188 = vrot.slane %v5187, 4
    %v5189 = vmax.f32 %v5187, %v5188
    %v5190 = vrot.slane %v5189, 2
    %v5191 = vmax.f32 %v5189, %v5190
    %v5192 = vrot.slane %v5191, 1
    %v5193 = vmax.f32 %v5191, %v5192
    %v5194 = vmax.f32 %v4871, %v4877
    %v5195 = vmax.f32 %v5194, %v4883
    %v5196 = vmax.f32 %v5195, %v4889
    %v5197 = vrot.slane %v5196, 4
    %v5198 = vmax.f32 %v5196, %v5197
    %v5199 = vrot.slane %v5198, 2
    %v5200 = vmax.f32 %v5198, %v5199
    %v5201 = vrot.slane %v5200, 1
    %v5202 = vmax.f32 %v5200, %v5201
    %v5203 = vmax.f32 %v4893, %v4899
    %v5204 = vmax.f32 %v5203, %v4905
    %v5205 = vmax.f32 %v5204, %v4911
    %v5206 = vrot.slane %v5205, 4
    %v5207 = vmax.f32 %v5205, %v5206
    %v5208 = vrot.slane %v5207, 2
    %v5209 = vmax.f32 %v5207, %v5208
    %v5210 = vrot.slane %v5209, 1
    %v5211 = vmax.f32 %v5209, %v5210
    %v5212 = vmax.f32 %v4895, %v4901
    %v5213 = vmax.f32 %v5212, %v4907
    %v5214 = vmax.f32 %v5213, %v4913
    %v5215 = vrot.slane %v5214, 4
    %v5216 = vmax.f32 %v5214, %v5215
    %v5217 = vrot.slane %v5216, 2
    %v5218 = vmax.f32 %v5216, %v5217
    %v5219 = vrot.slane %v5218, 1
    %v5220 = vmax.f32 %v5218, %v5219
    %v5221 = vmax.f32 %v4917, %v4923
    %v5222 = vmax.f32 %v5221, %v4929
    %v5223 = vmax.f32 %v5222, %v4935
    %v5224 = vrot.slane %v5223, 4
    %v5225 = vmax.f32 %v5223, %v5224
    %v5226 = vrot.slane %v5225, 2
    %v5227 = vmax.f32 %v5225, %v5226
    %v5228 = vrot.slane %v5227, 1
    %v5229 = vmax.f32 %v5227, %v5228
    %v5230 = vmax.f32 %v4919, %v4925
    %v5231 = vmax.f32 %v5230, %v4931
    %v5232 = vmax.f32 %v5231, %v4937
    %v5233 = vrot.slane %v5232, 4
    %v5234 = vmax.f32 %v5232, %v5233
    %v5235 = vrot.slane %v5234, 2
    %v5236 = vmax.f32 %v5234, %v5235
    %v5237 = vrot.slane %v5236, 1
    %v5238 = vmax.f32 %v5236, %v5237
    %v5239 = vmax.f32 %v4941, %v4947
    %v5240 = vmax.f32 %v5239, %v4953
    %v5241 = vmax.f32 %v5240, %v4959
    %v5242 = vrot.slane %v5241, 4
    %v5243 = vmax.f32 %v5241, %v5242
    %v5244 = vrot.slane %v5243, 2
    %v5245 = vmax.f32 %v5243, %v5244
    %v5246 = vrot.slane %v5245, 1
    %v5247 = vmax.f32 %v5245, %v5246
    %v5248 = vmax.f32 %v4943, %v4949
    %v5249 = vmax.f32 %v5248, %v4955
    %v5250 = vmax.f32 %v5249, %v4961
    %v5251 = vrot.slane %v5250, 4
    %v5252 = vmax.f32 %v5250, %v5251
    %v5253 = vrot.slane %v5252, 2
    %v5254 = vmax.f32 %v5252, %v5253
    %v5255 = vrot.slane %v5254, 1
    %v5256 = vmax.f32 %v5254, %v5255
    %v5257 = vmax.f32 %v4965, %v4971
    %v5258 = vmax.f32 %v5257, %v4977
    %v5259 = vmax.f32 %v5258, %v4983
    %v5260 = vrot.slane %v5259, 4
    %v5261 = vmax.f32 %v5259, %v5260
    %v5262 = vrot.slane %v5261, 2
    %v5263 = vmax.f32 %v5261, %v5262
    %v5264 = vrot.slane %v5263, 1
    %v5265 = vmax.f32 %v5263, %v5264
    %v5266 = vmax.f32 %v4967, %v4973
    %v5267 = vmax.f32 %v5266, %v4979
    %v5268 = vmax.f32 %v5267, %v4985
    %v5269 = vrot.slane %v5268, 4
    %v5270 = vmax.f32 %v5268, %v5269
    %v5271 = vrot.slane %v5270, 2
    %v5272 = vmax.f32 %v5270, %v5271
    %v5273 = vrot.slane %v5272, 1
    %v5274 = vmax.f32 %v5272, %v5273
    %v5307 = vsel %vm1754, %v5013, %v4995
    %v5308 = vsel %vm1756, %v5031, %v5307
    %v5309 = vsel %vm1758, %v5049, %v5308
    %v5310 = vsel %vm1760, %v5067, %v5309
    %v5311 = vsel %vm1762, %v5085, %v5310
    %v5312 = vsel %vm1764, %v5103, %v5311
    %v5313 = vsel %vm1766, %v5121, %v5312
    %v5314 = vsel %vm1754, %v5022, %v5004
    %v5315 = vsel %vm1756, %v5040, %v5314
    %v5316 = vsel %vm1758, %v5058, %v5315
    %v5317 = vsel %vm1760, %v5076, %v5316
    %v5318 = vsel %vm1762, %v5094, %v5317
    %v5319 = vsel %vm1764, %v5112, %v5318
    %v5320 = vsel %vm1766, %v5130, %v5319
    %v5321 = vsel %vm1754, %v5157, %v5139
    %v5322 = vsel %vm1756, %v5175, %v5321
    %v5323 = vsel %vm1758, %v5193, %v5322
    %v5324 = vsel %vm1760, %v5211, %v5323
    %v5325 = vsel %vm1762, %v5229, %v5324
    %v5326 = vsel %vm1764, %v5247, %v5325
    %v5327 = vsel %vm1766, %v5265, %v5326
    %v5328 = vsel %vm1754, %v5166, %v5148
    %v5329 = vsel %vm1756, %v5184, %v5328
    %v5330 = vsel %vm1758, %v5202, %v5329
    %v5331 = vsel %vm1760, %v5220, %v5330
    %v5332 = vsel %vm1762, %v5238, %v5331
    %v5333 = vsel %vm1764, %v5256, %v5332
    %v5334 = vsel %vm1766, %v5274, %v5333
    %5339 = vst [vmem:[#allocation8] sm:$0xff] %v5313
    %5340 = vst [vmem:[#allocation8 + $0x8] sm:$0xff] %v5320
    %5341 = vst [vmem:[#allocation8 + $0x10] sm:$0xff] %v5327
    %5342 = vst [vmem:[#allocation8 + $0x18] sm:$0xff] %v5334
    // Predicated region
    $region54: #{tpu_custom_call.1} parent=1 // pred_check
      _
    $region55: #{tpu_custom_call.1} parent=1 // pred_check_branch
      %5344 = sbr.rel (0) target = $region57
    $region56: #{tpu_custom_call.1} parent=1 // pred_region
      %s5346 = ssub.s32 512, 512
      %5347 = vsyncadd [#allocation4], %s5346
      %s5348 = sshll.u32 [#allocation8], 4
      %s5349 = int_to_ptr.vmem [resolvable:$true] %s5348
      %5354 = dma.vmem_to_hbm [thread:$0]  %s5349, 512, %s10, [#allocation4], 256, 256, 16
    $region57: #{tpu_custom_call.1} parent=1 // pred_fallthru
      _
    // Predicated region
    $region58: #{tpu_custom_call.1} parent=1 // pred_check
      _
    $region59: #{tpu_custom_call.1} parent=1 // pred_check_branch
      %5356 = sbr.rel (0) target = $region61
    $region60: #{tpu_custom_call.1} parent=1 // pred_region
      %5357 = dma.done [#allocation4], 512
    $region61: #{tpu_custom_call.1} parent=1 // pred_fallthru
      _
    %5358 = vsyncpa [#allocation3], 1
    %5359 = vsyncpa [#allocation6], 1
    %5360 = vsyncpa [#allocation4], 1

</llo_original>
